<compile_context>
chip_gen: v7x
topology: tpu7x:2x2x1
jax: 0.10.0
libtpu: 0.0.40
codegen_flags: <defaults>
</compile_context>

<pallas_src>
import functools

import jax
import jax.numpy as jnp
from jax.experimental import pallas as pl
from jax.experimental.pallas import tpu as pltpu

BN_EPS = 1e-5
LANE = 128
GENE_TILE = 512  # target K/N tile along the gene axis


def _round_up(x, m):
    return (x + m - 1) // m * m


def _pad2d(a, rows, cols):
    return jnp.pad(a, ((0, rows - a.shape[0]), (0, cols - a.shape[1])))


def _pad1d_row(a, cols):
    return jnp.pad(a, (0, cols - a.shape[0])).reshape(1, -1)


def _gene_tiling(n_genes):
    """Pad the gene axis to a multiple of the desired tile so tg never collapses."""
    g128 = _round_up(n_genes, LANE)
    if g128 >= GENE_TILE:
        return _round_up(n_genes, GENE_TILE), GENE_TILE
    return g128, g128


def _const_block_spec(shape):
    """BlockSpec for blocks whose index map is constant: single-buffer them."""
    idx = lambda i, t: (0, 0)
    try:
        return pl.BlockSpec(shape, idx, pipeline_mode=pl.Buffered(1))
    except Exception:  # older JAX without pipeline_mode / Buffered
        return pl.BlockSpec(shape, idx)


# ----------------------------------------------------------------------------- kernel
def _vega_kernel(x_ref, eps_ref,
                 w1_ref, b1_ref, w2_ref, b2_ref,
                 wh_ref, bh_ref, wd_ref, bd_ref,
                 xrec_ref, mu_ref, lv_ref,
                 h_acc, z_scr, *, n_gene_tiles, p_pad):
    t = pl.program_id(1)
    G = n_gene_tiles
    P = p_pad

    # ---- encoder layer 1: stream x / W1 K-tiles, accumulate f32 in VMEM scratch ----
    @pl.when(t == 0)
    def _():
        h_acc[...] = jnp.zeros_like(h_acc)

    # NOTE: this accumulation block must stay BEFORE the t == G-1 finish block below;
    # the finish reads h_acc including the contribution of the final K-tile (same step).
    @pl.when(t < G)
    def _():
        h_acc[...] += jnp.dot(x_ref[...], w1_ref[...],
                              preferred_element_type=jnp.float32)

    # ---- finish encoder (BN folded, dropout=identity), fused mu/logvar head, reparam ----
    @pl.when(t == G - 1)
    def _():
        h1 = jnp.maximum(h_acc[...] + b1_ref[...], 0.0)
        h2 = jnp.dot(h1.astype(jnp.bfloat16), w2_ref[...],
                     preferred_element_type=jnp.float32) + b2_ref[...]
        h2 = jnp.maximum(h2, 0.0)
        ml = jnp.dot(h2.astype(jnp.bfloat16), wh_ref[...],
                     preferred_element_type=jnp.float32) + bh_ref[...]
        mu = ml[:, :P]
        lv = ml[:, P:]
        z = mu + eps_ref[...] * jnp.exp(0.5 * lv)
        mu_ref[...] = mu
        lv_ref[...] = lv
        z_scr[...] = z.astype(jnp.bfloat16)   # cast once; decoder steps reuse bf16 z

    # ---- masked decoder: stream pre-masked Wdec N-tiles, write reconstruction tiles ----
    # Output blocks (mu, lv, X_rec tile 0) are written before their block index changes,
    # which requires the grid order (batch outer, t inner) used in vega_forward.
    @pl.when(t >= G)
    def _():
        xrec_ref[...] = (jnp.dot(z_scr[...], wd_ref[...],
                                 preferred_element_type=jnp.float32) + bd_ref[...])


# ------------------------------------------------------------------- parameter folding
def prepare_params(raw, n_genes, n_pathways, hidden=800):
    """Fold eval-mode BN into Linears, pre-mask decoder, fuse heads, pad lanes, cast bf16."""
    g_pad, tg = _gene_tiling(n_genes)
    h_pad = _round_up(hidden, LANE)
    p_pad = _round_up(n_pathways, LANE)

    s1 = raw["g1"] * jax.lax.rsqrt(raw["rv1"] + BN_EPS)
    w1 = raw["w1"] * s1[None, :]
    b1 = (raw["b1"] - raw["rm1"]) * s1 + raw["be1"]

    s2 = raw["g2"] * jax.lax.rsqrt(raw["rv2"] + BN_EPS)
    w2 = raw["w2"] * s2[None, :]
    b2 = (raw["b2"] - raw["rm2"]) * s2 + raw["be2"]

    # fused mean|logvar head; each half padded separately so the kernel split stays aligned
    wm = _pad2d(raw["wm"], h_pad, p_pad)
    wl = _pad2d(raw["wl"], h_pad, p_pad)
    wh = jnp.concatenate([wm, wl], axis=1)
    bh = jnp.concatenate([_pad1d_row(raw["bm"], p_pad),
                          _pad1d_row(raw["bl"], p_pad)], axis=1)

    wd = raw["wdec"] * raw["mask"].T  # CustomizedLinear: mask folded once here

    return {
        "w1": _pad2d(w1, g_pad, h_pad).astype(jnp.bfloat16),
        "b1": _pad1d_row(b1, h_pad).astype(jnp.float32),
        "w2": _pad2d(w2, h_pad, h_pad).astype(jnp.bfloat16),
        "b2": _pad1d_row(b2, h_pad).astype(jnp.float32),
        "wh": wh.astype(jnp.bfloat16),
        "bh": bh.astype(jnp.float32),
        "wd": _pad2d(wd, p_pad, g_pad).astype(jnp.bfloat16),
        "bd": _pad1d_row(raw["bdec"], g_pad).astype(jnp.float32),
        "n_genes": n_genes, "n_pathways": n_pathways,
        "g_pad": g_pad, "tg": tg, "h_pad": h_pad, "p_pad": p_pad,
    }


# ----------------------------------------------------------------------------- wrapper
def vega_forward(x, eps, prep):
    """x: (B, n_genes) f32, eps: (B, n_pathways) f32 -> (X_rec, mu, logvar)."""
    B, n_genes = x.shape
    n_pathways = eps.shape[1]
    g_pad, tg = prep["g_pad"], prep["tg"]
    h_pad, p_pad = prep["h_pad"], prep["p_pad"]
    G = g_pad // tg

    # batch tiling (rows): raise the tile toward roofline balance while keeping
    # >= 2 batch tiles whenever b_pad > 128 (v7x megacore on the "parallel" axis).
    b8 = _round_up(max(B, 1), 8)
    if b8 <= 128:
        tm = b8
    elif b8 >= 512:
        tm = 256
    else:
        tm = 128
    b_pad = _round_up(b8, tm)

    x_p = _pad2d(x.astype(jnp.float32), b_pad, g_pad).astype(jnp.bfloat16)
    eps_p = _pad2d(eps.astype(jnp.float32), b_pad, p_pad)

    kernel = functools.partial(_vega_kernel, n_gene_tiles=G, p_pad=p_pad)

    in_specs = [
        pl.BlockSpec((tm, tg), lambda i, t: (i, jnp.minimum(t, G - 1))),     # x (bf16 K-tiles)
        pl.BlockSpec((tm, p_pad), lambda i, t: (i, 0)),                      # eps
        pl.BlockSpec((tg, h_pad), lambda i, t: (jnp.minimum(t, G - 1), 0)),  # W1 (K-tiles)
        _const_block_spec((1, h_pad)),                                       # b1 (BN folded)
        _const_block_spec((h_pad, h_pad)),                                   # W2
        _const_block_spec((1, h_pad)),                                       # b2
        _const_block_spec((h_pad, 2 * p_pad)),                               # fused head W
        _const_block_spec((1, 2 * p_pad)),                                   # fused head b
        pl.BlockSpec((p_pad, tg), lambda i, t: (0, jnp.maximum(t - G, 0))),  # masked Wdec (N-tiles)
        pl.BlockSpec((1, tg), lambda i, t: (0, jnp.maximum(t - G, 0))),      # bdec (N-tiles)
    ]
    out_specs = (
        pl.BlockSpec((tm, tg), lambda i, t: (i, jnp.maximum(t - G, 0))),     # X_rec
        pl.BlockSpec((tm, p_pad), lambda i, t: (i, 0)),                      # mu
        pl.BlockSpec((tm, p_pad), lambda i, t: (i, 0)),                      # logvar
    )
    out_shape = (
        jax.ShapeDtypeStruct((b_pad, g_pad), jnp.float32),
        jax.ShapeDtypeStruct((b_pad, p_pad), jnp.float32),
        jax.ShapeDtypeStruct((b_pad, p_pad), jnp.float32),
    )

    # ~3/4 of physical VMEM: ~48 MiB on v7x (64 MiB/TC), ~96 MiB on v5e/v6e (128 MiB).
    try:
        vmem_cap = int(pltpu.get_tpu_info().vmem_capacity_bytes)
    except Exception:
        vmem_cap = 64 << 20  # assume the smallest (v7x per-TC)
    vmem_limit = min(vmem_cap * 3 // 4, 100 << 20)

    x_rec, mu, logvar = pl.pallas_call(
        kernel,
        out_shape=out_shape,
        grid=(b_pad // tm, 2 * G),
        in_specs=in_specs,
        out_specs=out_specs,
        scratch_shapes=[
            pltpu.VMEM((tm, h_pad), jnp.float32),   # encoder-1 f32 accumulator
            pltpu.VMEM((tm, p_pad), jnp.bfloat16),  # latent z (bf16, resident for decoder tiles)
        ],
        compiler_params=pltpu.CompilerParams(
            dimension_semantics=("parallel", "arbitrary"),
            vmem_limit_bytes=vmem_limit,
        ),
    )(x_p, eps_p,
      prep["w1"], prep["b1"], prep["w2"], prep["b2"],
      prep["wh"], prep["bh"], prep["wd"], prep["bd"])

    return (x_rec[:B, :n_genes], mu[:B, :n_pathways], logvar[:B, :n_pathways])


# ---------------------------------------------------------------------------- references
def vega_reference_folded(x, eps, prep):
    """Pure-JAX reference using the same folded/bf16 params (checks kernel plumbing)."""
    B, n_genes = x.shape
    n_pathways = eps.shape[1]
    g_pad, p_pad = prep["g_pad"], prep["p_pad"]
    x_p = _pad2d(x.astype(jnp.float32), B, g_pad).astype(jnp.bfloat16)
    eps_p = _pad2d(eps.astype(jnp.float32), B, p_pad)
    h1 = jnp.maximum(jnp.dot(x_p, prep["w1"],
                             preferred_element_type=jnp.float32) + prep["b1"], 0.0)
    h2 = jnp.maximum(jnp.dot(h1.astype(jnp.bfloat16), prep["w2"],
                             preferred_element_type=jnp.float32) + prep["b2"], 0.0)
    ml = jnp.dot(h2.astype(jnp.bfloat16), prep["wh"],
                 preferred_element_type=jnp.float32) + prep["bh"]
    mu = ml[:, :p_pad]
    lv = ml[:, p_pad:]
    z = mu + eps_p * jnp.exp(0.5 * lv)
    xr = jnp.dot(z.astype(jnp.bfloat16), prep["wd"],
                 preferred_element_type=jnp.float32) + prep["bd"]
    return xr[:, :n_genes], mu[:, :n_pathways], lv[:, :n_pathways]


def vega_reference_f32(x, eps, raw):
    """True f32 eval-mode reference of the original PyTorch module math."""
    def bn(h, g, be, rm, rv):
        return (h - rm) * (g * jax.lax.rsqrt(rv + BN_EPS)) + be

    h = jnp.maximum(bn(x @ raw["w1"] + raw["b1"],
                       raw["g1"], raw["be1"], raw["rm1"], raw["rv1"]), 0.0)
    h = jnp.maximum(bn(h @ raw["w2"] + raw["b2"],
                       raw["g2"], raw["be2"], raw["rm2"], raw["rv2"]), 0.0)
    mu = h @ raw["wm"] + raw["bm"]
    lv = h @ raw["wl"] + raw["bl"]
    z = mu + eps * jnp.exp(0.5 * lv)
    xr = z @ (raw["wdec"] * raw["mask"].T) + raw["bdec"]
    return xr, mu, lv


# ------------------------------------------------------------------------- init / main
def init_raw_params(key, n_genes, n_pathways, hidden=800):
    ks = jax.random.split(key, 18)
    scale = 0.05
    mask = (jax.random.uniform(ks[0], (n_genes, n_pathways)) < 0.3).astype(jnp.float32)
    return {
        "w1": scale * jax.random.normal(ks[1], (n_genes, hidden), jnp.float32),
        "b1": 0.1 * jax.random.normal(ks[2], (hidden,), jnp.float32),
        "g1": 1.0 + 0.1 * jax.random.normal(ks[3], (hidden,), jnp.float32),
        "be1": 0.1 * jax.random.normal(ks[4], (hidden,), jnp.float32),
        "rm1": 0.1 * jax.random.normal(ks[5], (hidden,), jnp.float32),
        "rv1": jax.random.uniform(ks[6], (hidden,), jnp.float32, 0.5, 1.5),
        "w2": scale * jax.random.normal(ks[7], (hidden, hidden), jnp.float32),
        "b2": 0.1 * jax.random.normal(ks[8], (hidden,), jnp.float32),
        "g2": 1.0 + 0.1 * jax.random.normal(ks[9], (hidden,), jnp.float32),
        "be2": 0.1 * jax.random.normal(ks[10], (hidden,), jnp.float32),
        "rm2": 0.1 * jax.random.normal(ks[11], (hidden,), jnp.float32),
        "rv2": jax.random.uniform(ks[12], (hidden,), jnp.float32, 0.5, 1.5),
        "wm": scale * jax.random.normal(ks[13], (hidden, n_pathways), jnp.float32),
        "bm": 0.1 * jax.random.normal(ks[14], (n_pathways,), jnp.float32),
        "wl": scale * jax.random.normal(ks[15], (hidden, n_pathways), jnp.float32),
        "bl": 0.1 * jax.random.normal(ks[16], (n_pathways,), jnp.float32),
        "wdec": scale * jax.random.normal(ks[17], (n_pathways, n_genes), jnp.float32),
        "mask": mask,            # pathway_mask (n_genes, n_pathways)
        "bdec": jnp.zeros((n_genes,), jnp.float32),
    }


if __name__ == "__main__":
    key = jax.random.PRNGKey(0)
    k_param, k_x, k_eps = jax.random.split(key, 3)

    B, N_GENES, N_PATHWAYS, HIDDEN = 8, 128, 32, 800
    raw = init_raw_params(k_param, N_GENES, N_PATHWAYS, HIDDEN)
    prep = prepare_params(raw, N_GENES, N_PATHWAYS, HIDDEN)

    x = jax.random.normal(k_x, (B, N_GENES), jnp.float32)
    eps = jax.random.normal(k_eps, (B, N_PATHWAYS), jnp.float32)

    x_rec, mu, logvar = vega_forward(x, eps, prep)
    jax.block_until_ready((x_rec, mu, logvar))

    assert x_rec.shape == (B, N_GENES)
    assert mu.shape == (B, N_PATHWAYS)
    assert logvar.shape == (B, N_PATHWAYS)

    # Plumbing check: same folded bf16 params (tight tolerance).
    xr_p, mu_p, lv_p = vega_reference_folded(x, eps, prep)
    assert bool(jnp.allclose(x_rec, xr_p, rtol=1e-2, atol=1e-2))
    assert bool(jnp.allclose(mu, mu_p, rtol=1e-2, atol=1e-2))
    assert bool(jnp.allclose(logvar, lv_p, rtol=1e-2, atol=1e-2))

    # Fidelity check: true f32 eval-mode reference of the original module
    # (looser tolerance covers the bf16 weight/input rounding of the kernel).
    xr_f, mu_f, lv_f = vega_reference_f32(x, eps, raw)
    assert bool(jnp.allclose(x_rec, xr_f, rtol=3e-2, atol=3e-2))
    assert bool(jnp.allclose(mu, mu_f, rtol=3e-2, atol=3e-2))
    assert bool(jnp.allclose(logvar, lv_f, rtol=3e-2, atol=3e-2))

    print("KERNEL_OK")
</pallas_src>

<mosaic_0001>
module attributes {stable_mosaic.version = 11 : i64} {
  func.func @_vega_kernel(%arg0: i32, %arg1: i32, %arg2: memref<8x128xbf16, #tpu.memory_space<vmem>>, %arg3: memref<8x128xf32, #tpu.memory_space<vmem>>, %arg4: memref<128x896xbf16, #tpu.memory_space<vmem>>, %arg5: memref<1x896xf32, #tpu.memory_space<vmem>>, %arg6: memref<896x896xbf16, #tpu.memory_space<vmem>>, %arg7: memref<1x896xf32, #tpu.memory_space<vmem>>, %arg8: memref<896x256xbf16, #tpu.memory_space<vmem>>, %arg9: memref<1x256xf32, #tpu.memory_space<vmem>>, %arg10: memref<128x128xbf16, #tpu.memory_space<vmem>>, %arg11: memref<1x128xf32, #tpu.memory_space<vmem>>, %arg12: memref<8x128xf32, #tpu.memory_space<vmem>>, %arg13: memref<8x128xf32, #tpu.memory_space<vmem>>, %arg14: memref<8x128xf32, #tpu.memory_space<vmem>>, %arg15: memref<8x896xf32, #tpu.memory_space<vmem>>, %arg16: memref<8x128xbf16, #tpu.memory_space<vmem>>) attributes {dimension_semantics = [#tpu.dimension_semantics<parallel>, #tpu.dimension_semantics<arbitrary>], iteration_bounds = array<i64: 1, 2>, scalar_prefetch = 0 : i64, scratch_operands = 2 : i64, tpu.core_type = #tpu.core_type<tc>, window_params = [{transform_indices = @transform_0, window_bounds = array<i64: 8, 128>}, {transform_indices = @transform_1, window_bounds = array<i64: 8, 128>}, {transform_indices = @transform_2, window_bounds = array<i64: 128, 896>}, {pipeline_mode = #tpu.pipeline_mode<synchronous>, transform_indices = @transform_3, window_bounds = array<i64: 1, 896>}, {pipeline_mode = #tpu.pipeline_mode<synchronous>, transform_indices = @transform_4, window_bounds = array<i64: 896, 896>}, {pipeline_mode = #tpu.pipeline_mode<synchronous>, transform_indices = @transform_5, window_bounds = array<i64: 1, 896>}, {pipeline_mode = #tpu.pipeline_mode<synchronous>, transform_indices = @transform_6, window_bounds = array<i64: 896, 256>}, {pipeline_mode = #tpu.pipeline_mode<synchronous>, transform_indices = @transform_7, window_bounds = array<i64: 1, 256>}, {transform_indices = @transform_8, window_bounds = array<i64: 128, 128>}, {transform_indices = @transform_9, window_bounds = array<i64: 1, 128>}, {transform_indices = @transform_10, window_bounds = array<i64: 8, 128>}, {transform_indices = @transform_11, window_bounds = array<i64: 8, 128>}, {transform_indices = @transform_12, window_bounds = array<i64: 8, 128>}]} {
    %c0_i32 = arith.constant 0 : i32
    %0 = arith.cmpi eq, %arg1, %c0_i32 : i32
    %1 = arith.extui %0 : i1 to i32
    %c0_i32_0 = arith.constant 0 : i32
    %2 = arith.cmpi ne, %1, %c0_i32_0 : i32
    scf.if %2 {
      %cst = arith.constant 0.000000e+00 : f32
      %12 = vector.broadcast %cst : f32 to vector<8x896xf32>
      %c0 = arith.constant 0 : index
      %c0_6 = arith.constant 0 : index
      %13 = vector.load %arg15[%c0, %c0_6] : memref<8x896xf32, #tpu.memory_space<vmem>>, vector<8x896xf32>
      tpu.vector_store %arg15[%c0, %c0_6], %12 {strides = array<i32>} : memref<8x896xf32, #tpu.memory_space<vmem>>, vector<8x896xf32>,
    } else {
    }
    %c1_i32 = arith.constant 1 : i32
    %3 = arith.cmpi slt, %arg1, %c1_i32 : i32
    %4 = arith.extui %3 : i1 to i32
    %c0_i32_1 = arith.constant 0 : i32
    %5 = arith.cmpi ne, %4, %c0_i32_1 : i32
    scf.if %5 {
      %c0 = arith.constant 0 : index
      %c0_6 = arith.constant 0 : index
      %12 = vector.load %arg15[%c0, %c0_6] : memref<8x896xf32, #tpu.memory_space<vmem>>, vector<8x896xf32>
      %c0_7 = arith.constant 0 : index
      %c0_8 = arith.constant 0 : index
      %13 = vector.load %arg2[%c0_7, %c0_8] : memref<8x128xbf16, #tpu.memory_space<vmem>>, vector<8x128xbf16>
      %c0_9 = arith.constant 0 : index
      %c0_10 = arith.constant 0 : index
      %14 = vector.load %arg4[%c0_9, %c0_10] : memref<128x896xbf16, #tpu.memory_space<vmem>>, vector<128x896xbf16>
      %cst = arith.constant dense<0.000000e+00> : vector<8x896xf32>
      %15 = tpu.matmul %13, %14, %cst {dimension_numbers = #tpu.dot_dimension_numbers<[1], [0], [0], [1], [0, 0, 1, 1], [], []>} : vector<8x128xbf16>, vector<128x896xbf16>, vector<8x896xf32> -> vector<8x896xf32>
      %16 = arith.addf %12, %15 : vector<8x896xf32>
      %c0_11 = arith.constant 0 : index
      %c0_12 = arith.constant 0 : index
      %17 = vector.load %arg15[%c0_11, %c0_12] : memref<8x896xf32, #tpu.memory_space<vmem>>, vector<8x896xf32>
      tpu.vector_store %arg15[%c0_11, %c0_12], %16 {strides = array<i32>} : memref<8x896xf32, #tpu.memory_space<vmem>>, vector<8x896xf32>,
    } else {
    }
    %c0_i32_2 = arith.constant 0 : i32
    %6 = arith.cmpi eq, %arg1, %c0_i32_2 : i32
    %7 = arith.extui %6 : i1 to i32
    %c0_i32_3 = arith.constant 0 : i32
    %8 = arith.cmpi ne, %7, %c0_i32_3 : i32
    scf.if %8 {
      %c0 = arith.constant 0 : index
      %c0_6 = arith.constant 0 : index
      %12 = vector.load %arg15[%c0, %c0_6] : memref<8x896xf32, #tpu.memory_space<vmem>>, vector<8x896xf32>
      %c0_7 = arith.constant 0 : index
      %c0_8 = arith.constant 0 : index
      %13 = vector.load %arg5[%c0_7, %c0_8] : memref<1x896xf32, #tpu.memory_space<vmem>>, vector<1x896xf32>
      %14 = vector.broadcast %13 : vector<1x896xf32> to vector<8x896xf32>
      %15 = arith.addf %12, %14 : vector<8x896xf32>
      %cst = arith.constant 0.000000e+00 : f32
      %16 = vector.broadcast %cst : f32 to vector<8x896xf32>
      %17 = arith.maximumf %15, %16 : vector<8x896xf32>
      %18 = arith.truncf %17 : vector<8x896xf32> to vector<8x896xbf16>
      %c0_9 = arith.constant 0 : index
      %c0_10 = arith.constant 0 : index
      %19 = vector.load %arg6[%c0_9, %c0_10] : memref<896x896xbf16, #tpu.memory_space<vmem>>, vector<896x896xbf16>
      %cst_11 = arith.constant dense<0.000000e+00> : vector<8x896xf32>
      %20 = tpu.matmul %18, %19, %cst_11 {dimension_numbers = #tpu.dot_dimension_numbers<[1], [0], [0], [1], [0, 0, 1, 1], [], []>} : vector<8x896xbf16>, vector<896x896xbf16>, vector<8x896xf32> -> vector<8x896xf32>
      %c0_12 = arith.constant 0 : index
      %c0_13 = arith.constant 0 : index
      %21 = vector.load %arg7[%c0_12, %c0_13] : memref<1x896xf32, #tpu.memory_space<vmem>>, vector<1x896xf32>
      %22 = vector.broadcast %21 : vector<1x896xf32> to vector<8x896xf32>
      %23 = arith.addf %20, %22 : vector<8x896xf32>
      %cst_14 = arith.constant 0.000000e+00 : f32
      %24 = vector.broadcast %cst_14 : f32 to vector<8x896xf32>
      %25 = arith.maximumf %23, %24 : vector<8x896xf32>
      %26 = arith.truncf %25 : vector<8x896xf32> to vector<8x896xbf16>
      %c0_15 = arith.constant 0 : index
      %c0_16 = arith.constant 0 : index
      %27 = vector.load %arg8[%c0_15, %c0_16] : memref<896x256xbf16, #tpu.memory_space<vmem>>, vector<896x256xbf16>
      %cst_17 = arith.constant dense<0.000000e+00> : vector<8x256xf32>
      %28 = tpu.matmul %26, %27, %cst_17 {dimension_numbers = #tpu.dot_dimension_numbers<[1], [0], [0], [1], [0, 0, 1, 1], [], []>} : vector<8x896xbf16>, vector<896x256xbf16>, vector<8x256xf32> -> vector<8x256xf32>
      %c0_18 = arith.constant 0 : index
      %c0_19 = arith.constant 0 : index
      %29 = vector.load %arg9[%c0_18, %c0_19] : memref<1x256xf32, #tpu.memory_space<vmem>>, vector<1x256xf32>
      %30 = vector.broadcast %29 : vector<1x256xf32> to vector<8x256xf32>
      %31 = arith.addf %28, %30 : vector<8x256xf32>
      %32 = vector.extract_strided_slice %31 {offsets = [0, 0], sizes = [8, 128], strides = [1, 1]} : vector<8x256xf32> to vector<8x128xf32>
      %33 = vector.extract_strided_slice %31 {offsets = [0, 128], sizes = [8, 128], strides = [1, 1]} : vector<8x256xf32> to vector<8x128xf32>
      %c0_20 = arith.constant 0 : index
      %c0_21 = arith.constant 0 : index
      %34 = vector.load %arg3[%c0_20, %c0_21] : memref<8x128xf32, #tpu.memory_space<vmem>>, vector<8x128xf32>
      %cst_22 = arith.constant 5.000000e-01 : f32
      %35 = vector.broadcast %cst_22 : f32 to vector<8x128xf32>
      %36 = arith.mulf %35, %33 : vector<8x128xf32>
      %37 = math.exp %36 : vector<8x128xf32>
      %38 = arith.mulf %34, %37 : vector<8x128xf32>
      %39 = arith.addf %32, %38 : vector<8x128xf32>
      %c0_23 = arith.constant 0 : index
      %c0_24 = arith.constant 0 : index
      %40 = vector.load %arg13[%c0_23, %c0_24] : memref<8x128xf32, #tpu.memory_space<vmem>>, vector<8x128xf32>
      tpu.vector_store %arg13[%c0_23, %c0_24], %32 {strides = array<i32>} : memref<8x128xf32, #tpu.memory_space<vmem>>, vector<8x128xf32>,
      %c0_25 = arith.constant 0 : index
      %c0_26 = arith.constant 0 : index
      %41 = vector.load %arg14[%c0_25, %c0_26] : memref<8x128xf32, #tpu.memory_space<vmem>>, vector<8x128xf32>
      tpu.vector_store %arg14[%c0_25, %c0_26], %33 {strides = array<i32>} : memref<8x128xf32, #tpu.memory_space<vmem>>, vector<8x128xf32>,
      %42 = arith.truncf %39 : vector<8x128xf32> to vector<8x128xbf16>
      %c0_27 = arith.constant 0 : index
      %c0_28 = arith.constant 0 : index
      %43 = vector.load %arg16[%c0_27, %c0_28] : memref<8x128xbf16, #tpu.memory_space<vmem>>, vector<8x128xbf16>
      tpu.vector_store %arg16[%c0_27, %c0_28], %42 {strides = array<i32>} : memref<8x128xbf16, #tpu.memory_space<vmem>>, vector<8x128xbf16>,
    } else {
    }
    %c1_i32_4 = arith.constant 1 : i32
    %9 = arith.cmpi sge, %arg1, %c1_i32_4 : i32
    %10 = arith.extui %9 : i1 to i32
    %c0_i32_5 = arith.constant 0 : i32
    %11 = arith.cmpi ne, %10, %c0_i32_5 : i32
    scf.if %11 {
      %c0 = arith.constant 0 : index
      %c0_6 = arith.constant 0 : index
      %12 = vector.load %arg16[%c0, %c0_6] : memref<8x128xbf16, #tpu.memory_space<vmem>>, vector<8x128xbf16>
      %c0_7 = arith.constant 0 : index
      %c0_8 = arith.constant 0 : index
      %13 = vector.load %arg10[%c0_7, %c0_8] : memref<128x128xbf16, #tpu.memory_space<vmem>>, vector<128x128xbf16>
      %cst = arith.constant dense<0.000000e+00> : vector<8x128xf32>
      %14 = tpu.matmul %12, %13, %cst {dimension_numbers = #tpu.dot_dimension_numbers<[1], [0], [0], [1], [0, 0, 1, 1], [], []>} : vector<8x128xbf16>, vector<128x128xbf16>, vector<8x128xf32> -> vector<8x128xf32>
      %c0_9 = arith.constant 0 : index
      %c0_10 = arith.constant 0 : index
      %15 = vector.load %arg11[%c0_9, %c0_10] : memref<1x128xf32, #tpu.memory_space<vmem>>, vector<1x128xf32>
      %16 = vector.broadcast %15 : vector<1x128xf32> to vector<8x128xf32>
      %17 = arith.addf %14, %16 : vector<8x128xf32>
      %c0_11 = arith.constant 0 : index
      %c0_12 = arith.constant 0 : index
      %18 = vector.load %arg12[%c0_11, %c0_12] : memref<8x128xf32, #tpu.memory_space<vmem>>, vector<8x128xf32>
      tpu.vector_store %arg12[%c0_11, %c0_12], %17 {strides = array<i32>} : memref<8x128xf32, #tpu.memory_space<vmem>>, vector<8x128xf32>,
    } else {
    }
    return
  }
  func.func @transform_0(%arg0: i32, %arg1: i32) -> (i32, i32) {
    %c0_i32 = arith.constant 0 : i32
    %0 = arith.minsi %arg1, %c0_i32 : i32
    %c0_i32_0 = arith.constant 0 : i32
    return %arg0, %0 : i32, i32
  }
  func.func @transform_1(%arg0: i32, %arg1: i32) -> (i32, i32) {
    %c0_i32 = arith.constant 0 : i32
    %c0_i32_0 = arith.constant 0 : i32
    return %arg0, %c0_i32 : i32, i32
  }
  func.func @transform_2(%arg0: i32, %arg1: i32) -> (i32, i32) {
    %c0_i32 = arith.constant 0 : i32
    %0 = arith.minsi %arg1, %c0_i32 : i32
    %c0_i32_0 = arith.constant 0 : i32
    %c0_i32_1 = arith.constant 0 : i32
    return %0, %c0_i32_0 : i32, i32
  }
  func.func @transform_3(%arg0: i32, %arg1: i32) -> (i32, i32) {
    %c0_i32 = arith.constant 0 : i32
    %c0_i32_0 = arith.constant 0 : i32
    %c0_i32_1 = arith.constant 0 : i32
    return %c0_i32, %c0_i32_0 : i32, i32
  }
  func.func @transform_4(%arg0: i32, %arg1: i32) -> (i32, i32) {
    %c0_i32 = arith.constant 0 : i32
    %c0_i32_0 = arith.constant 0 : i32
    %c0_i32_1 = arith.constant 0 : i32
    return %c0_i32, %c0_i32_0 : i32, i32
  }
  func.func @transform_5(%arg0: i32, %arg1: i32) -> (i32, i32) {
    %c0_i32 = arith.constant 0 : i32
    %c0_i32_0 = arith.constant 0 : i32
    %c0_i32_1 = arith.constant 0 : i32
    return %c0_i32, %c0_i32_0 : i32, i32
  }
  func.func @transform_6(%arg0: i32, %arg1: i32) -> (i32, i32) {
    %c0_i32 = arith.constant 0 : i32
    %c0_i32_0 = arith.constant 0 : i32
    %c0_i32_1 = arith.constant 0 : i32
    return %c0_i32, %c0_i32_0 : i32, i32
  }
  func.func @transform_7(%arg0: i32, %arg1: i32) -> (i32, i32) {
    %c0_i32 = arith.constant 0 : i32
    %c0_i32_0 = arith.constant 0 : i32
    %c0_i32_1 = arith.constant 0 : i32
    return %c0_i32, %c0_i32_0 : i32, i32
  }
  func.func @transform_8(%arg0: i32, %arg1: i32) -> (i32, i32) {
    %c1_i32 = arith.constant 1 : i32
    %0 = arith.subi %arg1, %c1_i32 : i32
    %c0_i32 = arith.constant 0 : i32
    %1 = arith.maxsi %0, %c0_i32 : i32
    %c0_i32_0 = arith.constant 0 : i32
    %c0_i32_1 = arith.constant 0 : i32
    return %c0_i32_0, %1 : i32, i32
  }
  func.func @transform_9(%arg0: i32, %arg1: i32) -> (i32, i32) {
    %c1_i32 = arith.constant 1 : i32
    %0 = arith.subi %arg1, %c1_i32 : i32
    %c0_i32 = arith.constant 0 : i32
    %1 = arith.maxsi %0, %c0_i32 : i32
    %c0_i32_0 = arith.constant 0 : i32
    %c0_i32_1 = arith.constant 0 : i32
    return %c0_i32_0, %1 : i32, i32
  }
  func.func @transform_10(%arg0: i32, %arg1: i32) -> (i32, i32) {
    %c1_i32 = arith.constant 1 : i32
    %0 = arith.subi %arg1, %c1_i32 : i32
    %c0_i32 = arith.constant 0 : i32
    %1 = arith.maxsi %0, %c0_i32 : i32
    %c0_i32_0 = arith.constant 0 : i32
    return %arg0, %1 : i32, i32
  }
  func.func @transform_11(%arg0: i32, %arg1: i32) -> (i32, i32) {
    %c0_i32 = arith.constant 0 : i32
    %c0_i32_0 = arith.constant 0 : i32
    return %arg0, %c0_i32 : i32, i32
  }
  func.func @transform_12(%arg0: i32, %arg1: i32) -> (i32, i32) {
    %c0_i32 = arith.constant 0 : i32
    %c0_i32_0 = arith.constant 0 : i32
    return %arg0, %c0_i32 : i32, i32
  }
}

</mosaic_0001>

<llo_original>
// kernel: tpu_custom_call.1
$region0: #{tpu_custom_call.1}
  #allocation0 [shape = 'u32[]', space=smem, size = 0x4, offset = 0x4, fixed_abs, tag = 'smem constant byte address 0x4 - core index']
  #allocation1 [shape = 'u32[144,128]{1,0:T(1,128)}', space=vmem, size = 0x12000, scoped, tag = 'internal scratch']
  #allocation2 [shape = 'f32[8,896]{1,0:T(8,128)}', space=vmem, size = 0x7000, scoped, tag = 'scratch operand']
  #allocation3 [shape = 'bf16[8,128]{1,0:T(8,128)(2,1)}', space=vmem, size = 0x800, scoped, tag = 'scratch operand']
  %s0 = inlined_call_operand.hbm [shape: bf16[8,128], index: 0, kind: input, shape index: {}]
  %s1 = inlined_call_operand.hbm [shape: f32[8,128], index: 1, kind: input, shape index: {}]
  %s2 = inlined_call_operand.hbm [shape: bf16[128,896], index: 2, kind: input, shape index: {}]
  %s3 = inlined_call_operand.hbm [shape: f32[1,896], index: 3, kind: input, shape index: {}]
  %s4 = inlined_call_operand.hbm [shape: bf16[896,896], index: 4, kind: input, shape index: {}]
  %s5 = inlined_call_operand.hbm [shape: f32[1,896], index: 5, kind: input, shape index: {}]
  %s6 = inlined_call_operand.hbm [shape: bf16[896,256], index: 6, kind: input, shape index: {}]
  %s7 = inlined_call_operand.hbm [shape: f32[1,256], index: 7, kind: input, shape index: {}]
  %s8 = inlined_call_operand.hbm [shape: bf16[128,128], index: 8, kind: input, shape index: {}]
  %s9 = inlined_call_operand.hbm [shape: f32[1,128], index: 9, kind: input, shape index: {}]
  %s10 = inlined_call_operand.hbm [shape: f32[8,128], index: 10, kind: output, shape index: {0}]
  %s11 = inlined_call_operand.hbm [shape: f32[8,128], index: 11, kind: output, shape index: {1}]
  %s12 = inlined_call_operand.hbm [shape: f32[8,128], index: 12, kind: output, shape index: {2}]
  %13 = xla_tuple %s10, %s11, %s12
  %s14 = sld [smem:[#allocation0]]
  $region145: #{tpu_custom_call.1} parent=0
    _
  %s16 = ssub.s32 1, %s14
  %s17 = scalar_select 0, %s16, %s14
  $region1: #{tpu_custom_call.1} parent=0
    #allocation4 [shape = 'u8[4096]{0}', space=vmem, size = 0x1000, scoped, tag = 'input window, operand 0']
    #allocation5 [shape = 's32[2]{0}', space=sflag, size = 0x8, scoped, tag = 'scoped memory for tpu_custom_call.1']
    #allocation6 [shape = 's32[2]{0}', space=sflag, size = 0x8, scoped, tag = 'scoped memory for tpu_custom_call.1']
    #allocation7 [shape = 'u8[4096]{0}', space=vmem, size = 0x1000, scoped, tag = 'input window, operand 1, single buffered']
    #allocation8 [shape = 's32[1]{0}', space=sflag, size = 0x4, scoped, tag = 'scoped memory for tpu_custom_call.1']
    #allocation9 [shape = 'u8[458752]{0}', space=vmem, size = 0x70000, scoped, tag = 'input window, operand 2']
    #allocation10 [shape = 'u8[3584]{0}', space=vmem, size = 0x1000, scoped, tag = 'input window, operand 3, single buffered']
    #allocation11 [shape = 'u8[1605632]{0}', space=vmem, size = 0x188000, scoped, tag = 'input window, operand 4, single buffered']
    #allocation12 [shape = 's32[1]{0}', space=sflag, size = 0x4, scoped, tag = 'scoped memory for tpu_custom_call.1']
    #allocation13 [shape = 'u8[3584]{0}', space=vmem, size = 0x1000, scoped, tag = 'input window, operand 5, single buffered']
    #allocation14 [shape = 'u8[458752]{0}', space=vmem, size = 0x70000, scoped, tag = 'input window, operand 6, single buffered']
    #allocation15 [shape = 's32[1]{0}', space=sflag, size = 0x4, scoped, tag = 'scoped memory for tpu_custom_call.1']
    #allocation16 [shape = 'u8[1024]{0}', space=vmem, size = 0x400, scoped, tag = 'input window, operand 7, single buffered']
    #allocation17 [shape = 'u8[65536]{0}', space=vmem, size = 0x10000, scoped, tag = 'input window, operand 8']
    #allocation18 [shape = 's32[2]{0}', space=sflag, size = 0x8, scoped, tag = 'scoped memory for tpu_custom_call.1']
    #allocation19 [shape = 'u8[1024]{0}', space=vmem, size = 0x400, scoped, tag = 'input window, operand 9']
    #allocation20 [shape = 'u8[8192]{0}', space=vmem, size = 0x2000, scoped, tag = 'output window, operand 0']
    #allocation21 [shape = 'u8[4096]{0}', space=vmem, size = 0x1000, scoped, tag = 'output window, operand 1, single buffered']
    #allocation22 [shape = 's32[1]{0}', space=sflag, size = 0x4, scoped, tag = 'scoped memory for tpu_custom_call.1']
    #allocation23 [shape = 'u8[4096]{0}', space=vmem, size = 0x1000, scoped, tag = 'output window, operand 2, single buffered']
    %18 = vsyncpa [#allocation5], 0
    %s19 = scalar_lea.sflag [#allocation5], 1
    %20 = vsyncpa %s19, 0
    %21 = vsyncpa [#allocation8], 0
    %22 = vsyncpa [#allocation12], 0
    %23 = vsyncpa [#allocation15], 0
    %24 = vsyncpa [#allocation18], 0
    %s25 = scalar_lea.sflag [#allocation18], 1
    %26 = vsyncpa %s25, 0
    %27 = vsyncpa [#allocation6], 0
    %s28 = scalar_lea.sflag [#allocation6], 1
    %29 = vsyncpa %s28, 0
    %30 = vsyncpa [#allocation22], 0
    loop: start=0, step=1, limit=4
    $region2: #{tpu_custom_call.1} parent=1 // loop_pre_header
      _
    $region3: #{tpu_custom_call.1} parent=1 // loop_header
      %s32 = sphi 0, %s36
      %p33 = scmp.ge.s32.totalorder %s32, 4
      %s39 = sphi 0, %s51
      %s40 = sphi 0, %s47
      %s41 = sphi 0, %s39
      %s42 = sphi 0, %s40
      %s43 = sphi 0, %s41
      %s44 = sphi 0, %s42
      %s60 = sphi 0, %s62
      %s63 = sphi 0, %s60
      %s64 = sphi 0, %s63
      %s80 = sphi 0, %s64
      %s86 = sphi 0, %s88
      %s89 = sphi 0, %s86
      %s90 = sphi 0, %s89
      %s106 = sphi 0, %s90
      %s116 = sphi 0, %s118
      %s119 = sphi 0, %s116
      %s120 = sphi 0, %s119
      %s136 = sphi 0, %s120
      %s140 = sphi 0, %s140
      %s142 = sphi 0, %s140
      %s143 = sphi 0, %s142
      %s157 = sphi 0, %s143
      %s161 = sphi 0, %s161
      %s163 = sphi 0, %s161
      %s164 = sphi 0, %s163
      %s178 = sphi 0, %s164
      %s182 = sphi 0, %s182
      %s184 = sphi 0, %s182
      %s185 = sphi 0, %s184
      %s199 = sphi 0, %s185
      %s203 = sphi 0, %s203
      %s205 = sphi 0, %s203
      %s206 = sphi 0, %s205
      %s220 = sphi 0, %s206
      %s224 = sphi 0, %s224
      %s226 = sphi 0, %s224
      %s227 = sphi 0, %s226
      %s241 = sphi 0, %s227
      %s253 = sphi 0, %s255
      %s256 = sphi 0, %s253
      %s257 = sphi 0, %s256
      %s273 = sphi 0, %s257
      %s285 = sphi 0, %s287
      %s288 = sphi 0, %s285
      %s289 = sphi 0, %s288
      %s305 = sphi 0, %s289
      %s319 = sphi 0, %s321
      %s322 = sphi 0, %s319
      %s323 = sphi 0, %s322
      %s339 = sphi 0, %s323
      %s345 = sphi 0, %s347
      %s348 = sphi 0, %s345
      %s349 = sphi 0, %s348
      %s365 = sphi 0, %s349
      %s371 = sphi 0, %s373
      %s374 = sphi 0, %s371
      %s375 = sphi 0, %s374
      %s391 = sphi 0, %s375
    $region4: #{tpu_custom_call.1} parent=1 // loop_header_branch
      %35 = sbr.rel (%p33) target = $region8
    $region5: #{tpu_custom_call.1} parent=1 // loop_body
      %s37 = ssub.s32 %s32, 1
      %s38 = ssub.s32 %s32, 2
      %s45 = sadd.s32 1, %s40
      %p46 = scmp.ge.s32.totalorder %s45, 2
      %s47 = scalar_select %p46, 0, %s45
      %s48 = sadd.s32 1, %s39
      %s49 = scalar_select %p46, %s48, %s39
      %p50 = scmp.ge.s32.totalorder %s49, 1
      %s51 = scalar_select %p50, 0, %s49
      %p52 = scmp.lt.s32.totalorder %s40, 0
      %s53 = scalar_select %p52, %s40, 0
      %p54 = scmp.lt.s32.totalorder %s47, 0
      %s55 = scalar_select %p54, %s47, 0
      %s56 = ssub.s32 %s39, %s51
      %s57 = ssub.s32 %s53, %s55
      %s58 = sor.u32 %s56, %s57
      %p59 = scmp.eq.s32.totalorder %s58, 0
      %s61 = sadd.s32 %s60, 1
      %s62 = scalar_select %p59, %s60, %s61
      %p65 = pneg %p59
      %p66 = scmp.eq.s32.totalorder %s32, 1
      %p67 = por %p65, %p66
      %p68 = scmp.ne.s32.totalorder %s60, %s63
      %p69 = scmp.eq.s32.totalorder %s32, 0
      %p70 = por %p68, %p69
      %p71 = scmp.ne.s32.totalorder %s60, %s63
      %p72 = scmp.eq.s32.totalorder %s37, 1
      %p73 = por %p71, %p72
      %p74 = scmp.ne.s32.totalorder %s63, %s64
      %p75 = scmp.eq.s32.totalorder %s37, 0
      %p76 = por %p74, %p75
      %p77 = scmp.ne.s32.totalorder %s63, %s64
      %p78 = scmp.eq.s32.totalorder %s38, 1
      %p79 = por %p77, %p78
      %p81 = scmp.ne.s32.totalorder %s64, %s80
      %p82 = scmp.eq.s32.totalorder %s38, 0
      %p83 = por %p81, %p82
      %s84 = ssub.s32 %s39, %s51
      %p85 = scmp.eq.s32.totalorder %s84, 0
      %s87 = sadd.s32 %s86, 1
      %s88 = scalar_select %p85, %s86, %s87
      %p91 = pneg %p85
      %p92 = scmp.eq.s32.totalorder %s32, 1
      %p93 = por %p91, %p92
      %p94 = scmp.ne.s32.totalorder %s86, %s89
      %p95 = scmp.eq.s32.totalorder %s32, 0
      %p96 = por %p94, %p95
      %p97 = scmp.ne.s32.totalorder %s86, %s89
      %p98 = scmp.eq.s32.totalorder %s37, 1
      %p99 = por %p97, %p98
      %p100 = scmp.ne.s32.totalorder %s89, %s90
      %p101 = scmp.eq.s32.totalorder %s37, 0
      %p102 = por %p100, %p101
      %p103 = scmp.ne.s32.totalorder %s89, %s90
      %p104 = scmp.eq.s32.totalorder %s38, 1
      %p105 = por %p103, %p104
      %p107 = scmp.ne.s32.totalorder %s90, %s106
      %p108 = scmp.eq.s32.totalorder %s38, 0
      %p109 = por %p107, %p108
      %p110 = scmp.lt.s32.totalorder %s40, 0
      %s111 = scalar_select %p110, %s40, 0
      %p112 = scmp.lt.s32.totalorder %s47, 0
      %s113 = scalar_select %p112, %s47, 0
      %s114 = ssub.s32 %s111, %s113
      %p115 = scmp.eq.s32.totalorder %s114, 0
      %s117 = sadd.s32 %s116, 1
      %s118 = scalar_select %p115, %s116, %s117
      %p121 = pneg %p115
      %p122 = scmp.eq.s32.totalorder %s32, 1
      %p123 = por %p121, %p122
      %p124 = scmp.ne.s32.totalorder %s116, %s119
      %p125 = scmp.eq.s32.totalorder %s32, 0
      %p126 = por %p124, %p125
      %p127 = scmp.ne.s32.totalorder %s116, %s119
      %p128 = scmp.eq.s32.totalorder %s37, 1
      %p129 = por %p127, %p128
      %p130 = scmp.ne.s32.totalorder %s119, %s120
      %p131 = scmp.eq.s32.totalorder %s37, 0
      %p132 = por %p130, %p131
      %p133 = scmp.ne.s32.totalorder %s119, %s120
      %p134 = scmp.eq.s32.totalorder %s38, 1
      %p135 = por %p133, %p134
      %p137 = scmp.ne.s32.totalorder %s120, %s136
      %p138 = scmp.eq.s32.totalorder %s38, 0
      %p139 = por %p137, %p138
      %s141 = sadd.s32 %s140, 1
      %p144 = scmp.eq.s32.totalorder %s32, 1
      %p145 = scmp.ne.s32.totalorder %s140, %s142
      %p146 = scmp.eq.s32.totalorder %s32, 0
      %p147 = por %p145, %p146
      %p148 = scmp.ne.s32.totalorder %s140, %s142
      %p149 = scmp.eq.s32.totalorder %s37, 1
      %p150 = por %p148, %p149
      %p151 = scmp.ne.s32.totalorder %s142, %s143
      %p152 = scmp.eq.s32.totalorder %s37, 0
      %p153 = por %p151, %p152
      %p154 = scmp.ne.s32.totalorder %s142, %s143
      %p155 = scmp.eq.s32.totalorder %s38, 1
      %p156 = por %p154, %p155
      %p158 = scmp.ne.s32.totalorder %s143, %s157
      %p159 = scmp.eq.s32.totalorder %s38, 0
      %p160 = por %p158, %p159
      %s162 = sadd.s32 %s161, 1
      %p165 = scmp.eq.s32.totalorder %s32, 1
      %p166 = scmp.ne.s32.totalorder %s161, %s163
      %p167 = scmp.eq.s32.totalorder %s32, 0
      %p168 = por %p166, %p167
      %p169 = scmp.ne.s32.totalorder %s161, %s163
      %p170 = scmp.eq.s32.totalorder %s37, 1
      %p171 = por %p169, %p170
      %p172 = scmp.ne.s32.totalorder %s163, %s164
      %p173 = scmp.eq.s32.totalorder %s37, 0
      %p174 = por %p172, %p173
      %p175 = scmp.ne.s32.totalorder %s163, %s164
      %p176 = scmp.eq.s32.totalorder %s38, 1
      %p177 = por %p175, %p176
      %p179 = scmp.ne.s32.totalorder %s164, %s178
      %p180 = scmp.eq.s32.totalorder %s38, 0
      %p181 = por %p179, %p180
      %s183 = sadd.s32 %s182, 1
      %p186 = scmp.eq.s32.totalorder %s32, 1
      %p187 = scmp.ne.s32.totalorder %s182, %s184
      %p188 = scmp.eq.s32.totalorder %s32, 0
      %p189 = por %p187, %p188
      %p190 = scmp.ne.s32.totalorder %s182, %s184
      %p191 = scmp.eq.s32.totalorder %s37, 1
      %p192 = por %p190, %p191
      %p193 = scmp.ne.s32.totalorder %s184, %s185
      %p194 = scmp.eq.s32.totalorder %s37, 0
      %p195 = por %p193, %p194
      %p196 = scmp.ne.s32.totalorder %s184, %s185
      %p197 = scmp.eq.s32.totalorder %s38, 1
      %p198 = por %p196, %p197
      %p200 = scmp.ne.s32.totalorder %s185, %s199
      %p201 = scmp.eq.s32.totalorder %s38, 0
      %p202 = por %p200, %p201
      %s204 = sadd.s32 %s203, 1
      %p207 = scmp.eq.s32.totalorder %s32, 1
      %p208 = scmp.ne.s32.totalorder %s203, %s205
      %p209 = scmp.eq.s32.totalorder %s32, 0
      %p210 = por %p208, %p209
      %p211 = scmp.ne.s32.totalorder %s203, %s205
      %p212 = scmp.eq.s32.totalorder %s37, 1
      %p213 = por %p211, %p212
      %p214 = scmp.ne.s32.totalorder %s205, %s206
      %p215 = scmp.eq.s32.totalorder %s37, 0
      %p216 = por %p214, %p215
      %p217 = scmp.ne.s32.totalorder %s205, %s206
      %p218 = scmp.eq.s32.totalorder %s38, 1
      %p219 = por %p217, %p218
      %p221 = scmp.ne.s32.totalorder %s206, %s220
      %p222 = scmp.eq.s32.totalorder %s38, 0
      %p223 = por %p221, %p222
      %s225 = sadd.s32 %s224, 1
      %p228 = scmp.eq.s32.totalorder %s32, 1
      %p229 = scmp.ne.s32.totalorder %s224, %s226
      %p230 = scmp.eq.s32.totalorder %s32, 0
      %p231 = por %p229, %p230
      %p232 = scmp.ne.s32.totalorder %s224, %s226
      %p233 = scmp.eq.s32.totalorder %s37, 1
      %p234 = por %p232, %p233
      %p235 = scmp.ne.s32.totalorder %s226, %s227
      %p236 = scmp.eq.s32.totalorder %s37, 0
      %p237 = por %p235, %p236
      %p238 = scmp.ne.s32.totalorder %s226, %s227
      %p239 = scmp.eq.s32.totalorder %s38, 1
      %p240 = por %p238, %p239
      %p242 = scmp.ne.s32.totalorder %s227, %s241
      %p243 = scmp.eq.s32.totalorder %s38, 0
      %p244 = por %p242, %p243
      %s245 = ssub.s32 %s40, 1
      %p246 = scmp.gt.s32.totalorder %s245, 0
      %s247 = scalar_select %p246, %s245, 0
      %s248 = ssub.s32 %s47, 1
      %p249 = scmp.gt.s32.totalorder %s248, 0
      %s250 = scalar_select %p249, %s248, 0
      %s251 = ssub.s32 %s247, %s250
      %p252 = scmp.eq.s32.totalorder %s251, 0
      %s254 = sadd.s32 %s253, 1
      %s255 = scalar_select %p252, %s253, %s254
      %p258 = pneg %p252
      %p259 = scmp.eq.s32.totalorder %s32, 1
      %p260 = por %p258, %p259
      %p261 = scmp.ne.s32.totalorder %s253, %s256
      %p262 = scmp.eq.s32.totalorder %s32, 0
      %p263 = por %p261, %p262
      %p264 = scmp.ne.s32.totalorder %s253, %s256
      %p265 = scmp.eq.s32.totalorder %s37, 1
      %p266 = por %p264, %p265
      %p267 = scmp.ne.s32.totalorder %s256, %s257
      %p268 = scmp.eq.s32.totalorder %s37, 0
      %p269 = por %p267, %p268
      %p270 = scmp.ne.s32.totalorder %s256, %s257
      %p271 = scmp.eq.s32.totalorder %s38, 1
      %p272 = por %p270, %p271
      %p274 = scmp.ne.s32.totalorder %s257, %s273
      %p275 = scmp.eq.s32.totalorder %s38, 0
      %p276 = por %p274, %p275
      %s277 = ssub.s32 %s40, 1
      %p278 = scmp.gt.s32.totalorder %s277, 0
      %s279 = scalar_select %p278, %s277, 0
      %s280 = ssub.s32 %s47, 1
      %p281 = scmp.gt.s32.totalorder %s280, 0
      %s282 = scalar_select %p281, %s280, 0
      %s283 = ssub.s32 %s279, %s282
      %p284 = scmp.eq.s32.totalorder %s283, 0
      %s286 = sadd.s32 %s285, 1
      %s287 = scalar_select %p284, %s285, %s286
      %p290 = pneg %p284
      %p291 = scmp.eq.s32.totalorder %s32, 1
      %p292 = por %p290, %p291
      %p293 = scmp.ne.s32.totalorder %s285, %s288
      %p294 = scmp.eq.s32.totalorder %s32, 0
      %p295 = por %p293, %p294
      %p296 = scmp.ne.s32.totalorder %s285, %s288
      %p297 = scmp.eq.s32.totalorder %s37, 1
      %p298 = por %p296, %p297
      %p299 = scmp.ne.s32.totalorder %s288, %s289
      %p300 = scmp.eq.s32.totalorder %s37, 0
      %p301 = por %p299, %p300
      %p302 = scmp.ne.s32.totalorder %s288, %s289
      %p303 = scmp.eq.s32.totalorder %s38, 1
      %p304 = por %p302, %p303
      %p306 = scmp.ne.s32.totalorder %s289, %s305
      %p307 = scmp.eq.s32.totalorder %s38, 0
      %p308 = por %p306, %p307
      %s309 = ssub.s32 %s40, 1
      %p310 = scmp.gt.s32.totalorder %s309, 0
      %s311 = scalar_select %p310, %s309, 0
      %s312 = ssub.s32 %s47, 1
      %p313 = scmp.gt.s32.totalorder %s312, 0
      %s314 = scalar_select %p313, %s312, 0
      %s315 = ssub.s32 %s39, %s51
      %s316 = ssub.s32 %s311, %s314
      %s317 = sor.u32 %s315, %s316
      %p318 = scmp.eq.s32.totalorder %s317, 0
      %s320 = sadd.s32 %s319, 1
      %s321 = scalar_select %p318, %s319, %s320
      %p324 = pneg %p318
      %p325 = scmp.eq.s32.totalorder %s32, 1
      %p326 = por %p324, %p325
      %p327 = scmp.ne.s32.totalorder %s319, %s322
      %p328 = scmp.eq.s32.totalorder %s32, 0
      %p329 = por %p327, %p328
      %p330 = scmp.ne.s32.totalorder %s319, %s322
      %p331 = scmp.eq.s32.totalorder %s37, 1
      %p332 = por %p330, %p331
      %p333 = scmp.ne.s32.totalorder %s322, %s323
      %p334 = scmp.eq.s32.totalorder %s37, 0
      %p335 = por %p333, %p334
      %p336 = scmp.ne.s32.totalorder %s322, %s323
      %p337 = scmp.eq.s32.totalorder %s38, 1
      %p338 = por %p336, %p337
      %p340 = scmp.ne.s32.totalorder %s323, %s339
      %p341 = scmp.eq.s32.totalorder %s38, 0
      %p342 = por %p340, %p341
      %s343 = ssub.s32 %s39, %s51
      %p344 = scmp.eq.s32.totalorder %s343, 0
      %s346 = sadd.s32 %s345, 1
      %s347 = scalar_select %p344, %s345, %s346
      %p350 = pneg %p344
      %p351 = scmp.eq.s32.totalorder %s32, 1
      %p352 = por %p350, %p351
      %p353 = scmp.ne.s32.totalorder %s345, %s348
      %p354 = scmp.eq.s32.totalorder %s32, 0
      %p355 = por %p353, %p354
      %p356 = scmp.ne.s32.totalorder %s345, %s348
      %p357 = scmp.eq.s32.totalorder %s37, 1
      %p358 = por %p356, %p357
      %p359 = scmp.ne.s32.totalorder %s348, %s349
      %p360 = scmp.eq.s32.totalorder %s37, 0
      %p361 = por %p359, %p360
      %p362 = scmp.ne.s32.totalorder %s348, %s349
      %p363 = scmp.eq.s32.totalorder %s38, 1
      %p364 = por %p362, %p363
      %p366 = scmp.ne.s32.totalorder %s349, %s365
      %p367 = scmp.eq.s32.totalorder %s38, 0
      %p368 = por %p366, %p367
      %s369 = ssub.s32 %s39, %s51
      %p370 = scmp.eq.s32.totalorder %s369, 0
      %s372 = sadd.s32 %s371, 1
      %s373 = scalar_select %p370, %s371, %s372
      %p376 = pneg %p370
      %p377 = scmp.eq.s32.totalorder %s32, 1
      %p378 = por %p376, %p377
      %p379 = scmp.ne.s32.totalorder %s371, %s374
      %p380 = scmp.eq.s32.totalorder %s32, 0
      %p381 = por %p379, %p380
      %p382 = scmp.ne.s32.totalorder %s371, %s374
      %p383 = scmp.eq.s32.totalorder %s37, 1
      %p384 = por %p382, %p383
      %p385 = scmp.ne.s32.totalorder %s374, %s375
      %p386 = scmp.eq.s32.totalorder %s37, 0
      %p387 = por %p385, %p386
      %p388 = scmp.ne.s32.totalorder %s374, %s375
      %p389 = scmp.eq.s32.totalorder %s38, 1
      %p390 = por %p388, %p389
      %p392 = scmp.ne.s32.totalorder %s375, %s391
      %p393 = scmp.eq.s32.totalorder %s38, 0
      %p394 = por %p392, %p393
      %p395 = scmp.le.s32.totalorder 1, %s32
      %p396 = scmp.lt.s32.totalorder %s32, 3
      %p397 = pnand %p395, %p396
      %p398 = pneg %p397
      // Predicated region
      $region9: #{tpu_custom_call.1} parent=5 // pred_check
        _
      $region10: #{tpu_custom_call.1} parent=5 // pred_check_branch
        %400 = sbr.rel (%p397) target = $region12
      $region11: #{tpu_custom_call.1} parent=5 // pred_region
        %s401 = ssub.s32 %s32, 1
        // Predicated region
        $region13: #{tpu_custom_call.1} parent=11 // pred_check
          %p402 = pneg %p102
        $region14: #{tpu_custom_call.1} parent=11 // pred_check_branch
          %404 = sbr.rel (%p402) target = $region16
        $region15: #{tpu_custom_call.1} parent=11 // pred_region
          %s406 = ssub.s32 128, 128
          %407 = vsyncadd [#allocation8], %s406
          %s408 = smul.addr %s41, 128
          %s409 = scalar_lea.hbm %s1, %s408
          %s411 = sshll.u32 [#allocation7], 4
          %s412 = int_to_ptr.vmem [resolvable:$true] %s411
          %414 = dma.hbm_to_vmem [thread:$0]  %s409, 128, %s412, [#allocation8]
        $region16: #{tpu_custom_call.1} parent=11 // pred_fallthru
          _
        // Predicated region
        $region17: #{tpu_custom_call.1} parent=11 // pred_check
          %p415 = pneg %p153
        $region18: #{tpu_custom_call.1} parent=11 // pred_check_branch
          %417 = sbr.rel (%p415) target = $region20
        $region19: #{tpu_custom_call.1} parent=11 // pred_region
          %s419 = ssub.s32 112, 112
          %420 = vsyncadd [#allocation8], %s419
          %s422 = sshll.u32 [#allocation10], 4
          %s423 = int_to_ptr.vmem [resolvable:$true] %s422
          %425 = dma.hbm_to_vmem [thread:$0]  %s3, 112, %s423, [#allocation8]
        $region20: #{tpu_custom_call.1} parent=11 // pred_fallthru
          _
        // Predicated region
        $region21: #{tpu_custom_call.1} parent=11 // pred_check
          %p426 = pneg %p174
        $region22: #{tpu_custom_call.1} parent=11 // pred_check_branch
          %428 = sbr.rel (%p426) target = $region24
        $region23: #{tpu_custom_call.1} parent=11 // pred_region
          %s430 = ssub.s32 50176, 50176
          %431 = vsyncadd [#allocation12], %s430
          %s432 = sshll.u32 [#allocation11], 4
          %s433 = int_to_ptr.vmem [resolvable:$true] %s432
          %438 = dma.hbm_to_vmem [thread:$0]  %s4, 50176, %s433, [#allocation12], 448, 448, 28
        $region24: #{tpu_custom_call.1} parent=11 // pred_fallthru
          _
        // Predicated region
        $region25: #{tpu_custom_call.1} parent=11 // pred_check
          %p439 = pneg %p195
        $region26: #{tpu_custom_call.1} parent=11 // pred_check_branch
          %441 = sbr.rel (%p439) target = $region28
        $region27: #{tpu_custom_call.1} parent=11 // pred_region
          %s443 = ssub.s32 112, 112
          %444 = vsyncadd [#allocation12], %s443
          %s446 = sshll.u32 [#allocation13], 4
          %s447 = int_to_ptr.vmem [resolvable:$true] %s446
          %449 = dma.hbm_to_vmem [thread:$0]  %s5, 112, %s447, [#allocation12]
        $region28: #{tpu_custom_call.1} parent=11 // pred_fallthru
          _
        // Predicated region
        $region29: #{tpu_custom_call.1} parent=11 // pred_check
          %p450 = pneg %p216
        $region30: #{tpu_custom_call.1} parent=11 // pred_check_branch
          %452 = sbr.rel (%p450) target = $region32
        $region31: #{tpu_custom_call.1} parent=11 // pred_region
          %s454 = ssub.s32 14336, 14336
          %455 = vsyncadd [#allocation15], %s454
          %s456 = sshll.u32 [#allocation14], 4
          %s457 = int_to_ptr.vmem [resolvable:$true] %s456
          %462 = dma.hbm_to_vmem [thread:$0]  %s6, 14336, %s457, [#allocation15], 128, 128, 8
        $region32: #{tpu_custom_call.1} parent=11 // pred_fallthru
          _
        // Predicated region
        $region33: #{tpu_custom_call.1} parent=11 // pred_check
          %p463 = pneg %p237
        $region34: #{tpu_custom_call.1} parent=11 // pred_check_branch
          %465 = sbr.rel (%p463) target = $region36
        $region35: #{tpu_custom_call.1} parent=11 // pred_region
          %s467 = ssub.s32 32, 32
          %468 = vsyncadd [#allocation15], %s467
          %s470 = sshll.u32 [#allocation16], 4
          %s471 = int_to_ptr.vmem [resolvable:$true] %s470
          %473 = dma.hbm_to_vmem [thread:$0]  %s7, 32, %s471, [#allocation15]
        $region36: #{tpu_custom_call.1} parent=11 // pred_fallthru
          _
      $region12: #{tpu_custom_call.1} parent=5 // pred_fallthru
        _
      %p474 = scmp.lt.s32.totalorder %s32, 2
      // Predicated region
      $region37: #{tpu_custom_call.1} parent=5 // pred_check
        %p475 = pneg %p474
      $region38: #{tpu_custom_call.1} parent=5 // pred_check_branch
        %477 = sbr.rel (%p475) target = $region40
      $region39: #{tpu_custom_call.1} parent=5 // pred_region
        // Predicated region
        $region41: #{tpu_custom_call.1} parent=39 // pred_check
          %p478 = pneg %p70
        $region42: #{tpu_custom_call.1} parent=39 // pred_check_branch
          %480 = sbr.rel (%p478) target = $region44
        $region43: #{tpu_custom_call.1} parent=39 // pred_region
          %s481 = sand.u32 %s32, 1
          %s482 = scalar_lea.sflag [#allocation5], %s481
          %s483 = sand.u32 %s60, 1
          %s484 = smul.addr %s483, 4
          %s485 = scalar_lea.vmem [#allocation4], %s484
          %p486 = scmp.lt.s32.totalorder %s40, 0
          %s487 = scalar_select %p486, %s40, 0
          %s489 = ssub.s32 64, 64
          %490 = vsyncadd %s482, %s489
          %s491 = sadd.s32 %s487, %s39
          %s492 = smul.addr %s491, 64
          %s493 = scalar_lea.hbm %s0, %s492
          %s495 = sshll.u32 %s485, 4
          %s496 = int_to_ptr.vmem [resolvable:$true] %s495
          %498 = dma.hbm_to_vmem [thread:$0]  %s493, 64, %s496, %s482
        $region44: #{tpu_custom_call.1} parent=39 // pred_fallthru
          _
        // Predicated region
        $region45: #{tpu_custom_call.1} parent=39 // pred_check
          %p499 = pneg %p126
        $region46: #{tpu_custom_call.1} parent=39 // pred_check_branch
          %501 = sbr.rel (%p499) target = $region48
        $region47: #{tpu_custom_call.1} parent=39 // pred_region
          %s502 = sand.u32 %s32, 1
          %s503 = scalar_lea.sflag [#allocation5], %s502
          %s504 = sand.u32 %s116, 1
          %s505 = smul.addr %s504, 448
          %s506 = scalar_lea.vmem [#allocation9], %s505
          %p507 = scmp.lt.s32.totalorder %s40, 0
          %s508 = scalar_select %p507, %s40, 0
          %s509 = smul.u32 16, %s508
          %s511 = ssub.s32 7168, 7168
          %512 = vsyncadd %s503, %s511
          %s513 = smul.addr %s509, 7
          %s514 = smul.addr %s513, 64
          %s515 = scalar_lea.hbm %s2, %s514
          %s516 = sshll.u32 %s506, 4
          %s517 = int_to_ptr.vmem [resolvable:$true] %s516
          %522 = dma.hbm_to_vmem [thread:$0]  %s515, 7168, %s517, %s503, 448, 448, 28
        $region48: #{tpu_custom_call.1} parent=39 // pred_fallthru
          _
        // Predicated region
        $region49: #{tpu_custom_call.1} parent=39 // pred_check
          %p523 = pneg %p263
        $region50: #{tpu_custom_call.1} parent=39 // pred_check_branch
          %525 = sbr.rel (%p523) target = $region52
        $region51: #{tpu_custom_call.1} parent=39 // pred_region
          %s526 = sand.u32 %s32, 1
          %s527 = scalar_lea.sflag [#allocation18], %s526
          %s528 = sand.u32 %s253, 1
          %s529 = smul.addr %s528, 64
          %s530 = scalar_lea.vmem [#allocation17], %s529
          %s531 = ssub.s32 %s40, 1
          %p532 = scmp.gt.s32.totalorder %s531, 0
          %s533 = scalar_select %p532, %s531, 0
          %s535 = ssub.s32 1024, 1024
          %536 = vsyncadd %s527, %s535
          %s537 = smul.addr %s533, 64
          %s538 = scalar_lea.hbm %s8, %s537
          %s539 = sshll.u32 %s530, 4
          %s540 = int_to_ptr.vmem [resolvable:$true] %s539
          %545 = dma.hbm_to_vmem [thread:$0]  %s538, 1024, %s540, %s527, 64, 64, 4
        $region52: #{tpu_custom_call.1} parent=39 // pred_fallthru
          _
        // Predicated region
        $region53: #{tpu_custom_call.1} parent=39 // pred_check
          %p546 = pneg %p295
        $region54: #{tpu_custom_call.1} parent=39 // pred_check_branch
          %548 = sbr.rel (%p546) target = $region56
        $region55: #{tpu_custom_call.1} parent=39 // pred_region
          %s549 = sand.u32 %s32, 1
          %s550 = scalar_lea.sflag [#allocation18], %s549
          %s551 = sand.u32 %s285, 1
          %s552 = scalar_lea.vmem [#allocation19], %s551
          %s553 = ssub.s32 %s40, 1
          %p554 = scmp.gt.s32.totalorder %s553, 0
          %s555 = scalar_select %p554, %s553, 0
          %s557 = ssub.s32 16, 16
          %558 = vsyncadd %s550, %s557
          %s559 = smul.addr %s555, 16
          %s560 = scalar_lea.hbm %s9, %s559
          %s562 = sshll.u32 %s552, 4
          %s563 = int_to_ptr.vmem [resolvable:$true] %s562
          %565 = dma.hbm_to_vmem [thread:$0]  %s560, 16, %s563, %s550
        $region56: #{tpu_custom_call.1} parent=39 // pred_fallthru
          _
      $region40: #{tpu_custom_call.1} parent=5 // pred_fallthru
        _
      %p566 = scmp.le.s32.totalorder 1, %s32
      %p567 = scmp.lt.s32.totalorder %s32, 3
      %p568 = pnand %p566, %p567
      %p569 = pneg %p568
      // Predicated region
      $region57: #{tpu_custom_call.1} parent=5 // pred_check
        _
      $region58: #{tpu_custom_call.1} parent=5 // pred_check_branch
        %571 = sbr.rel (%p568) target = $region60
      $region59: #{tpu_custom_call.1} parent=5 // pred_region
        %s572 = ssub.s32 %s32, 1
        %s573 = sand.u32 %s37, 1
        %s574 = scalar_lea.sflag [#allocation5], %s573
        %s575 = sand.u32 %s63, 1
        %s576 = smul.addr %s575, 4
        %s577 = scalar_lea.vmem [#allocation4], %s576
        // Predicated region
        $region61: #{tpu_custom_call.1} parent=59 // pred_check
          %p578 = pneg %p76
        $region62: #{tpu_custom_call.1} parent=59 // pred_check_branch
          %580 = sbr.rel (%p578) target = $region64
        $region63: #{tpu_custom_call.1} parent=59 // pred_region
          %581 = dma.done %s574, 64
        $region64: #{tpu_custom_call.1} parent=59 // pred_fallthru
          _
        // Predicated region
        $region65: #{tpu_custom_call.1} parent=59 // pred_check
          %p582 = pneg %p102
        $region66: #{tpu_custom_call.1} parent=59 // pred_check_branch
          %584 = sbr.rel (%p582) target = $region68
        $region67: #{tpu_custom_call.1} parent=59 // pred_region
          %585 = dma.done [#allocation8], 128
        $region68: #{tpu_custom_call.1} parent=59 // pred_fallthru
          _
        %s586 = sand.u32 %s37, 1
        %s587 = scalar_lea.sflag [#allocation5], %s586
        %s588 = sand.u32 %s119, 1
        %s589 = smul.addr %s588, 448
        %s590 = scalar_lea.vmem [#allocation9], %s589
        // Predicated region
        $region69: #{tpu_custom_call.1} parent=59 // pred_check
          %p591 = pneg %p132
        $region70: #{tpu_custom_call.1} parent=59 // pred_check_branch
          %593 = sbr.rel (%p591) target = $region72
        $region71: #{tpu_custom_call.1} parent=59 // pred_region
          %594 = dma.done %s587, 7168
        $region72: #{tpu_custom_call.1} parent=59 // pred_fallthru
          _
        // Predicated region
        $region73: #{tpu_custom_call.1} parent=59 // pred_check
          %p595 = pneg %p153
        $region74: #{tpu_custom_call.1} parent=59 // pred_check_branch
          %597 = sbr.rel (%p595) target = $region76
        $region75: #{tpu_custom_call.1} parent=59 // pred_region
          %598 = dma.done [#allocation8], 112
        $region76: #{tpu_custom_call.1} parent=59 // pred_fallthru
          _
        // Predicated region
        $region77: #{tpu_custom_call.1} parent=59 // pred_check
          %p599 = pneg %p174
        $region78: #{tpu_custom_call.1} parent=59 // pred_check_branch
          %601 = sbr.rel (%p599) target = $region80
        $region79: #{tpu_custom_call.1} parent=59 // pred_region
          %602 = dma.done [#allocation12], 50176
        $region80: #{tpu_custom_call.1} parent=59 // pred_fallthru
          _
        // Predicated region
        $region81: #{tpu_custom_call.1} parent=59 // pred_check
          %p603 = pneg %p195
        $region82: #{tpu_custom_call.1} parent=59 // pred_check_branch
          %605 = sbr.rel (%p603) target = $region84
        $region83: #{tpu_custom_call.1} parent=59 // pred_region
          %606 = dma.done [#allocation12], 112
        $region84: #{tpu_custom_call.1} parent=59 // pred_fallthru
          _
        // Predicated region
        $region85: #{tpu_custom_call.1} parent=59 // pred_check
          %p607 = pneg %p216
        $region86: #{tpu_custom_call.1} parent=59 // pred_check_branch
          %609 = sbr.rel (%p607) target = $region88
        $region87: #{tpu_custom_call.1} parent=59 // pred_region
          %610 = dma.done [#allocation15], 14336
        $region88: #{tpu_custom_call.1} parent=59 // pred_fallthru
          _
        // Predicated region
        $region89: #{tpu_custom_call.1} parent=59 // pred_check
          %p611 = pneg %p237
        $region90: #{tpu_custom_call.1} parent=59 // pred_check_branch
          %613 = sbr.rel (%p611) target = $region92
        $region91: #{tpu_custom_call.1} parent=59 // pred_region
          %614 = dma.done [#allocation15], 32
        $region92: #{tpu_custom_call.1} parent=59 // pred_fallthru
          _
        %s615 = sand.u32 %s37, 1
        %s616 = scalar_lea.sflag [#allocation18], %s615
        %s617 = sand.u32 %s256, 1
        %s618 = smul.addr %s617, 64
        %s619 = scalar_lea.vmem [#allocation17], %s618
        // Predicated region
        $region93: #{tpu_custom_call.1} parent=59 // pred_check
          %p620 = pneg %p269
        $region94: #{tpu_custom_call.1} parent=59 // pred_check_branch
          %622 = sbr.rel (%p620) target = $region96
        $region95: #{tpu_custom_call.1} parent=59 // pred_region
          %623 = dma.done %s616, 1024
        $region96: #{tpu_custom_call.1} parent=59 // pred_fallthru
          _
        %s624 = sand.u32 %s37, 1
        %s625 = scalar_lea.sflag [#allocation18], %s624
        %s626 = sand.u32 %s288, 1
        %s627 = scalar_lea.vmem [#allocation19], %s626
        // Predicated region
        $region97: #{tpu_custom_call.1} parent=59 // pred_check
          %p628 = pneg %p301
        $region98: #{tpu_custom_call.1} parent=59 // pred_check_branch
          %630 = sbr.rel (%p628) target = $region100
        $region99: #{tpu_custom_call.1} parent=59 // pred_region
          %631 = dma.done %s625, 16
        $region100: #{tpu_custom_call.1} parent=59 // pred_fallthru
          _
        %s632 = sand.u32 %s37, 1
        %s633 = scalar_lea.sflag [#allocation5], %s632
        %s634 = sand.u32 %s63, 1
        %s635 = smul.addr %s634, 4
        %s636 = scalar_lea.vmem [#allocation4], %s635
        %p637 = pneg %p76
        %p638 = pneg %p73
        %p639 = pneg %p102
        %p640 = pneg %p99
        %s641 = sand.u32 %s37, 1
        %s642 = scalar_lea.sflag [#allocation5], %s641
        %s643 = sand.u32 %s119, 1
        %s644 = smul.addr %s643, 448
        %s645 = scalar_lea.vmem [#allocation9], %s644
        %p646 = pneg %p132
        %p647 = pneg %p129
        %p648 = pneg %p153
        %p649 = pneg %p150
        %p650 = pneg %p174
        %p651 = pneg %p171
        %p652 = pneg %p195
        %p653 = pneg %p192
        %p654 = pneg %p216
        %p655 = pneg %p213
        %p656 = pneg %p237
        %p657 = pneg %p234
        %s658 = sand.u32 %s37, 1
        %s659 = scalar_lea.sflag [#allocation18], %s658
        %s660 = sand.u32 %s256, 1
        %s661 = smul.addr %s660, 64
        %s662 = scalar_lea.vmem [#allocation17], %s661
        %p663 = pneg %p269
        %p664 = pneg %p266
        %s665 = sand.u32 %s37, 1
        %s666 = scalar_lea.sflag [#allocation18], %s665
        %s667 = sand.u32 %s288, 1
        %s668 = scalar_lea.vmem [#allocation19], %s667
        %p669 = pneg %p301
        %p670 = pneg %p298
        %p671 = pneg %p335
        %p672 = pneg %p332
        %s673 = sand.u32 %s322, 1
        %s674 = scalar_lea.sflag [#allocation6], %s673
        %s675 = sand.u32 %s322, 1
        %s676 = smul.addr %s675, 8
        %s677 = scalar_lea.vmem [#allocation20], %s676
        %p678 = pneg %p361
        %p679 = pneg %p358
        %p680 = pneg %p387
        %p681 = pneg %p384
        %p682 = scmp.lt.s32.totalorder %s42, 0
        %s683 = scalar_select %p682, %s42, 0
        %p684 = scmp.lt.s32.totalorder %s42, 0
        %s685 = scalar_select %p684, %s42, 0
        %s686 = smul.u32 16, %s685
        %s687 = ssub.s32 %s42, 1
        %p688 = scmp.gt.s32.totalorder %s687, 0
        %s689 = scalar_select %p688, %s687, 0
        %s690 = ssub.s32 %s42, 1
        %p691 = scmp.gt.s32.totalorder %s690, 0
        %s692 = scalar_select %p691, %s690, 0
        %s693 = ssub.s32 %s42, 1
        %p694 = scmp.gt.s32.totalorder %s693, 0
        %s695 = scalar_select %p694, %s693, 0
        %p697 = scmp.eq.s32.totalorder %s42, 0
        // Predicated region
        $region101: #{tpu_custom_call.1} parent=59 // pred_check
          %p698 = pneg %p697
        $region102: #{tpu_custom_call.1} parent=59 // pred_check_branch
          %700 = sbr.rel (%p698) target = $region104
        $region103: #{tpu_custom_call.1} parent=59 // pred_region
          %701 = vst [vmem:[#allocation2] sm:$0xff] 0.0
          %702 = vst [vmem:[#allocation2 + $0x8] sm:$0xff] 0.0
          %703 = vst [vmem:[#allocation2 + $0x10] sm:$0xff] 0.0
          %704 = vst [vmem:[#allocation2 + $0x18] sm:$0xff] 0.0
          %705 = vst [vmem:[#allocation2 + $0x20] sm:$0xff] 0.0
          %706 = vst [vmem:[#allocation2 + $0x28] sm:$0xff] 0.0
          %707 = vst [vmem:[#allocation2 + $0x30] sm:$0xff] 0.0
        $region104: #{tpu_custom_call.1} parent=59 // pred_fallthru
          _
        %p708 = scmp.lt.s32.totalorder %s42, 1
        // Predicated region
        $region105: #{tpu_custom_call.1} parent=59 // pred_check
          %p709 = pneg %p708
        $region106: #{tpu_custom_call.1} parent=59 // pred_check_branch
          %711 = sbr.rel (%p709) target = $region108
        $region107: #{tpu_custom_call.1} parent=59 // pred_region
          %v712 = vld [vmem:[#allocation2] sm:$0xff]
          %v713 = vld [vmem:[#allocation2 + $0x8] sm:$0xff]
          %v714 = vld [vmem:[#allocation2 + $0x10] sm:$0xff]
          %v715 = vld [vmem:[#allocation2 + $0x18] sm:$0xff]
          %v716 = vld [vmem:[#allocation2 + $0x20] sm:$0xff]
          %v717 = vld [vmem:[#allocation2 + $0x28] sm:$0xff]
          %v718 = vld [vmem:[#allocation2 + $0x30] sm:$0xff]
          %v719 = vld [vmem:[%s577] sm:$0xf]
          %v720 = vld [vmem:[%s590] sm:$0xff]
          %v721 = vld [vmem:[%s590 + $0x8] sm:$0xff]
          %v722 = vld [vmem:[%s590 + $0x10] sm:$0xff]
          %v723 = vld [vmem:[%s590 + $0x18] sm:$0xf]
          %v724 = vld [vmem:[%s590 + $0x1c] sm:$0xff]
          %v725 = vld [vmem:[%s590 + $0x24] sm:$0xff]
          %v726 = vld [vmem:[%s590 + $0x2c] sm:$0xff]
          %v727 = vld [vmem:[%s590 + $0x34] sm:$0xf]
          %v728 = vld [vmem:[%s590 + $0x38] sm:$0xff]
          %v729 = vld [vmem:[%s590 + $0x40] sm:$0xff]
          %v730 = vld [vmem:[%s590 + $0x48] sm:$0xff]
          %v731 = vld [vmem:[%s590 + $0x50] sm:$0xf]
          %v732 = vld [vmem:[%s590 + $0x54] sm:$0xff]
          %v733 = vld [vmem:[%s590 + $0x5c] sm:$0xff]
          %v734 = vld [vmem:[%s590 + $0x64] sm:$0xff]
          %v735 = vld [vmem:[%s590 + $0x6c] sm:$0xf]
          %v736 = vld [vmem:[%s590 + $0x70] sm:$0xff]
          %v737 = vld [vmem:[%s590 + $0x78] sm:$0xff]
          %v738 = vld [vmem:[%s590 + $0x80] sm:$0xff]
          %v739 = vld [vmem:[%s590 + $0x88] sm:$0xf]
          %v740 = vld [vmem:[%s590 + $0x8c] sm:$0xff]
          %v741 = vld [vmem:[%s590 + $0x94] sm:$0xff]
          %v742 = vld [vmem:[%s590 + $0x9c] sm:$0xff]
          %v743 = vld [vmem:[%s590 + $0xa4] sm:$0xf]
          %v744 = vld [vmem:[%s590 + $0xa8] sm:$0xff]
          %v745 = vld [vmem:[%s590 + $0xb0] sm:$0xff]
          %v746 = vld [vmem:[%s590 + $0xb8] sm:$0xff]
          %v747 = vld [vmem:[%s590 + $0xc0] sm:$0xf]
          %v748 = vld [vmem:[%s590 + $0xc4] sm:$0xff]
          %v749 = vld [vmem:[%s590 + $0xcc] sm:$0xff]
          %v750 = vld [vmem:[%s590 + $0xd4] sm:$0xff]
          %v751 = vld [vmem:[%s590 + $0xdc] sm:$0xf]
          %v752 = vld [vmem:[%s590 + $0xe0] sm:$0xff]
          %v753 = vld [vmem:[%s590 + $0xe8] sm:$0xff]
          %v754 = vld [vmem:[%s590 + $0xf0] sm:$0xff]
          %v755 = vld [vmem:[%s590 + $0xf8] sm:$0xf]
          %v756 = vld [vmem:[%s590 + $0xfc] sm:$0xff]
          %v757 = vld [vmem:[%s590 + $0x104] sm:$0xff]
          %v758 = vld [vmem:[%s590 + $0x10c] sm:$0xff]
          %v759 = vld [vmem:[%s590 + $0x114] sm:$0xf]
          %v760 = vld [vmem:[%s590 + $0x118] sm:$0xff]
          %v761 = vld [vmem:[%s590 + $0x120] sm:$0xff]
          %v762 = vld [vmem:[%s590 + $0x128] sm:$0xff]
          %v763 = vld [vmem:[%s590 + $0x130] sm:$0xf]
          %v764 = vld [vmem:[%s590 + $0x134] sm:$0xff]
          %v765 = vld [vmem:[%s590 + $0x13c] sm:$0xff]
          %v766 = vld [vmem:[%s590 + $0x144] sm:$0xff]
          %v767 = vld [vmem:[%s590 + $0x14c] sm:$0xf]
          %v768 = vld [vmem:[%s590 + $0x150] sm:$0xff]
          %v769 = vld [vmem:[%s590 + $0x158] sm:$0xff]
          %v770 = vld [vmem:[%s590 + $0x160] sm:$0xff]
          %v771 = vld [vmem:[%s590 + $0x168] sm:$0xf]
          %v772 = vld [vmem:[%s590 + $0x16c] sm:$0xff]
          %v773 = vld [vmem:[%s590 + $0x174] sm:$0xff]
          %v774 = vld [vmem:[%s590 + $0x17c] sm:$0xff]
          %v775 = vld [vmem:[%s590 + $0x184] sm:$0xf]
          %v776 = vld [vmem:[%s590 + $0x188] sm:$0xff]
          %v777 = vld [vmem:[%s590 + $0x190] sm:$0xff]
          %v778 = vld [vmem:[%s590 + $0x198] sm:$0xff]
          %v779 = vld [vmem:[%s590 + $0x1a0] sm:$0xf]
          %v780 = vld [vmem:[%s590 + $0x1a4] sm:$0xff]
          %v781 = vld [vmem:[%s590 + $0x1ac] sm:$0xff]
          %v782 = vld [vmem:[%s590 + $0x1b4] sm:$0xff]
          %v783 = vld [vmem:[%s590 + $0x1bc] sm:$0xf]
          %v848 = vunpack.c.l.b16 %v720
          %v849 = vunpack.c.h.b16 %v720
          %v850 = vunpack.c.l.b16 %v721
          %v851 = vunpack.c.h.b16 %v721
          %v852 = vunpack.c.l.b16 %v722
          %v853 = vunpack.c.h.b16 %v722
          %v854 = vunpack.c.l.b16 %v723
          %v855 = vunpack.c.l.b16 %v724
          %v856 = vunpack.c.h.b16 %v724
          %v857 = vunpack.c.l.b16 %v725
          %v858 = vunpack.c.h.b16 %v725
          %v859 = vunpack.c.l.b16 %v726
          %v860 = vunpack.c.h.b16 %v726
          %v861 = vunpack.c.l.b16 %v727
          %v862 = vunpack.c.l.b16 %v728
          %v863 = vunpack.c.h.b16 %v728
          %v864 = vunpack.c.l.b16 %v729
          %v865 = vunpack.c.h.b16 %v729
          %v866 = vunpack.c.l.b16 %v730
          %v867 = vunpack.c.h.b16 %v730
          %v868 = vunpack.c.l.b16 %v731
          %v869 = vunpack.c.l.b16 %v732
          %v870 = vunpack.c.h.b16 %v732
          %v871 = vunpack.c.l.b16 %v733
          %v872 = vunpack.c.h.b16 %v733
          %v873 = vunpack.c.l.b16 %v734
          %v874 = vunpack.c.h.b16 %v734
          %v875 = vunpack.c.l.b16 %v735
          %v876 = vunpack.c.l.b16 %v736
          %v877 = vunpack.c.h.b16 %v736
          %v878 = vunpack.c.l.b16 %v737
          %v879 = vunpack.c.h.b16 %v737
          %v880 = vunpack.c.l.b16 %v738
          %v881 = vunpack.c.h.b16 %v738
          %v882 = vunpack.c.l.b16 %v739
          %v883 = vunpack.c.l.b16 %v740
          %v884 = vunpack.c.h.b16 %v740
          %v885 = vunpack.c.l.b16 %v741
          %v886 = vunpack.c.h.b16 %v741
          %v887 = vunpack.c.l.b16 %v742
          %v888 = vunpack.c.h.b16 %v742
          %v889 = vunpack.c.l.b16 %v743
          %v890 = vunpack.c.l.b16 %v744
          %v891 = vunpack.c.h.b16 %v744
          %v892 = vunpack.c.l.b16 %v745
          %v893 = vunpack.c.h.b16 %v745
          %v894 = vunpack.c.l.b16 %v746
          %v895 = vunpack.c.h.b16 %v746
          %v896 = vunpack.c.l.b16 %v747
          %v897 = vunpack.c.l.b16 %v748
          %v898 = vunpack.c.h.b16 %v748
          %v899 = vunpack.c.l.b16 %v749
          %v900 = vunpack.c.h.b16 %v749
          %v901 = vunpack.c.l.b16 %v750
          %v902 = vunpack.c.h.b16 %v750
          %v903 = vunpack.c.l.b16 %v751
          %v904 = vunpack.c.l.b16 %v752
          %v905 = vunpack.c.h.b16 %v752
          %v906 = vunpack.c.l.b16 %v753
          %v907 = vunpack.c.h.b16 %v753
          %v908 = vunpack.c.l.b16 %v754
          %v909 = vunpack.c.h.b16 %v754
          %v910 = vunpack.c.l.b16 %v755
          %v911 = vunpack.c.l.b16 %v756
          %v912 = vunpack.c.h.b16 %v756
          %v913 = vunpack.c.l.b16 %v757
          %v914 = vunpack.c.h.b16 %v757
          %v915 = vunpack.c.l.b16 %v758
          %v916 = vunpack.c.h.b16 %v758
          %v917 = vunpack.c.l.b16 %v759
          %v918 = vunpack.c.l.b16 %v760
          %v919 = vunpack.c.h.b16 %v760
          %v920 = vunpack.c.l.b16 %v761
          %v921 = vunpack.c.h.b16 %v761
          %v922 = vunpack.c.l.b16 %v762
          %v923 = vunpack.c.h.b16 %v762
          %v924 = vunpack.c.l.b16 %v763
          %v925 = vunpack.c.l.b16 %v764
          %v926 = vunpack.c.h.b16 %v764
          %v927 = vunpack.c.l.b16 %v765
          %v928 = vunpack.c.h.b16 %v765
          %v929 = vunpack.c.l.b16 %v766
          %v930 = vunpack.c.h.b16 %v766
          %v931 = vunpack.c.l.b16 %v767
          %v932 = vunpack.c.l.b16 %v768
          %v933 = vunpack.c.h.b16 %v768
          %v934 = vunpack.c.l.b16 %v769
          %v935 = vunpack.c.h.b16 %v769
          %v936 = vunpack.c.l.b16 %v770
          %v937 = vunpack.c.h.b16 %v770
          %v938 = vunpack.c.l.b16 %v771
          %v939 = vunpack.c.l.b16 %v772
          %v940 = vunpack.c.h.b16 %v772
          %v941 = vunpack.c.l.b16 %v773
          %v942 = vunpack.c.h.b16 %v773
          %v943 = vunpack.c.l.b16 %v774
          %v944 = vunpack.c.h.b16 %v774
          %v945 = vunpack.c.l.b16 %v775
          %v946 = vunpack.c.l.b16 %v776
          %v947 = vunpack.c.h.b16 %v776
          %v948 = vunpack.c.l.b16 %v777
          %v949 = vunpack.c.h.b16 %v777
          %v950 = vunpack.c.l.b16 %v778
          %v951 = vunpack.c.h.b16 %v778
          %v952 = vunpack.c.l.b16 %v779
          %v953 = vunpack.c.l.b16 %v780
          %v954 = vunpack.c.h.b16 %v780
          %v955 = vunpack.c.l.b16 %v781
          %v956 = vunpack.c.h.b16 %v781
          %v957 = vunpack.c.l.b16 %v782
          %v958 = vunpack.c.h.b16 %v782
          %v959 = vunpack.c.l.b16 %v783
          %v960 = vpack.c.b16 %v855, %v848
          %v961 = vpack.c.b16 %v856, %v849
          %v962 = vpack.c.b16 %v857, %v850
          %v963 = vpack.c.b16 %v858, %v851
          %v964 = vpack.c.b16 %v859, %v852
          %v965 = vpack.c.b16 %v860, %v853
          %v966 = vpack.c.b16 %v861, %v854
          %v967 = vpack.c.b16 %v869, %v862
          %v968 = vpack.c.b16 %v870, %v863
          %v969 = vpack.c.b16 %v871, %v864
          %v970 = vpack.c.b16 %v872, %v865
          %v971 = vpack.c.b16 %v873, %v866
          %v972 = vpack.c.b16 %v874, %v867
          %v973 = vpack.c.b16 %v875, %v868
          %v974 = vpack.c.b16 %v883, %v876
          %v975 = vpack.c.b16 %v884, %v877
          %v976 = vpack.c.b16 %v885, %v878
          %v977 = vpack.c.b16 %v886, %v879
          %v978 = vpack.c.b16 %v887, %v880
          %v979 = vpack.c.b16 %v888, %v881
          %v980 = vpack.c.b16 %v889, %v882
          %v981 = vpack.c.b16 %v897, %v890
          %v982 = vpack.c.b16 %v898, %v891
          %v983 = vpack.c.b16 %v899, %v892
          %v984 = vpack.c.b16 %v900, %v893
          %v985 = vpack.c.b16 %v901, %v894
          %v986 = vpack.c.b16 %v902, %v895
          %v987 = vpack.c.b16 %v903, %v896
          %v988 = vpack.c.b16 %v911, %v904
          %v989 = vpack.c.b16 %v912, %v905
          %v990 = vpack.c.b16 %v913, %v906
          %v991 = vpack.c.b16 %v914, %v907
          %v992 = vpack.c.b16 %v915, %v908
          %v993 = vpack.c.b16 %v916, %v909
          %v994 = vpack.c.b16 %v917, %v910
          %v995 = vpack.c.b16 %v925, %v918
          %v996 = vpack.c.b16 %v926, %v919
          %v997 = vpack.c.b16 %v927, %v920
          %v998 = vpack.c.b16 %v928, %v921
          %v999 = vpack.c.b16 %v929, %v922
          %v1000 = vpack.c.b16 %v930, %v923
          %v1001 = vpack.c.b16 %v931, %v924
          %v1002 = vpack.c.b16 %v939, %v932
          %v1003 = vpack.c.b16 %v940, %v933
          %v1004 = vpack.c.b16 %v941, %v934
          %v1005 = vpack.c.b16 %v942, %v935
          %v1006 = vpack.c.b16 %v943, %v936
          %v1007 = vpack.c.b16 %v944, %v937
          %v1008 = vpack.c.b16 %v945, %v938
          %v1009 = vpack.c.b16 %v953, %v946
          %v1010 = vpack.c.b16 %v954, %v947
          %v1011 = vpack.c.b16 %v955, %v948
          %v1012 = vpack.c.b16 %v956, %v949
          %v1013 = vpack.c.b16 %v957, %v950
          %v1014 = vpack.c.b16 %v958, %v951
          %v1015 = vpack.c.b16 %v959, %v952
          %1072 = vmatprep.subr.bf16.mxu0 %v961
          %1073 = vmatpush1.bf16.msra.mxu0 %v960
          %1074 = vmatprep.subr.bf16.mxu0 %v968
          %1075 = vmatpush1.bf16.msra.mxu0 %v967
          %1076 = vmatprep.subr.bf16.mxu0 %v975
          %1077 = vmatpush1.bf16.msra.mxu0 %v974
          %1078 = vmatprep.subr.bf16.mxu0 %v982
          %1079 = vmatpush1.bf16.msra.mxu0 %v981
          %1080 = vmatprep.subr.bf16.mxu0 %v989
          %1081 = vmatpush1.bf16.msra.mxu0 %v988
          %1082 = vmatprep.subr.bf16.mxu0 %v996
          %1083 = vmatpush1.bf16.msra.mxu0 %v995
          %1084 = vmatprep.subr.bf16.mxu0 %v1003
          %1085 = vmatpush1.bf16.msra.mxu0 %v1002
          %1086 = vmatprep.subr.bf16.mxu0 %v1010
          %1087 = vmatpush1.bf16.msra.mxu0 %v1009
          %1088 = vmatprep.subr.bf16.mxu0 0
          %1089 = vmatpush1.bf16.msra.mxu0 0
          %1090 = vmatprep.subr.bf16.mxu0 0
          %1091 = vmatpush1.bf16.msra.mxu0 0
          %1092 = vmatprep.subr.bf16.mxu0 0
          %1093 = vmatpush1.bf16.msra.mxu0 0
          %1094 = vmatprep.subr.bf16.mxu0 0
          %1095 = vmatpush1.bf16.msra.mxu0 0
          %1096 = vmatprep.subr.bf16.mxu0 0
          %1097 = vmatpush1.bf16.msra.mxu0 0
          %1098 = vmatprep.subr.bf16.mxu0 0
          %1099 = vmatpush1.bf16.msra.mxu0 0
          %1100 = vmatprep.subr.bf16.mxu0 0
          %1101 = vmatpush1.bf16.msra.mxu0 0
          %1102 = vmatprep.subr.bf16.mxu0 0
          %1103 = vmatpush1.bf16.msra.mxu0 0
          %1104 = vmatprep.mubr.bf16.mxu0 0
          %1105 = vmatmul.mubr.bf16.gmra.mrb[0].mxu0 %v719
          %v1106 = vpop.f32.mrb[0].mxu0
          %v1107 = vadd.f32 0.0, %v1106
          %v1108 = vpop.f32.mrb[0].mxu0
          %v1109 = vadd.f32 0.0, %v1108
          %v1110 = vpop.f32.mrb[0].mxu0
          %v1111 = vpop.f32.mrb[0].mxu0
          %1112 = vdwg.mxu0
          %1113 = vmatprep.subr.bf16.mxu0 %v963
          %1114 = vmatpush1.bf16.msra.mxu0 %v962
          %1115 = vmatprep.subr.bf16.mxu0 %v970
          %1116 = vmatpush1.bf16.msra.mxu0 %v969
          %1117 = vmatprep.subr.bf16.mxu0 %v977
          %1118 = vmatpush1.bf16.msra.mxu0 %v976
          %1119 = vmatprep.subr.bf16.mxu0 %v984
          %1120 = vmatpush1.bf16.msra.mxu0 %v983
          %1121 = vmatprep.subr.bf16.mxu0 %v991
          %1122 = vmatpush1.bf16.msra.mxu0 %v990
          %1123 = vmatprep.subr.bf16.mxu0 %v998
          %1124 = vmatpush1.bf16.msra.mxu0 %v997
          %1125 = vmatprep.subr.bf16.mxu0 %v1005
          %1126 = vmatpush1.bf16.msra.mxu0 %v1004
          %1127 = vmatprep.subr.bf16.mxu0 %v1012
          %1128 = vmatpush1.bf16.msra.mxu0 %v1011
          %1129 = vmatprep.subr.bf16.mxu0 0
          %1130 = vmatpush1.bf16.msra.mxu0 0
          %1131 = vmatprep.subr.bf16.mxu0 0
          %1132 = vmatpush1.bf16.msra.mxu0 0
          %1133 = vmatprep.subr.bf16.mxu0 0
          %1134 = vmatpush1.bf16.msra.mxu0 0
          %1135 = vmatprep.subr.bf16.mxu0 0
          %1136 = vmatpush1.bf16.msra.mxu0 0
          %1137 = vmatprep.subr.bf16.mxu0 0
          %1138 = vmatpush1.bf16.msra.mxu0 0
          %1139 = vmatprep.subr.bf16.mxu0 0
          %1140 = vmatpush1.bf16.msra.mxu0 0
          %1141 = vmatprep.subr.bf16.mxu0 0
          %1142 = vmatpush1.bf16.msra.mxu0 0
          %1143 = vmatprep.subr.bf16.mxu0 0
          %1144 = vmatpush1.bf16.msra.mxu0 0
          %1145 = vmatprep.mubr.bf16.mxu0 0
          %1146 = vmatmul.mubr.bf16.gmra.mrb[0].mxu0 %v719
          %v1147 = vpop.f32.mrb[0].mxu0
          %v1148 = vadd.f32 0.0, %v1147
          %v1149 = vpop.f32.mrb[0].mxu0
          %v1150 = vadd.f32 0.0, %v1149
          %v1151 = vpop.f32.mrb[0].mxu0
          %v1152 = vpop.f32.mrb[0].mxu0
          %1153 = vdwg.mxu0
          %1154 = vmatprep.subr.bf16.mxu0 %v965
          %1155 = vmatpush1.bf16.msra.mxu0 %v964
          %1156 = vmatprep.subr.bf16.mxu0 %v972
          %1157 = vmatpush1.bf16.msra.mxu0 %v971
          %1158 = vmatprep.subr.bf16.mxu0 %v979
          %1159 = vmatpush1.bf16.msra.mxu0 %v978
          %1160 = vmatprep.subr.bf16.mxu0 %v986
          %1161 = vmatpush1.bf16.msra.mxu0 %v985
          %1162 = vmatprep.subr.bf16.mxu0 %v993
          %1163 = vmatpush1.bf16.msra.mxu0 %v992
          %1164 = vmatprep.subr.bf16.mxu0 %v1000
          %1165 = vmatpush1.bf16.msra.mxu0 %v999
          %1166 = vmatprep.subr.bf16.mxu0 %v1007
          %1167 = vmatpush1.bf16.msra.mxu0 %v1006
          %1168 = vmatprep.subr.bf16.mxu0 %v1014
          %1169 = vmatpush1.bf16.msra.mxu0 %v1013
          %1170 = vmatprep.subr.bf16.mxu0 0
          %1171 = vmatpush1.bf16.msra.mxu0 0
          %1172 = vmatprep.subr.bf16.mxu0 0
          %1173 = vmatpush1.bf16.msra.mxu0 0
          %1174 = vmatprep.subr.bf16.mxu0 0
          %1175 = vmatpush1.bf16.msra.mxu0 0
          %1176 = vmatprep.subr.bf16.mxu0 0
          %1177 = vmatpush1.bf16.msra.mxu0 0
          %1178 = vmatprep.subr.bf16.mxu0 0
          %1179 = vmatpush1.bf16.msra.mxu0 0
          %1180 = vmatprep.subr.bf16.mxu0 0
          %1181 = vmatpush1.bf16.msra.mxu0 0
          %1182 = vmatprep.subr.bf16.mxu0 0
          %1183 = vmatpush1.bf16.msra.mxu0 0
          %1184 = vmatprep.subr.bf16.mxu0 0
          %1185 = vmatpush1.bf16.msra.mxu0 0
          %1186 = vmatprep.mubr.bf16.mxu0 0
          %1187 = vmatmul.mubr.bf16.gmra.mrb[0].mxu0 %v719
          %v1188 = vpop.f32.mrb[0].mxu0
          %v1189 = vadd.f32 0.0, %v1188
          %v1190 = vpop.f32.mrb[0].mxu0
          %v1191 = vadd.f32 0.0, %v1190
          %v1192 = vpop.f32.mrb[0].mxu0
          %v1193 = vpop.f32.mrb[0].mxu0
          %1194 = vdwg.mxu0
          %1195 = vmatprep.subr.bf16.mxu0 0
          %1196 = vmatpush1.bf16.msra.mxu0 %v966
          %1197 = vmatprep.subr.bf16.mxu0 0
          %1198 = vmatpush1.bf16.msra.mxu0 %v973
          %1199 = vmatprep.subr.bf16.mxu0 0
          %1200 = vmatpush1.bf16.msra.mxu0 %v980
          %1201 = vmatprep.subr.bf16.mxu0 0
          %1202 = vmatpush1.bf16.msra.mxu0 %v987
          %1203 = vmatprep.subr.bf16.mxu0 0
          %1204 = vmatpush1.bf16.msra.mxu0 %v994
          %1205 = vmatprep.subr.bf16.mxu0 0
          %1206 = vmatpush1.bf16.msra.mxu0 %v1001
          %1207 = vmatprep.subr.bf16.mxu0 0
          %1208 = vmatpush1.bf16.msra.mxu0 %v1008
          %1209 = vmatprep.subr.bf16.mxu0 0
          %1210 = vmatpush1.bf16.msra.mxu0 %v1015
          %1211 = vmatprep.subr.bf16.mxu0 0
          %1212 = vmatpush1.bf16.msra.mxu0 0
          %1213 = vmatprep.subr.bf16.mxu0 0
          %1214 = vmatpush1.bf16.msra.mxu0 0
          %1215 = vmatprep.subr.bf16.mxu0 0
          %1216 = vmatpush1.bf16.msra.mxu0 0
          %1217 = vmatprep.subr.bf16.mxu0 0
          %1218 = vmatpush1.bf16.msra.mxu0 0
          %1219 = vmatprep.subr.bf16.mxu0 0
          %1220 = vmatpush1.bf16.msra.mxu0 0
          %1221 = vmatprep.subr.bf16.mxu0 0
          %1222 = vmatpush1.bf16.msra.mxu0 0
          %1223 = vmatprep.subr.bf16.mxu0 0
          %1224 = vmatpush1.bf16.msra.mxu0 0
          %1225 = vmatprep.subr.bf16.mxu0 0
          %1226 = vmatpush1.bf16.msra.mxu0 0
          %1227 = vmatprep.mubr.bf16.mxu0 0
          %1228 = vmatmul.mubr.bf16.gmra.mrb[0].mxu0 %v719
          %v1229 = vpop.f32.mrb[0].mxu0
          %v1230 = vadd.f32 0.0, %v1229
          %v1231 = vpop.f32.mrb[0].mxu0
          %v1232 = vpop.f32.mrb[0].mxu0
          %v1233 = vpop.f32.mrb[0].mxu0
          %1234 = vdwg.mxu0
          %v1235 = vadd.f32 %v712, %v1107
          %v1236 = vadd.f32 %v713, %v1109
          %v1237 = vadd.f32 %v714, %v1148
          %v1238 = vadd.f32 %v715, %v1150
          %v1239 = vadd.f32 %v716, %v1189
          %v1240 = vadd.f32 %v717, %v1191
          %v1241 = vadd.f32 %v718, %v1230
          %1242 = vst [vmem:[#allocation2] sm:$0xff] %v1235
          %1243 = vst [vmem:[#allocation2 + $0x8] sm:$0xff] %v1236
          %1244 = vst [vmem:[#allocation2 + $0x10] sm:$0xff] %v1237
          %1245 = vst [vmem:[#allocation2 + $0x18] sm:$0xff] %v1238
          %1246 = vst [vmem:[#allocation2 + $0x20] sm:$0xff] %v1239
          %1247 = vst [vmem:[#allocation2 + $0x28] sm:$0xff] %v1240
          %1248 = vst [vmem:[#allocation2 + $0x30] sm:$0xff] %v1241
        $region108: #{tpu_custom_call.1} parent=59 // pred_fallthru
          _
        // Predicated region
        $region109: #{tpu_custom_call.1} parent=59 // pred_check
          %p1249 = pneg %p697
        $region110: #{tpu_custom_call.1} parent=59 // pred_check_branch
          %1251 = sbr.rel (%p1249) target = $region112
        $region111: #{tpu_custom_call.1} parent=59 // pred_region
          %v1252 = vld [vmem:[#allocation2] sm:$0xff]
          %v1253 = vld [vmem:[#allocation2 + $0x8] sm:$0xff]
          %v1254 = vld [vmem:[#allocation2 + $0x10] sm:$0xff]
          %v1255 = vld [vmem:[#allocation2 + $0x18] sm:$0xff]
          %v1256 = vld [vmem:[#allocation2 + $0x20] sm:$0xff]
          %v1257 = vld [vmem:[#allocation2 + $0x28] sm:$0xff]
          %v1258 = vld [vmem:[#allocation2 + $0x30] sm:$0xff]
          %v1259 = vld [vmem:[#allocation10] sm:$0xff]
          %v1261 = vlaneseq
          %v1262 = vshrl.u32 %v1261, 7
          %v1263 = vsub.s32 0, %v1262
          %v1264 = vrot.slane %v1259, %v1263
          %v1265 = vlaneseq
          %v1266 = vshrl.u32 %v1265, 7
          %v1267 = vsub.s32 1, %v1266
          %v1268 = vrot.slane %v1259, %v1267
          %v1269 = vlaneseq
          %v1270 = vshrl.u32 %v1269, 7
          %v1271 = vsub.s32 2, %v1270
          %v1272 = vrot.slane %v1259, %v1271
          %v1273 = vlaneseq
          %v1274 = vshrl.u32 %v1273, 7
          %v1275 = vsub.s32 3, %v1274
          %v1276 = vrot.slane %v1259, %v1275
          %v1277 = vlaneseq
          %v1278 = vshrl.u32 %v1277, 7
          %v1279 = vsub.s32 4, %v1278
          %v1280 = vrot.slane %v1259, %v1279
          %v1281 = vlaneseq
          %v1282 = vshrl.u32 %v1281, 7
          %v1283 = vsub.s32 5, %v1282
          %v1284 = vrot.slane %v1259, %v1283
          %v1285 = vlaneseq
          %v1286 = vshrl.u32 %v1285, 7
          %v1287 = vsub.s32 6, %v1286
          %v1288 = vrot.slane %v1259, %v1287
          %v1296 = vadd.f32 %v1252, %v1264
          %v1297 = vadd.f32 %v1253, %v1268
          %v1298 = vadd.f32 %v1254, %v1272
          %v1299 = vadd.f32 %v1255, %v1276
          %v1300 = vadd.f32 %v1256, %v1280
          %v1301 = vadd.f32 %v1257, %v1284
          %v1302 = vadd.f32 %v1258, %v1288
          %v1303 = vmax.f32 %v1296, 0.0
          %v1304 = vmax.f32 %v1297, 0.0
          %v1305 = vmax.f32 %v1298, 0.0
          %v1306 = vmax.f32 %v1299, 0.0
          %v1307 = vmax.f32 %v1300, 0.0
          %v1308 = vmax.f32 %v1301, 0.0
          %v1309 = vmax.f32 %v1302, 0.0
          %v1310 = vpack.c.bf16 %v1303, %v1303
          %v1311 = vpack.c.bf16 %v1304, %v1304
          %v1312 = vpack.c.bf16 %v1305, %v1305
          %v1313 = vpack.c.bf16 %v1306, %v1306
          %v1314 = vpack.c.bf16 %v1307, %v1307
          %v1315 = vpack.c.bf16 %v1308, %v1308
          %v1316 = vpack.c.bf16 %v1309, %v1309
          %v1317 = vld [vmem:[#allocation11] sm:$0xff]
          %v1318 = vld [vmem:[#allocation11 + $0x8] sm:$0xff]
          %v1319 = vld [vmem:[#allocation11 + $0x10] sm:$0xff]
          %v1320 = vld [vmem:[#allocation11 + $0x18] sm:$0xf]
          %v1321 = vld [vmem:[#allocation11 + $0x1c] sm:$0xff]
          %v1322 = vld [vmem:[#allocation11 + $0x24] sm:$0xff]
          %v1323 = vld [vmem:[#allocation11 + $0x2c] sm:$0xff]
          %v1324 = vld [vmem:[#allocation11 + $0x34] sm:$0xf]
          %v1325 = vld [vmem:[#allocation11 + $0x38] sm:$0xff]
          %v1326 = vld [vmem:[#allocation11 + $0x40] sm:$0xff]
          %v1327 = vld [vmem:[#allocation11 + $0x48] sm:$0xff]
          %v1328 = vld [vmem:[#allocation11 + $0x50] sm:$0xf]
          %v1329 = vld [vmem:[#allocation11 + $0x54] sm:$0xff]
          %v1330 = vld [vmem:[#allocation11 + $0x5c] sm:$0xff]
          %v1331 = vld [vmem:[#allocation11 + $0x64] sm:$0xff]
          %v1332 = vld [vmem:[#allocation11 + $0x6c] sm:$0xf]
          %v1333 = vld [vmem:[#allocation11 + $0x70] sm:$0xff]
          %v1334 = vld [vmem:[#allocation11 + $0x78] sm:$0xff]
          %v1335 = vld [vmem:[#allocation11 + $0x80] sm:$0xff]
          %v1336 = vld [vmem:[#allocation11 + $0x88] sm:$0xf]
          %v1337 = vld [vmem:[#allocation11 + $0x8c] sm:$0xff]
          %v1338 = vld [vmem:[#allocation11 + $0x94] sm:$0xff]
          %v1339 = vld [vmem:[#allocation11 + $0x9c] sm:$0xff]
          %v1340 = vld [vmem:[#allocation11 + $0xa4] sm:$0xf]
          %v1341 = vld [vmem:[#allocation11 + $0xa8] sm:$0xff]
          %v1342 = vld [vmem:[#allocation11 + $0xb0] sm:$0xff]
          %v1343 = vld [vmem:[#allocation11 + $0xb8] sm:$0xff]
          %v1344 = vld [vmem:[#allocation11 + $0xc0] sm:$0xf]
          %v1345 = vld [vmem:[#allocation11 + $0xc4] sm:$0xff]
          %v1346 = vld [vmem:[#allocation11 + $0xcc] sm:$0xff]
          %v1347 = vld [vmem:[#allocation11 + $0xd4] sm:$0xff]
          %v1348 = vld [vmem:[#allocation11 + $0xdc] sm:$0xf]
          %v1349 = vld [vmem:[#allocation11 + $0xe0] sm:$0xff]
          %v1350 = vld [vmem:[#allocation11 + $0xe8] sm:$0xff]
          %v1351 = vld [vmem:[#allocation11 + $0xf0] sm:$0xff]
          %v1352 = vld [vmem:[#allocation11 + $0xf8] sm:$0xf]
          %v1353 = vld [vmem:[#allocation11 + $0xfc] sm:$0xff]
          %v1354 = vld [vmem:[#allocation11 + $0x104] sm:$0xff]
          %v1355 = vld [vmem:[#allocation11 + $0x10c] sm:$0xff]
          %v1356 = vld [vmem:[#allocation11 + $0x114] sm:$0xf]
          %v1357 = vld [vmem:[#allocation11 + $0x118] sm:$0xff]
          %v1358 = vld [vmem:[#allocation11 + $0x120] sm:$0xff]
          %v1359 = vld [vmem:[#allocation11 + $0x128] sm:$0xff]
          %v1360 = vld [vmem:[#allocation11 + $0x130] sm:$0xf]
          %v1361 = vld [vmem:[#allocation11 + $0x134] sm:$0xff]
          %v1362 = vld [vmem:[#allocation11 + $0x13c] sm:$0xff]
          %v1363 = vld [vmem:[#allocation11 + $0x144] sm:$0xff]
          %v1364 = vld [vmem:[#allocation11 + $0x14c] sm:$0xf]
          %v1365 = vld [vmem:[#allocation11 + $0x150] sm:$0xff]
          %v1366 = vld [vmem:[#allocation11 + $0x158] sm:$0xff]
          %v1367 = vld [vmem:[#allocation11 + $0x160] sm:$0xff]
          %v1368 = vld [vmem:[#allocation11 + $0x168] sm:$0xf]
          %v1369 = vld [vmem:[#allocation11 + $0x16c] sm:$0xff]
          %v1370 = vld [vmem:[#allocation11 + $0x174] sm:$0xff]
          %v1371 = vld [vmem:[#allocation11 + $0x17c] sm:$0xff]
          %v1372 = vld [vmem:[#allocation11 + $0x184] sm:$0xf]
          %v1373 = vld [vmem:[#allocation11 + $0x188] sm:$0xff]
          %v1374 = vld [vmem:[#allocation11 + $0x190] sm:$0xff]
          %v1375 = vld [vmem:[#allocation11 + $0x198] sm:$0xff]
          %v1376 = vld [vmem:[#allocation11 + $0x1a0] sm:$0xf]
          %v1377 = vld [vmem:[#allocation11 + $0x1a4] sm:$0xff]
          %v1378 = vld [vmem:[#allocation11 + $0x1ac] sm:$0xff]
          %v1379 = vld [vmem:[#allocation11 + $0x1b4] sm:$0xff]
          %v1380 = vld [vmem:[#allocation11 + $0x1bc] sm:$0xf]
          %v1381 = vld [vmem:[#allocation11 + $0x1c0] sm:$0xff]
          %v1382 = vld [vmem:[#allocation11 + $0x1c8] sm:$0xff]
          %v1383 = vld [vmem:[#allocation11 + $0x1d0] sm:$0xff]
          %v1384 = vld [vmem:[#allocation11 + $0x1d8] sm:$0xf]
          %v1385 = vld [vmem:[#allocation11 + $0x1dc] sm:$0xff]
          %v1386 = vld [vmem:[#allocation11 + $0x1e4] sm:$0xff]
          %v1387 = vld [vmem:[#allocation11 + $0x1ec] sm:$0xff]
          %v1388 = vld [vmem:[#allocation11 + $0x1f4] sm:$0xf]
          %v1389 = vld [vmem:[#allocation11 + $0x1f8] sm:$0xff]
          %v1390 = vld [vmem:[#allocation11 + $0x200] sm:$0xff]
          %v1391 = vld [vmem:[#allocation11 + $0x208] sm:$0xff]
          %v1392 = vld [vmem:[#allocation11 + $0x210] sm:$0xf]
          %v1393 = vld [vmem:[#allocation11 + $0x214] sm:$0xff]
          %v1394 = vld [vmem:[#allocation11 + $0x21c] sm:$0xff]
          %v1395 = vld [vmem:[#allocation11 + $0x224] sm:$0xff]
          %v1396 = vld [vmem:[#allocation11 + $0x22c] sm:$0xf]
          %v1397 = vld [vmem:[#allocation11 + $0x230] sm:$0xff]
          %v1398 = vld [vmem:[#allocation11 + $0x238] sm:$0xff]
          %v1399 = vld [vmem:[#allocation11 + $0x240] sm:$0xff]
          %v1400 = vld [vmem:[#allocation11 + $0x248] sm:$0xf]
          %v1401 = vld [vmem:[#allocation11 + $0x24c] sm:$0xff]
          %v1402 = vld [vmem:[#allocation11 + $0x254] sm:$0xff]
          %v1403 = vld [vmem:[#allocation11 + $0x25c] sm:$0xff]
          %v1404 = vld [vmem:[#allocation11 + $0x264] sm:$0xf]
          %v1405 = vld [vmem:[#allocation11 + $0x268] sm:$0xff]
          %v1406 = vld [vmem:[#allocation11 + $0x270] sm:$0xff]
          %v1407 = vld [vmem:[#allocation11 + $0x278] sm:$0xff]
          %v1408 = vld [vmem:[#allocation11 + $0x280] sm:$0xf]
          %v1409 = vld [vmem:[#allocation11 + $0x284] sm:$0xff]
          %v1410 = vld [vmem:[#allocation11 + $0x28c] sm:$0xff]
          %v1411 = vld [vmem:[#allocation11 + $0x294] sm:$0xff]
          %v1412 = vld [vmem:[#allocation11 + $0x29c] sm:$0xf]
          %v1413 = vld [vmem:[#allocation11 + $0x2a0] sm:$0xff]
          %v1414 = vld [vmem:[#allocation11 + $0x2a8] sm:$0xff]
          %v1415 = vld [vmem:[#allocation11 + $0x2b0] sm:$0xff]
          %v1416 = vld [vmem:[#allocation11 + $0x2b8] sm:$0xf]
          %v1417 = vld [vmem:[#allocation11 + $0x2bc] sm:$0xff]
          %v1418 = vld [vmem:[#allocation11 + $0x2c4] sm:$0xff]
          %v1419 = vld [vmem:[#allocation11 + $0x2cc] sm:$0xff]
          %v1420 = vld [vmem:[#allocation11 + $0x2d4] sm:$0xf]
          %v1421 = vld [vmem:[#allocation11 + $0x2d8] sm:$0xff]
          %v1422 = vld [vmem:[#allocation11 + $0x2e0] sm:$0xff]
          %v1423 = vld [vmem:[#allocation11 + $0x2e8] sm:$0xff]
          %v1424 = vld [vmem:[#allocation11 + $0x2f0] sm:$0xf]
          %v1425 = vld [vmem:[#allocation11 + $0x2f4] sm:$0xff]
          %v1426 = vld [vmem:[#allocation11 + $0x2fc] sm:$0xff]
          %v1427 = vld [vmem:[#allocation11 + $0x304] sm:$0xff]
          %v1428 = vld [vmem:[#allocation11 + $0x30c] sm:$0xf]
          %v1429 = vld [vmem:[#allocation11 + $0x310] sm:$0xff]
          %v1430 = vld [vmem:[#allocation11 + $0x318] sm:$0xff]
          %v1431 = vld [vmem:[#allocation11 + $0x320] sm:$0xff]
          %v1432 = vld [vmem:[#allocation11 + $0x328] sm:$0xf]
          %v1433 = vld [vmem:[#allocation11 + $0x32c] sm:$0xff]
          %v1434 = vld [vmem:[#allocation11 + $0x334] sm:$0xff]
          %v1435 = vld [vmem:[#allocation11 + $0x33c] sm:$0xff]
          %v1436 = vld [vmem:[#allocation11 + $0x344] sm:$0xf]
          %v1437 = vld [vmem:[#allocation11 + $0x348] sm:$0xff]
          %v1438 = vld [vmem:[#allocation11 + $0x350] sm:$0xff]
          %v1439 = vld [vmem:[#allocation11 + $0x358] sm:$0xff]
          %v1440 = vld [vmem:[#allocation11 + $0x360] sm:$0xf]
          %v1441 = vld [vmem:[#allocation11 + $0x364] sm:$0xff]
          %v1442 = vld [vmem:[#allocation11 + $0x36c] sm:$0xff]
          %v1443 = vld [vmem:[#allocation11 + $0x374] sm:$0xff]
          %v1444 = vld [vmem:[#allocation11 + $0x37c] sm:$0xf]
          %v1445 = vld [vmem:[#allocation11 + $0x380] sm:$0xff]
          %v1446 = vld [vmem:[#allocation11 + $0x388] sm:$0xff]
          %v1447 = vld [vmem:[#allocation11 + $0x390] sm:$0xff]
          %v1448 = vld [vmem:[#allocation11 + $0x398] sm:$0xf]
          %v1449 = vld [vmem:[#allocation11 + $0x39c] sm:$0xff]
          %v1450 = vld [vmem:[#allocation11 + $0x3a4] sm:$0xff]
          %v1451 = vld [vmem:[#allocation11 + $0x3ac] sm:$0xff]
          %v1452 = vld [vmem:[#allocation11 + $0x3b4] sm:$0xf]
          %v1453 = vld [vmem:[#allocation11 + $0x3b8] sm:$0xff]
          %v1454 = vld [vmem:[#allocation11 + $0x3c0] sm:$0xff]
          %v1455 = vld [vmem:[#allocation11 + $0x3c8] sm:$0xff]
          %v1456 = vld [vmem:[#allocation11 + $0x3d0] sm:$0xf]
          %v1457 = vld [vmem:[#allocation11 + $0x3d4] sm:$0xff]
          %v1458 = vld [vmem:[#allocation11 + $0x3dc] sm:$0xff]
          %v1459 = vld [vmem:[#allocation11 + $0x3e4] sm:$0xff]
          %v1460 = vld [vmem:[#allocation11 + $0x3ec] sm:$0xf]
          %v1461 = vld [vmem:[#allocation11 + $0x3f0] sm:$0xff]
          %v1462 = vld [vmem:[#allocation11 + $0x3f8] sm:$0xff]
          %v1463 = vld [vmem:[#allocation11 + $0x400] sm:$0xff]
          %v1464 = vld [vmem:[#allocation11 + $0x408] sm:$0xf]
          %v1465 = vld [vmem:[#allocation11 + $0x40c] sm:$0xff]
          %v1466 = vld [vmem:[#allocation11 + $0x414] sm:$0xff]
          %v1467 = vld [vmem:[#allocation11 + $0x41c] sm:$0xff]
          %v1468 = vld [vmem:[#allocation11 + $0x424] sm:$0xf]
          %v1469 = vld [vmem:[#allocation11 + $0x428] sm:$0xff]
          %v1470 = vld [vmem:[#allocation11 + $0x430] sm:$0xff]
          %v1471 = vld [vmem:[#allocation11 + $0x438] sm:$0xff]
          %v1472 = vld [vmem:[#allocation11 + $0x440] sm:$0xf]
          %v1473 = vld [vmem:[#allocation11 + $0x444] sm:$0xff]
          %v1474 = vld [vmem:[#allocation11 + $0x44c] sm:$0xff]
          %v1475 = vld [vmem:[#allocation11 + $0x454] sm:$0xff]
          %v1476 = vld [vmem:[#allocation11 + $0x45c] sm:$0xf]
          %v1477 = vld [vmem:[#allocation11 + $0x460] sm:$0xff]
          %v1478 = vld [vmem:[#allocation11 + $0x468] sm:$0xff]
          %v1479 = vld [vmem:[#allocation11 + $0x470] sm:$0xff]
          %v1480 = vld [vmem:[#allocation11 + $0x478] sm:$0xf]
          %v1481 = vld [vmem:[#allocation11 + $0x47c] sm:$0xff]
          %v1482 = vld [vmem:[#allocation11 + $0x484] sm:$0xff]
          %v1483 = vld [vmem:[#allocation11 + $0x48c] sm:$0xff]
          %v1484 = vld [vmem:[#allocation11 + $0x494] sm:$0xf]
          %v1485 = vld [vmem:[#allocation11 + $0x498] sm:$0xff]
          %v1486 = vld [vmem:[#allocation11 + $0x4a0] sm:$0xff]
          %v1487 = vld [vmem:[#allocation11 + $0x4a8] sm:$0xff]
          %v1488 = vld [vmem:[#allocation11 + $0x4b0] sm:$0xf]
          %v1489 = vld [vmem:[#allocation11 + $0x4b4] sm:$0xff]
          %v1490 = vld [vmem:[#allocation11 + $0x4bc] sm:$0xff]
          %v1491 = vld [vmem:[#allocation11 + $0x4c4] sm:$0xff]
          %v1492 = vld [vmem:[#allocation11 + $0x4cc] sm:$0xf]
          %v1493 = vld [vmem:[#allocation11 + $0x4d0] sm:$0xff]
          %v1494 = vld [vmem:[#allocation11 + $0x4d8] sm:$0xff]
          %v1495 = vld [vmem:[#allocation11 + $0x4e0] sm:$0xff]
          %v1496 = vld [vmem:[#allocation11 + $0x4e8] sm:$0xf]
          %v1497 = vld [vmem:[#allocation11 + $0x4ec] sm:$0xff]
          %v1498 = vld [vmem:[#allocation11 + $0x4f4] sm:$0xff]
          %v1499 = vld [vmem:[#allocation11 + $0x4fc] sm:$0xff]
          %v1500 = vld [vmem:[#allocation11 + $0x504] sm:$0xf]
          %v1501 = vld [vmem:[#allocation11 + $0x508] sm:$0xff]
          %v1502 = vld [vmem:[#allocation11 + $0x510] sm:$0xff]
          %v1503 = vld [vmem:[#allocation11 + $0x518] sm:$0xff]
          %v1504 = vld [vmem:[#allocation11 + $0x520] sm:$0xf]
          %v1505 = vld [vmem:[#allocation11 + $0x524] sm:$0xff]
          %v1506 = vld [vmem:[#allocation11 + $0x52c] sm:$0xff]
          %v1507 = vld [vmem:[#allocation11 + $0x534] sm:$0xff]
          %v1508 = vld [vmem:[#allocation11 + $0x53c] sm:$0xf]
          %v1509 = vld [vmem:[#allocation11 + $0x540] sm:$0xff]
          %v1510 = vld [vmem:[#allocation11 + $0x548] sm:$0xff]
          %v1511 = vld [vmem:[#allocation11 + $0x550] sm:$0xff]
          %v1512 = vld [vmem:[#allocation11 + $0x558] sm:$0xf]
          %v1513 = vld [vmem:[#allocation11 + $0x55c] sm:$0xff]
          %v1514 = vld [vmem:[#allocation11 + $0x564] sm:$0xff]
          %v1515 = vld [vmem:[#allocation11 + $0x56c] sm:$0xff]
          %v1516 = vld [vmem:[#allocation11 + $0x574] sm:$0xf]
          %v1517 = vld [vmem:[#allocation11 + $0x578] sm:$0xff]
          %v1518 = vld [vmem:[#allocation11 + $0x580] sm:$0xff]
          %v1519 = vld [vmem:[#allocation11 + $0x588] sm:$0xff]
          %v1520 = vld [vmem:[#allocation11 + $0x590] sm:$0xf]
          %v1521 = vld [vmem:[#allocation11 + $0x594] sm:$0xff]
          %v1522 = vld [vmem:[#allocation11 + $0x59c] sm:$0xff]
          %v1523 = vld [vmem:[#allocation11 + $0x5a4] sm:$0xff]
          %v1524 = vld [vmem:[#allocation11 + $0x5ac] sm:$0xf]
          %v1525 = vld [vmem:[#allocation11 + $0x5b0] sm:$0xff]
          %v1526 = vld [vmem:[#allocation11 + $0x5b8] sm:$0xff]
          %v1527 = vld [vmem:[#allocation11 + $0x5c0] sm:$0xff]
          %v1528 = vld [vmem:[#allocation11 + $0x5c8] sm:$0xf]
          %v1529 = vld [vmem:[#allocation11 + $0x5cc] sm:$0xff]
          %v1530 = vld [vmem:[#allocation11 + $0x5d4] sm:$0xff]
          %v1531 = vld [vmem:[#allocation11 + $0x5dc] sm:$0xff]
          %v1532 = vld [vmem:[#allocation11 + $0x5e4] sm:$0xf]
          %v1533 = vld [vmem:[#allocation11 + $0x5e8] sm:$0xff]
          %v1534 = vld [vmem:[#allocation11 + $0x5f0] sm:$0xff]
          %v1535 = vld [vmem:[#allocation11 + $0x5f8] sm:$0xff]
          %v1536 = vld [vmem:[#allocation11 + $0x600] sm:$0xf]
          %v1537 = vld [vmem:[#allocation11 + $0x604] sm:$0xff]
          %v1538 = vld [vmem:[#allocation11 + $0x60c] sm:$0xff]
          %v1539 = vld [vmem:[#allocation11 + $0x614] sm:$0xff]
          %v1540 = vld [vmem:[#allocation11 + $0x61c] sm:$0xf]
          %v1541 = vld [vmem:[#allocation11 + $0x620] sm:$0xff]
          %v1542 = vld [vmem:[#allocation11 + $0x628] sm:$0xff]
          %v1543 = vld [vmem:[#allocation11 + $0x630] sm:$0xff]
          %v1544 = vld [vmem:[#allocation11 + $0x638] sm:$0xf]
          %v1545 = vld [vmem:[#allocation11 + $0x63c] sm:$0xff]
          %v1546 = vld [vmem:[#allocation11 + $0x644] sm:$0xff]
          %v1547 = vld [vmem:[#allocation11 + $0x64c] sm:$0xff]
          %v1548 = vld [vmem:[#allocation11 + $0x654] sm:$0xf]
          %v1549 = vld [vmem:[#allocation11 + $0x658] sm:$0xff]
          %v1550 = vld [vmem:[#allocation11 + $0x660] sm:$0xff]
          %v1551 = vld [vmem:[#allocation11 + $0x668] sm:$0xff]
          %v1552 = vld [vmem:[#allocation11 + $0x670] sm:$0xf]
          %v1553 = vld [vmem:[#allocation11 + $0x674] sm:$0xff]
          %v1554 = vld [vmem:[#allocation11 + $0x67c] sm:$0xff]
          %v1555 = vld [vmem:[#allocation11 + $0x684] sm:$0xff]
          %v1556 = vld [vmem:[#allocation11 + $0x68c] sm:$0xf]
          %v1557 = vld [vmem:[#allocation11 + $0x690] sm:$0xff]
          %v1558 = vld [vmem:[#allocation11 + $0x698] sm:$0xff]
          %v1559 = vld [vmem:[#allocation11 + $0x6a0] sm:$0xff]
          %v1560 = vld [vmem:[#allocation11 + $0x6a8] sm:$0xf]
          %v1561 = vld [vmem:[#allocation11 + $0x6ac] sm:$0xff]
          %v1562 = vld [vmem:[#allocation11 + $0x6b4] sm:$0xff]
          %v1563 = vld [vmem:[#allocation11 + $0x6bc] sm:$0xff]
          %v1564 = vld [vmem:[#allocation11 + $0x6c4] sm:$0xf]
          %v1565 = vld [vmem:[#allocation11 + $0x6c8] sm:$0xff]
          %v1566 = vld [vmem:[#allocation11 + $0x6d0] sm:$0xff]
          %v1567 = vld [vmem:[#allocation11 + $0x6d8] sm:$0xff]
          %v1568 = vld [vmem:[#allocation11 + $0x6e0] sm:$0xf]
          %v1569 = vld [vmem:[#allocation11 + $0x6e4] sm:$0xff]
          %v1570 = vld [vmem:[#allocation11 + $0x6ec] sm:$0xff]
          %v1571 = vld [vmem:[#allocation11 + $0x6f4] sm:$0xff]
          %v1572 = vld [vmem:[#allocation11 + $0x6fc] sm:$0xf]
          %v1573 = vld [vmem:[#allocation11 + $0x700] sm:$0xff]
          %v1574 = vld [vmem:[#allocation11 + $0x708] sm:$0xff]
          %v1575 = vld [vmem:[#allocation11 + $0x710] sm:$0xff]
          %v1576 = vld [vmem:[#allocation11 + $0x718] sm:$0xf]
          %v1577 = vld [vmem:[#allocation11 + $0x71c] sm:$0xff]
          %v1578 = vld [vmem:[#allocation11 + $0x724] sm:$0xff]
          %v1579 = vld [vmem:[#allocation11 + $0x72c] sm:$0xff]
          %v1580 = vld [vmem:[#allocation11 + $0x734] sm:$0xf]
          %v1581 = vld [vmem:[#allocation11 + $0x738] sm:$0xff]
          %v1582 = vld [vmem:[#allocation11 + $0x740] sm:$0xff]
          %v1583 = vld [vmem:[#allocation11 + $0x748] sm:$0xff]
          %v1584 = vld [vmem:[#allocation11 + $0x750] sm:$0xf]
          %v1585 = vld [vmem:[#allocation11 + $0x754] sm:$0xff]
          %v1586 = vld [vmem:[#allocation11 + $0x75c] sm:$0xff]
          %v1587 = vld [vmem:[#allocation11 + $0x764] sm:$0xff]
          %v1588 = vld [vmem:[#allocation11 + $0x76c] sm:$0xf]
          %v1589 = vld [vmem:[#allocation11 + $0x770] sm:$0xff]
          %v1590 = vld [vmem:[#allocation11 + $0x778] sm:$0xff]
          %v1591 = vld [vmem:[#allocation11 + $0x780] sm:$0xff]
          %v1592 = vld [vmem:[#allocation11 + $0x788] sm:$0xf]
          %v1593 = vld [vmem:[#allocation11 + $0x78c] sm:$0xff]
          %v1594 = vld [vmem:[#allocation11 + $0x794] sm:$0xff]
          %v1595 = vld [vmem:[#allocation11 + $0x79c] sm:$0xff]
          %v1596 = vld [vmem:[#allocation11 + $0x7a4] sm:$0xf]
          %v1597 = vld [vmem:[#allocation11 + $0x7a8] sm:$0xff]
          %v1598 = vld [vmem:[#allocation11 + $0x7b0] sm:$0xff]
          %v1599 = vld [vmem:[#allocation11 + $0x7b8] sm:$0xff]
          %v1600 = vld [vmem:[#allocation11 + $0x7c0] sm:$0xf]
          %v1601 = vld [vmem:[#allocation11 + $0x7c4] sm:$0xff]
          %v1602 = vld [vmem:[#allocation11 + $0x7cc] sm:$0xff]
          %v1603 = vld [vmem:[#allocation11 + $0x7d4] sm:$0xff]
          %v1604 = vld [vmem:[#allocation11 + $0x7dc] sm:$0xf]
          %v1605 = vld [vmem:[#allocation11 + $0x7e0] sm:$0xff]
          %v1606 = vld [vmem:[#allocation11 + $0x7e8] sm:$0xff]
          %v1607 = vld [vmem:[#allocation11 + $0x7f0] sm:$0xff]
          %v1608 = vld [vmem:[#allocation11 + $0x7f8] sm:$0xf]
          %v1609 = vld [vmem:[#allocation11 + $0x7fc] sm:$0xff]
          %v1610 = vld [vmem:[#allocation11 + $0x804] sm:$0xff]
          %v1611 = vld [vmem:[#allocation11 + $0x80c] sm:$0xff]
          %v1612 = vld [vmem:[#allocation11 + $0x814] sm:$0xf]
          %v1613 = vld [vmem:[#allocation11 + $0x818] sm:$0xff]
          %v1614 = vld [vmem:[#allocation11 + $0x820] sm:$0xff]
          %v1615 = vld [vmem:[#allocation11 + $0x828] sm:$0xff]
          %v1616 = vld [vmem:[#allocation11 + $0x830] sm:$0xf]
          %v1617 = vld [vmem:[#allocation11 + $0x834] sm:$0xff]
          %v1618 = vld [vmem:[#allocation11 + $0x83c] sm:$0xff]
          %v1619 = vld [vmem:[#allocation11 + $0x844] sm:$0xff]
          %v1620 = vld [vmem:[#allocation11 + $0x84c] sm:$0xf]
          %v1621 = vld [vmem:[#allocation11 + $0x850] sm:$0xff]
          %v1622 = vld [vmem:[#allocation11 + $0x858] sm:$0xff]
          %v1623 = vld [vmem:[#allocation11 + $0x860] sm:$0xff]
          %v1624 = vld [vmem:[#allocation11 + $0x868] sm:$0xf]
          %v1625 = vld [vmem:[#allocation11 + $0x86c] sm:$0xff]
          %v1626 = vld [vmem:[#allocation11 + $0x874] sm:$0xff]
          %v1627 = vld [vmem:[#allocation11 + $0x87c] sm:$0xff]
          %v1628 = vld [vmem:[#allocation11 + $0x884] sm:$0xf]
          %v1629 = vld [vmem:[#allocation11 + $0x888] sm:$0xff]
          %v1630 = vld [vmem:[#allocation11 + $0x890] sm:$0xff]
          %v1631 = vld [vmem:[#allocation11 + $0x898] sm:$0xff]
          %v1632 = vld [vmem:[#allocation11 + $0x8a0] sm:$0xf]
          %v1633 = vld [vmem:[#allocation11 + $0x8a4] sm:$0xff]
          %v1634 = vld [vmem:[#allocation11 + $0x8ac] sm:$0xff]
          %v1635 = vld [vmem:[#allocation11 + $0x8b4] sm:$0xff]
          %v1636 = vld [vmem:[#allocation11 + $0x8bc] sm:$0xf]
          %v1637 = vld [vmem:[#allocation11 + $0x8c0] sm:$0xff]
          %v1638 = vld [vmem:[#allocation11 + $0x8c8] sm:$0xff]
          %v1639 = vld [vmem:[#allocation11 + $0x8d0] sm:$0xff]
          %v1640 = vld [vmem:[#allocation11 + $0x8d8] sm:$0xf]
          %v1641 = vld [vmem:[#allocation11 + $0x8dc] sm:$0xff]
          %v1642 = vld [vmem:[#allocation11 + $0x8e4] sm:$0xff]
          %v1643 = vld [vmem:[#allocation11 + $0x8ec] sm:$0xff]
          %v1644 = vld [vmem:[#allocation11 + $0x8f4] sm:$0xf]
          %v1645 = vld [vmem:[#allocation11 + $0x8f8] sm:$0xff]
          %v1646 = vld [vmem:[#allocation11 + $0x900] sm:$0xff]
          %v1647 = vld [vmem:[#allocation11 + $0x908] sm:$0xff]
          %v1648 = vld [vmem:[#allocation11 + $0x910] sm:$0xf]
          %v1649 = vld [vmem:[#allocation11 + $0x914] sm:$0xff]
          %v1650 = vld [vmem:[#allocation11 + $0x91c] sm:$0xff]
          %v1651 = vld [vmem:[#allocation11 + $0x924] sm:$0xff]
          %v1652 = vld [vmem:[#allocation11 + $0x92c] sm:$0xf]
          %v1653 = vld [vmem:[#allocation11 + $0x930] sm:$0xff]
          %v1654 = vld [vmem:[#allocation11 + $0x938] sm:$0xff]
          %v1655 = vld [vmem:[#allocation11 + $0x940] sm:$0xff]
          %v1656 = vld [vmem:[#allocation11 + $0x948] sm:$0xf]
          %v1657 = vld [vmem:[#allocation11 + $0x94c] sm:$0xff]
          %v1658 = vld [vmem:[#allocation11 + $0x954] sm:$0xff]
          %v1659 = vld [vmem:[#allocation11 + $0x95c] sm:$0xff]
          %v1660 = vld [vmem:[#allocation11 + $0x964] sm:$0xf]
          %v1661 = vld [vmem:[#allocation11 + $0x968] sm:$0xff]
          %v1662 = vld [vmem:[#allocation11 + $0x970] sm:$0xff]
          %v1663 = vld [vmem:[#allocation11 + $0x978] sm:$0xff]
          %v1664 = vld [vmem:[#allocation11 + $0x980] sm:$0xf]
          %v1665 = vld [vmem:[#allocation11 + $0x984] sm:$0xff]
          %v1666 = vld [vmem:[#allocation11 + $0x98c] sm:$0xff]
          %v1667 = vld [vmem:[#allocation11 + $0x994] sm:$0xff]
          %v1668 = vld [vmem:[#allocation11 + $0x99c] sm:$0xf]
          %v1669 = vld [vmem:[#allocation11 + $0x9a0] sm:$0xff]
          %v1670 = vld [vmem:[#allocation11 + $0x9a8] sm:$0xff]
          %v1671 = vld [vmem:[#allocation11 + $0x9b0] sm:$0xff]
          %v1672 = vld [vmem:[#allocation11 + $0x9b8] sm:$0xf]
          %v1673 = vld [vmem:[#allocation11 + $0x9bc] sm:$0xff]
          %v1674 = vld [vmem:[#allocation11 + $0x9c4] sm:$0xff]
          %v1675 = vld [vmem:[#allocation11 + $0x9cc] sm:$0xff]
          %v1676 = vld [vmem:[#allocation11 + $0x9d4] sm:$0xf]
          %v1677 = vld [vmem:[#allocation11 + $0x9d8] sm:$0xff]
          %v1678 = vld [vmem:[#allocation11 + $0x9e0] sm:$0xff]
          %v1679 = vld [vmem:[#allocation11 + $0x9e8] sm:$0xff]
          %v1680 = vld [vmem:[#allocation11 + $0x9f0] sm:$0xf]
          %v1681 = vld [vmem:[#allocation11 + $0x9f4] sm:$0xff]
          %v1682 = vld [vmem:[#allocation11 + $0x9fc] sm:$0xff]
          %v1683 = vld [vmem:[#allocation11 + $0xa04] sm:$0xff]
          %v1684 = vld [vmem:[#allocation11 + $0xa0c] sm:$0xf]
          %v1685 = vld [vmem:[#allocation11 + $0xa10] sm:$0xff]
          %v1686 = vld [vmem:[#allocation11 + $0xa18] sm:$0xff]
          %v1687 = vld [vmem:[#allocation11 + $0xa20] sm:$0xff]
          %v1688 = vld [vmem:[#allocation11 + $0xa28] sm:$0xf]
          %v1689 = vld [vmem:[#allocation11 + $0xa2c] sm:$0xff]
          %v1690 = vld [vmem:[#allocation11 + $0xa34] sm:$0xff]
          %v1691 = vld [vmem:[#allocation11 + $0xa3c] sm:$0xff]
          %v1692 = vld [vmem:[#allocation11 + $0xa44] sm:$0xf]
          %v1693 = vld [vmem:[#allocation11 + $0xa48] sm:$0xff]
          %v1694 = vld [vmem:[#allocation11 + $0xa50] sm:$0xff]
          %v1695 = vld [vmem:[#allocation11 + $0xa58] sm:$0xff]
          %v1696 = vld [vmem:[#allocation11 + $0xa60] sm:$0xf]
          %v1697 = vld [vmem:[#allocation11 + $0xa64] sm:$0xff]
          %v1698 = vld [vmem:[#allocation11 + $0xa6c] sm:$0xff]
          %v1699 = vld [vmem:[#allocation11 + $0xa74] sm:$0xff]
          %v1700 = vld [vmem:[#allocation11 + $0xa7c] sm:$0xf]
          %v1701 = vld [vmem:[#allocation11 + $0xa80] sm:$0xff]
          %v1702 = vld [vmem:[#allocation11 + $0xa88] sm:$0xff]
          %v1703 = vld [vmem:[#allocation11 + $0xa90] sm:$0xff]
          %v1704 = vld [vmem:[#allocation11 + $0xa98] sm:$0xf]
          %v1705 = vld [vmem:[#allocation11 + $0xa9c] sm:$0xff]
          %v1706 = vld [vmem:[#allocation11 + $0xaa4] sm:$0xff]
          %v1707 = vld [vmem:[#allocation11 + $0xaac] sm:$0xff]
          %v1708 = vld [vmem:[#allocation11 + $0xab4] sm:$0xf]
          %v1709 = vld [vmem:[#allocation11 + $0xab8] sm:$0xff]
          %v1710 = vld [vmem:[#allocation11 + $0xac0] sm:$0xff]
          %v1711 = vld [vmem:[#allocation11 + $0xac8] sm:$0xff]
          %v1712 = vld [vmem:[#allocation11 + $0xad0] sm:$0xf]
          %v1713 = vld [vmem:[#allocation11 + $0xad4] sm:$0xff]
          %v1714 = vld [vmem:[#allocation11 + $0xadc] sm:$0xff]
          %v1715 = vld [vmem:[#allocation11 + $0xae4] sm:$0xff]
          %v1716 = vld [vmem:[#allocation11 + $0xaec] sm:$0xf]
          %v1717 = vld [vmem:[#allocation11 + $0xaf0] sm:$0xff]
          %v1718 = vld [vmem:[#allocation11 + $0xaf8] sm:$0xff]
          %v1719 = vld [vmem:[#allocation11 + $0xb00] sm:$0xff]
          %v1720 = vld [vmem:[#allocation11 + $0xb08] sm:$0xf]
          %v1721 = vld [vmem:[#allocation11 + $0xb0c] sm:$0xff]
          %v1722 = vld [vmem:[#allocation11 + $0xb14] sm:$0xff]
          %v1723 = vld [vmem:[#allocation11 + $0xb1c] sm:$0xff]
          %v1724 = vld [vmem:[#allocation11 + $0xb24] sm:$0xf]
          %v1725 = vld [vmem:[#allocation11 + $0xb28] sm:$0xff]
          %v1726 = vld [vmem:[#allocation11 + $0xb30] sm:$0xff]
          %v1727 = vld [vmem:[#allocation11 + $0xb38] sm:$0xff]
          %v1728 = vld [vmem:[#allocation11 + $0xb40] sm:$0xf]
          %v1729 = vld [vmem:[#allocation11 + $0xb44] sm:$0xff]
          %v1730 = vld [vmem:[#allocation11 + $0xb4c] sm:$0xff]
          %v1731 = vld [vmem:[#allocation11 + $0xb54] sm:$0xff]
          %v1732 = vld [vmem:[#allocation11 + $0xb5c] sm:$0xf]
          %v1733 = vld [vmem:[#allocation11 + $0xb60] sm:$0xff]
          %v1734 = vld [vmem:[#allocation11 + $0xb68] sm:$0xff]
          %v1735 = vld [vmem:[#allocation11 + $0xb70] sm:$0xff]
          %v1736 = vld [vmem:[#allocation11 + $0xb78] sm:$0xf]
          %v1737 = vld [vmem:[#allocation11 + $0xb7c] sm:$0xff]
          %v1738 = vld [vmem:[#allocation11 + $0xb84] sm:$0xff]
          %v1739 = vld [vmem:[#allocation11 + $0xb8c] sm:$0xff]
          %v1740 = vld [vmem:[#allocation11 + $0xb94] sm:$0xf]
          %v1741 = vld [vmem:[#allocation11 + $0xb98] sm:$0xff]
          %v1742 = vld [vmem:[#allocation11 + $0xba0] sm:$0xff]
          %v1743 = vld [vmem:[#allocation11 + $0xba8] sm:$0xff]
          %v1744 = vld [vmem:[#allocation11 + $0xbb0] sm:$0xf]
          %v1745 = vld [vmem:[#allocation11 + $0xbb4] sm:$0xff]
          %v1746 = vld [vmem:[#allocation11 + $0xbbc] sm:$0xff]
          %v1747 = vld [vmem:[#allocation11 + $0xbc4] sm:$0xff]
          %v1748 = vld [vmem:[#allocation11 + $0xbcc] sm:$0xf]
          %v1749 = vld [vmem:[#allocation11 + $0xbd0] sm:$0xff]
          %v1750 = vld [vmem:[#allocation11 + $0xbd8] sm:$0xff]
          %v1751 = vld [vmem:[#allocation11 + $0xbe0] sm:$0xff]
          %v1752 = vld [vmem:[#allocation11 + $0xbe8] sm:$0xf]
          %v1753 = vld [vmem:[#allocation11 + $0xbec] sm:$0xff]
          %v1754 = vld [vmem:[#allocation11 + $0xbf4] sm:$0xff]
          %v1755 = vld [vmem:[#allocation11 + $0xbfc] sm:$0xff]
          %v1756 = vld [vmem:[#allocation11 + $0xc04] sm:$0xf]
          %v1757 = vld [vmem:[#allocation11 + $0xc08] sm:$0xff]
          %v1758 = vld [vmem:[#allocation11 + $0xc10] sm:$0xff]
          %v1759 = vld [vmem:[#allocation11 + $0xc18] sm:$0xff]
          %v1760 = vld [vmem:[#allocation11 + $0xc20] sm:$0xf]
          %v1761 = vld [vmem:[#allocation11 + $0xc24] sm:$0xff]
          %v1762 = vld [vmem:[#allocation11 + $0xc2c] sm:$0xff]
          %v1763 = vld [vmem:[#allocation11 + $0xc34] sm:$0xff]
          %v1764 = vld [vmem:[#allocation11 + $0xc3c] sm:$0xf]
          %v1765 = vld [vmem:[#allocation13] sm:$0xff]
          %v1767 = vlaneseq
          %v1768 = vshrl.u32 %v1767, 7
          %v1769 = vsub.s32 0, %v1768
          %v1770 = vrot.slane %v1765, %v1769
          %v1771 = vlaneseq
          %v1772 = vshrl.u32 %v1771, 7
          %v1773 = vsub.s32 1, %v1772
          %v1774 = vrot.slane %v1765, %v1773
          %v1775 = vlaneseq
          %v1776 = vshrl.u32 %v1775, 7
          %v1777 = vsub.s32 2, %v1776
          %v1778 = vrot.slane %v1765, %v1777
          %v1779 = vlaneseq
          %v1780 = vshrl.u32 %v1779, 7
          %v1781 = vsub.s32 3, %v1780
          %v1782 = vrot.slane %v1765, %v1781
          %v1783 = vlaneseq
          %v1784 = vshrl.u32 %v1783, 7
          %v1785 = vsub.s32 4, %v1784
          %v1786 = vrot.slane %v1765, %v1785
          %v1787 = vlaneseq
          %v1788 = vshrl.u32 %v1787, 7
          %v1789 = vsub.s32 5, %v1788
          %v1790 = vrot.slane %v1765, %v1789
          %v1791 = vlaneseq
          %v1792 = vshrl.u32 %v1791, 7
          %v1793 = vsub.s32 6, %v1792
          %v1794 = vrot.slane %v1765, %v1793
          %v2250 = vunpack.c.l.b16 %v1317
          %v2251 = vunpack.c.h.b16 %v1317
          %v2252 = vunpack.c.l.b16 %v1318
          %v2253 = vunpack.c.h.b16 %v1318
          %v2254 = vunpack.c.l.b16 %v1319
          %v2255 = vunpack.c.h.b16 %v1319
          %v2256 = vunpack.c.l.b16 %v1320
          %v2257 = vunpack.c.l.b16 %v1321
          %v2258 = vunpack.c.h.b16 %v1321
          %v2259 = vunpack.c.l.b16 %v1322
          %v2260 = vunpack.c.h.b16 %v1322
          %v2261 = vunpack.c.l.b16 %v1323
          %v2262 = vunpack.c.h.b16 %v1323
          %v2263 = vunpack.c.l.b16 %v1324
          %v2264 = vunpack.c.l.b16 %v1325
          %v2265 = vunpack.c.h.b16 %v1325
          %v2266 = vunpack.c.l.b16 %v1326
          %v2267 = vunpack.c.h.b16 %v1326
          %v2268 = vunpack.c.l.b16 %v1327
          %v2269 = vunpack.c.h.b16 %v1327
          %v2270 = vunpack.c.l.b16 %v1328
          %v2271 = vunpack.c.l.b16 %v1329
          %v2272 = vunpack.c.h.b16 %v1329
          %v2273 = vunpack.c.l.b16 %v1330
          %v2274 = vunpack.c.h.b16 %v1330
          %v2275 = vunpack.c.l.b16 %v1331
          %v2276 = vunpack.c.h.b16 %v1331
          %v2277 = vunpack.c.l.b16 %v1332
          %v2278 = vunpack.c.l.b16 %v1333
          %v2279 = vunpack.c.h.b16 %v1333
          %v2280 = vunpack.c.l.b16 %v1334
          %v2281 = vunpack.c.h.b16 %v1334
          %v2282 = vunpack.c.l.b16 %v1335
          %v2283 = vunpack.c.h.b16 %v1335
          %v2284 = vunpack.c.l.b16 %v1336
          %v2285 = vunpack.c.l.b16 %v1337
          %v2286 = vunpack.c.h.b16 %v1337
          %v2287 = vunpack.c.l.b16 %v1338
          %v2288 = vunpack.c.h.b16 %v1338
          %v2289 = vunpack.c.l.b16 %v1339
          %v2290 = vunpack.c.h.b16 %v1339
          %v2291 = vunpack.c.l.b16 %v1340
          %v2292 = vunpack.c.l.b16 %v1341
          %v2293 = vunpack.c.h.b16 %v1341
          %v2294 = vunpack.c.l.b16 %v1342
          %v2295 = vunpack.c.h.b16 %v1342
          %v2296 = vunpack.c.l.b16 %v1343
          %v2297 = vunpack.c.h.b16 %v1343
          %v2298 = vunpack.c.l.b16 %v1344
          %v2299 = vunpack.c.l.b16 %v1345
          %v2300 = vunpack.c.h.b16 %v1345
          %v2301 = vunpack.c.l.b16 %v1346
          %v2302 = vunpack.c.h.b16 %v1346
          %v2303 = vunpack.c.l.b16 %v1347
          %v2304 = vunpack.c.h.b16 %v1347
          %v2305 = vunpack.c.l.b16 %v1348
          %v2306 = vunpack.c.l.b16 %v1349
          %v2307 = vunpack.c.h.b16 %v1349
          %v2308 = vunpack.c.l.b16 %v1350
          %v2309 = vunpack.c.h.b16 %v1350
          %v2310 = vunpack.c.l.b16 %v1351
          %v2311 = vunpack.c.h.b16 %v1351
          %v2312 = vunpack.c.l.b16 %v1352
          %v2313 = vunpack.c.l.b16 %v1353
          %v2314 = vunpack.c.h.b16 %v1353
          %v2315 = vunpack.c.l.b16 %v1354
          %v2316 = vunpack.c.h.b16 %v1354
          %v2317 = vunpack.c.l.b16 %v1355
          %v2318 = vunpack.c.h.b16 %v1355
          %v2319 = vunpack.c.l.b16 %v1356
          %v2320 = vunpack.c.l.b16 %v1357
          %v2321 = vunpack.c.h.b16 %v1357
          %v2322 = vunpack.c.l.b16 %v1358
          %v2323 = vunpack.c.h.b16 %v1358
          %v2324 = vunpack.c.l.b16 %v1359
          %v2325 = vunpack.c.h.b16 %v1359
          %v2326 = vunpack.c.l.b16 %v1360
          %v2327 = vunpack.c.l.b16 %v1361
          %v2328 = vunpack.c.h.b16 %v1361
          %v2329 = vunpack.c.l.b16 %v1362
          %v2330 = vunpack.c.h.b16 %v1362
          %v2331 = vunpack.c.l.b16 %v1363
          %v2332 = vunpack.c.h.b16 %v1363
          %v2333 = vunpack.c.l.b16 %v1364
          %v2334 = vunpack.c.l.b16 %v1365
          %v2335 = vunpack.c.h.b16 %v1365
          %v2336 = vunpack.c.l.b16 %v1366
          %v2337 = vunpack.c.h.b16 %v1366
          %v2338 = vunpack.c.l.b16 %v1367
          %v2339 = vunpack.c.h.b16 %v1367
          %v2340 = vunpack.c.l.b16 %v1368
          %v2341 = vunpack.c.l.b16 %v1369
          %v2342 = vunpack.c.h.b16 %v1369
          %v2343 = vunpack.c.l.b16 %v1370
          %v2344 = vunpack.c.h.b16 %v1370
          %v2345 = vunpack.c.l.b16 %v1371
          %v2346 = vunpack.c.h.b16 %v1371
          %v2347 = vunpack.c.l.b16 %v1372
          %v2348 = vunpack.c.l.b16 %v1373
          %v2349 = vunpack.c.h.b16 %v1373
          %v2350 = vunpack.c.l.b16 %v1374
          %v2351 = vunpack.c.h.b16 %v1374
          %v2352 = vunpack.c.l.b16 %v1375
          %v2353 = vunpack.c.h.b16 %v1375
          %v2354 = vunpack.c.l.b16 %v1376
          %v2355 = vunpack.c.l.b16 %v1377
          %v2356 = vunpack.c.h.b16 %v1377
          %v2357 = vunpack.c.l.b16 %v1378
          %v2358 = vunpack.c.h.b16 %v1378
          %v2359 = vunpack.c.l.b16 %v1379
          %v2360 = vunpack.c.h.b16 %v1379
          %v2361 = vunpack.c.l.b16 %v1380
          %v2362 = vunpack.c.l.b16 %v1381
          %v2363 = vunpack.c.h.b16 %v1381
          %v2364 = vunpack.c.l.b16 %v1382
          %v2365 = vunpack.c.h.b16 %v1382
          %v2366 = vunpack.c.l.b16 %v1383
          %v2367 = vunpack.c.h.b16 %v1383
          %v2368 = vunpack.c.l.b16 %v1384
          %v2369 = vunpack.c.l.b16 %v1385
          %v2370 = vunpack.c.h.b16 %v1385
          %v2371 = vunpack.c.l.b16 %v1386
          %v2372 = vunpack.c.h.b16 %v1386
          %v2373 = vunpack.c.l.b16 %v1387
          %v2374 = vunpack.c.h.b16 %v1387
          %v2375 = vunpack.c.l.b16 %v1388
          %v2376 = vunpack.c.l.b16 %v1389
          %v2377 = vunpack.c.h.b16 %v1389
          %v2378 = vunpack.c.l.b16 %v1390
          %v2379 = vunpack.c.h.b16 %v1390
          %v2380 = vunpack.c.l.b16 %v1391
          %v2381 = vunpack.c.h.b16 %v1391
          %v2382 = vunpack.c.l.b16 %v1392
          %v2383 = vunpack.c.l.b16 %v1393
          %v2384 = vunpack.c.h.b16 %v1393
          %v2385 = vunpack.c.l.b16 %v1394
          %v2386 = vunpack.c.h.b16 %v1394
          %v2387 = vunpack.c.l.b16 %v1395
          %v2388 = vunpack.c.h.b16 %v1395
          %v2389 = vunpack.c.l.b16 %v1396
          %v2390 = vunpack.c.l.b16 %v1397
          %v2391 = vunpack.c.h.b16 %v1397
          %v2392 = vunpack.c.l.b16 %v1398
          %v2393 = vunpack.c.h.b16 %v1398
          %v2394 = vunpack.c.l.b16 %v1399
          %v2395 = vunpack.c.h.b16 %v1399
          %v2396 = vunpack.c.l.b16 %v1400
          %v2397 = vunpack.c.l.b16 %v1401
          %v2398 = vunpack.c.h.b16 %v1401
          %v2399 = vunpack.c.l.b16 %v1402
          %v2400 = vunpack.c.h.b16 %v1402
          %v2401 = vunpack.c.l.b16 %v1403
          %v2402 = vunpack.c.h.b16 %v1403
          %v2403 = vunpack.c.l.b16 %v1404
          %v2404 = vunpack.c.l.b16 %v1405
          %v2405 = vunpack.c.h.b16 %v1405
          %v2406 = vunpack.c.l.b16 %v1406
          %v2407 = vunpack.c.h.b16 %v1406
          %v2408 = vunpack.c.l.b16 %v1407
          %v2409 = vunpack.c.h.b16 %v1407
          %v2410 = vunpack.c.l.b16 %v1408
          %v2411 = vunpack.c.l.b16 %v1409
          %v2412 = vunpack.c.h.b16 %v1409
          %v2413 = vunpack.c.l.b16 %v1410
          %v2414 = vunpack.c.h.b16 %v1410
          %v2415 = vunpack.c.l.b16 %v1411
          %v2416 = vunpack.c.h.b16 %v1411
          %v2417 = vunpack.c.l.b16 %v1412
          %v2418 = vunpack.c.l.b16 %v1413
          %v2419 = vunpack.c.h.b16 %v1413
          %v2420 = vunpack.c.l.b16 %v1414
          %v2421 = vunpack.c.h.b16 %v1414
          %v2422 = vunpack.c.l.b16 %v1415
          %v2423 = vunpack.c.h.b16 %v1415
          %v2424 = vunpack.c.l.b16 %v1416
          %v2425 = vunpack.c.l.b16 %v1417
          %v2426 = vunpack.c.h.b16 %v1417
          %v2427 = vunpack.c.l.b16 %v1418
          %v2428 = vunpack.c.h.b16 %v1418
          %v2429 = vunpack.c.l.b16 %v1419
          %v2430 = vunpack.c.h.b16 %v1419
          %v2431 = vunpack.c.l.b16 %v1420
          %v2432 = vunpack.c.l.b16 %v1421
          %v2433 = vunpack.c.h.b16 %v1421
          %v2434 = vunpack.c.l.b16 %v1422
          %v2435 = vunpack.c.h.b16 %v1422
          %v2436 = vunpack.c.l.b16 %v1423
          %v2437 = vunpack.c.h.b16 %v1423
          %v2438 = vunpack.c.l.b16 %v1424
          %v2439 = vunpack.c.l.b16 %v1425
          %v2440 = vunpack.c.h.b16 %v1425
          %v2441 = vunpack.c.l.b16 %v1426
          %v2442 = vunpack.c.h.b16 %v1426
          %v2443 = vunpack.c.l.b16 %v1427
          %v2444 = vunpack.c.h.b16 %v1427
          %v2445 = vunpack.c.l.b16 %v1428
          %v2446 = vunpack.c.l.b16 %v1429
          %v2447 = vunpack.c.h.b16 %v1429
          %v2448 = vunpack.c.l.b16 %v1430
          %v2449 = vunpack.c.h.b16 %v1430
          %v2450 = vunpack.c.l.b16 %v1431
          %v2451 = vunpack.c.h.b16 %v1431
          %v2452 = vunpack.c.l.b16 %v1432
          %v2453 = vunpack.c.l.b16 %v1433
          %v2454 = vunpack.c.h.b16 %v1433
          %v2455 = vunpack.c.l.b16 %v1434
          %v2456 = vunpack.c.h.b16 %v1434
          %v2457 = vunpack.c.l.b16 %v1435
          %v2458 = vunpack.c.h.b16 %v1435
          %v2459 = vunpack.c.l.b16 %v1436
          %v2460 = vunpack.c.l.b16 %v1437
          %v2461 = vunpack.c.h.b16 %v1437
          %v2462 = vunpack.c.l.b16 %v1438
          %v2463 = vunpack.c.h.b16 %v1438
          %v2464 = vunpack.c.l.b16 %v1439
          %v2465 = vunpack.c.h.b16 %v1439
          %v2466 = vunpack.c.l.b16 %v1440
          %v2467 = vunpack.c.l.b16 %v1441
          %v2468 = vunpack.c.h.b16 %v1441
          %v2469 = vunpack.c.l.b16 %v1442
          %v2470 = vunpack.c.h.b16 %v1442
          %v2471 = vunpack.c.l.b16 %v1443
          %v2472 = vunpack.c.h.b16 %v1443
          %v2473 = vunpack.c.l.b16 %v1444
          %v2474 = vunpack.c.l.b16 %v1445
          %v2475 = vunpack.c.h.b16 %v1445
          %v2476 = vunpack.c.l.b16 %v1446
          %v2477 = vunpack.c.h.b16 %v1446
          %v2478 = vunpack.c.l.b16 %v1447
          %v2479 = vunpack.c.h.b16 %v1447
          %v2480 = vunpack.c.l.b16 %v1448
          %v2481 = vunpack.c.l.b16 %v1449
          %v2482 = vunpack.c.h.b16 %v1449
          %v2483 = vunpack.c.l.b16 %v1450
          %v2484 = vunpack.c.h.b16 %v1450
          %v2485 = vunpack.c.l.b16 %v1451
          %v2486 = vunpack.c.h.b16 %v1451
          %v2487 = vunpack.c.l.b16 %v1452
          %v2488 = vunpack.c.l.b16 %v1453
          %v2489 = vunpack.c.h.b16 %v1453
          %v2490 = vunpack.c.l.b16 %v1454
          %v2491 = vunpack.c.h.b16 %v1454
          %v2492 = vunpack.c.l.b16 %v1455
          %v2493 = vunpack.c.h.b16 %v1455
          %v2494 = vunpack.c.l.b16 %v1456
          %v2495 = vunpack.c.l.b16 %v1457
          %v2496 = vunpack.c.h.b16 %v1457
          %v2497 = vunpack.c.l.b16 %v1458
          %v2498 = vunpack.c.h.b16 %v1458
          %v2499 = vunpack.c.l.b16 %v1459
          %v2500 = vunpack.c.h.b16 %v1459
          %v2501 = vunpack.c.l.b16 %v1460
          %v2502 = vunpack.c.l.b16 %v1461
          %v2503 = vunpack.c.h.b16 %v1461
          %v2504 = vunpack.c.l.b16 %v1462
          %v2505 = vunpack.c.h.b16 %v1462
          %v2506 = vunpack.c.l.b16 %v1463
          %v2507 = vunpack.c.h.b16 %v1463
          %v2508 = vunpack.c.l.b16 %v1464
          %v2509 = vunpack.c.l.b16 %v1465
          %v2510 = vunpack.c.h.b16 %v1465
          %v2511 = vunpack.c.l.b16 %v1466
          %v2512 = vunpack.c.h.b16 %v1466
          %v2513 = vunpack.c.l.b16 %v1467
          %v2514 = vunpack.c.h.b16 %v1467
          %v2515 = vunpack.c.l.b16 %v1468
          %v2516 = vunpack.c.l.b16 %v1469
          %v2517 = vunpack.c.h.b16 %v1469
          %v2518 = vunpack.c.l.b16 %v1470
          %v2519 = vunpack.c.h.b16 %v1470
          %v2520 = vunpack.c.l.b16 %v1471
          %v2521 = vunpack.c.h.b16 %v1471
          %v2522 = vunpack.c.l.b16 %v1472
          %v2523 = vunpack.c.l.b16 %v1473
          %v2524 = vunpack.c.h.b16 %v1473
          %v2525 = vunpack.c.l.b16 %v1474
          %v2526 = vunpack.c.h.b16 %v1474
          %v2527 = vunpack.c.l.b16 %v1475
          %v2528 = vunpack.c.h.b16 %v1475
          %v2529 = vunpack.c.l.b16 %v1476
          %v2530 = vunpack.c.l.b16 %v1477
          %v2531 = vunpack.c.h.b16 %v1477
          %v2532 = vunpack.c.l.b16 %v1478
          %v2533 = vunpack.c.h.b16 %v1478
          %v2534 = vunpack.c.l.b16 %v1479
          %v2535 = vunpack.c.h.b16 %v1479
          %v2536 = vunpack.c.l.b16 %v1480
          %v2537 = vunpack.c.l.b16 %v1481
          %v2538 = vunpack.c.h.b16 %v1481
          %v2539 = vunpack.c.l.b16 %v1482
          %v2540 = vunpack.c.h.b16 %v1482
          %v2541 = vunpack.c.l.b16 %v1483
          %v2542 = vunpack.c.h.b16 %v1483
          %v2543 = vunpack.c.l.b16 %v1484
          %v2544 = vunpack.c.l.b16 %v1485
          %v2545 = vunpack.c.h.b16 %v1485
          %v2546 = vunpack.c.l.b16 %v1486
          %v2547 = vunpack.c.h.b16 %v1486
          %v2548 = vunpack.c.l.b16 %v1487
          %v2549 = vunpack.c.h.b16 %v1487
          %v2550 = vunpack.c.l.b16 %v1488
          %v2551 = vunpack.c.l.b16 %v1489
          %v2552 = vunpack.c.h.b16 %v1489
          %v2553 = vunpack.c.l.b16 %v1490
          %v2554 = vunpack.c.h.b16 %v1490
          %v2555 = vunpack.c.l.b16 %v1491
          %v2556 = vunpack.c.h.b16 %v1491
          %v2557 = vunpack.c.l.b16 %v1492
          %v2558 = vunpack.c.l.b16 %v1493
          %v2559 = vunpack.c.h.b16 %v1493
          %v2560 = vunpack.c.l.b16 %v1494
          %v2561 = vunpack.c.h.b16 %v1494
          %v2562 = vunpack.c.l.b16 %v1495
          %v2563 = vunpack.c.h.b16 %v1495
          %v2564 = vunpack.c.l.b16 %v1496
          %v2565 = vunpack.c.l.b16 %v1497
          %v2566 = vunpack.c.h.b16 %v1497
          %v2567 = vunpack.c.l.b16 %v1498
          %v2568 = vunpack.c.h.b16 %v1498
          %v2569 = vunpack.c.l.b16 %v1499
          %v2570 = vunpack.c.h.b16 %v1499
          %v2571 = vunpack.c.l.b16 %v1500
          %v2572 = vunpack.c.l.b16 %v1501
          %v2573 = vunpack.c.h.b16 %v1501
          %v2574 = vunpack.c.l.b16 %v1502
          %v2575 = vunpack.c.h.b16 %v1502
          %v2576 = vunpack.c.l.b16 %v1503
          %v2577 = vunpack.c.h.b16 %v1503
          %v2578 = vunpack.c.l.b16 %v1504
          %v2579 = vunpack.c.l.b16 %v1505
          %v2580 = vunpack.c.h.b16 %v1505
          %v2581 = vunpack.c.l.b16 %v1506
          %v2582 = vunpack.c.h.b16 %v1506
          %v2583 = vunpack.c.l.b16 %v1507
          %v2584 = vunpack.c.h.b16 %v1507
          %v2585 = vunpack.c.l.b16 %v1508
          %v2586 = vunpack.c.l.b16 %v1509
          %v2587 = vunpack.c.h.b16 %v1509
          %v2588 = vunpack.c.l.b16 %v1510
          %v2589 = vunpack.c.h.b16 %v1510
          %v2590 = vunpack.c.l.b16 %v1511
          %v2591 = vunpack.c.h.b16 %v1511
          %v2592 = vunpack.c.l.b16 %v1512
          %v2593 = vunpack.c.l.b16 %v1513
          %v2594 = vunpack.c.h.b16 %v1513
          %v2595 = vunpack.c.l.b16 %v1514
          %v2596 = vunpack.c.h.b16 %v1514
          %v2597 = vunpack.c.l.b16 %v1515
          %v2598 = vunpack.c.h.b16 %v1515
          %v2599 = vunpack.c.l.b16 %v1516
          %v2600 = vunpack.c.l.b16 %v1517
          %v2601 = vunpack.c.h.b16 %v1517
          %v2602 = vunpack.c.l.b16 %v1518
          %v2603 = vunpack.c.h.b16 %v1518
          %v2604 = vunpack.c.l.b16 %v1519
          %v2605 = vunpack.c.h.b16 %v1519
          %v2606 = vunpack.c.l.b16 %v1520
          %v2607 = vunpack.c.l.b16 %v1521
          %v2608 = vunpack.c.h.b16 %v1521
          %v2609 = vunpack.c.l.b16 %v1522
          %v2610 = vunpack.c.h.b16 %v1522
          %v2611 = vunpack.c.l.b16 %v1523
          %v2612 = vunpack.c.h.b16 %v1523
          %v2613 = vunpack.c.l.b16 %v1524
          %v2614 = vunpack.c.l.b16 %v1525
          %v2615 = vunpack.c.h.b16 %v1525
          %v2616 = vunpack.c.l.b16 %v1526
          %v2617 = vunpack.c.h.b16 %v1526
          %v2618 = vunpack.c.l.b16 %v1527
          %v2619 = vunpack.c.h.b16 %v1527
          %v2620 = vunpack.c.l.b16 %v1528
          %v2621 = vunpack.c.l.b16 %v1529
          %v2622 = vunpack.c.h.b16 %v1529
          %v2623 = vunpack.c.l.b16 %v1530
          %v2624 = vunpack.c.h.b16 %v1530
          %v2625 = vunpack.c.l.b16 %v1531
          %v2626 = vunpack.c.h.b16 %v1531
          %v2627 = vunpack.c.l.b16 %v1532
          %v2628 = vunpack.c.l.b16 %v1533
          %v2629 = vunpack.c.h.b16 %v1533
          %v2630 = vunpack.c.l.b16 %v1534
          %v2631 = vunpack.c.h.b16 %v1534
          %v2632 = vunpack.c.l.b16 %v1535
          %v2633 = vunpack.c.h.b16 %v1535
          %v2634 = vunpack.c.l.b16 %v1536
          %v2635 = vunpack.c.l.b16 %v1537
          %v2636 = vunpack.c.h.b16 %v1537
          %v2637 = vunpack.c.l.b16 %v1538
          %v2638 = vunpack.c.h.b16 %v1538
          %v2639 = vunpack.c.l.b16 %v1539
          %v2640 = vunpack.c.h.b16 %v1539
          %v2641 = vunpack.c.l.b16 %v1540
          %v2642 = vunpack.c.l.b16 %v1541
          %v2643 = vunpack.c.h.b16 %v1541
          %v2644 = vunpack.c.l.b16 %v1542
          %v2645 = vunpack.c.h.b16 %v1542
          %v2646 = vunpack.c.l.b16 %v1543
          %v2647 = vunpack.c.h.b16 %v1543
          %v2648 = vunpack.c.l.b16 %v1544
          %v2649 = vunpack.c.l.b16 %v1545
          %v2650 = vunpack.c.h.b16 %v1545
          %v2651 = vunpack.c.l.b16 %v1546
          %v2652 = vunpack.c.h.b16 %v1546
          %v2653 = vunpack.c.l.b16 %v1547
          %v2654 = vunpack.c.h.b16 %v1547
          %v2655 = vunpack.c.l.b16 %v1548
          %v2656 = vunpack.c.l.b16 %v1549
          %v2657 = vunpack.c.h.b16 %v1549
          %v2658 = vunpack.c.l.b16 %v1550
          %v2659 = vunpack.c.h.b16 %v1550
          %v2660 = vunpack.c.l.b16 %v1551
          %v2661 = vunpack.c.h.b16 %v1551
          %v2662 = vunpack.c.l.b16 %v1552
          %v2663 = vunpack.c.l.b16 %v1553
          %v2664 = vunpack.c.h.b16 %v1553
          %v2665 = vunpack.c.l.b16 %v1554
          %v2666 = vunpack.c.h.b16 %v1554
          %v2667 = vunpack.c.l.b16 %v1555
          %v2668 = vunpack.c.h.b16 %v1555
          %v2669 = vunpack.c.l.b16 %v1556
          %v2670 = vunpack.c.l.b16 %v1557
          %v2671 = vunpack.c.h.b16 %v1557
          %v2672 = vunpack.c.l.b16 %v1558
          %v2673 = vunpack.c.h.b16 %v1558
          %v2674 = vunpack.c.l.b16 %v1559
          %v2675 = vunpack.c.h.b16 %v1559
          %v2676 = vunpack.c.l.b16 %v1560
          %v2677 = vunpack.c.l.b16 %v1561
          %v2678 = vunpack.c.h.b16 %v1561
          %v2679 = vunpack.c.l.b16 %v1562
          %v2680 = vunpack.c.h.b16 %v1562
          %v2681 = vunpack.c.l.b16 %v1563
          %v2682 = vunpack.c.h.b16 %v1563
          %v2683 = vunpack.c.l.b16 %v1564
          %v2684 = vunpack.c.l.b16 %v1565
          %v2685 = vunpack.c.h.b16 %v1565
          %v2686 = vunpack.c.l.b16 %v1566
          %v2687 = vunpack.c.h.b16 %v1566
          %v2688 = vunpack.c.l.b16 %v1567
          %v2689 = vunpack.c.h.b16 %v1567
          %v2690 = vunpack.c.l.b16 %v1568
          %v2691 = vunpack.c.l.b16 %v1569
          %v2692 = vunpack.c.h.b16 %v1569
          %v2693 = vunpack.c.l.b16 %v1570
          %v2694 = vunpack.c.h.b16 %v1570
          %v2695 = vunpack.c.l.b16 %v1571
          %v2696 = vunpack.c.h.b16 %v1571
          %v2697 = vunpack.c.l.b16 %v1572
          %v2698 = vunpack.c.l.b16 %v1573
          %v2699 = vunpack.c.h.b16 %v1573
          %v2700 = vunpack.c.l.b16 %v1574
          %v2701 = vunpack.c.h.b16 %v1574
          %v2702 = vunpack.c.l.b16 %v1575
          %v2703 = vunpack.c.h.b16 %v1575
          %v2704 = vunpack.c.l.b16 %v1576
          %v2705 = vunpack.c.l.b16 %v1577
          %v2706 = vunpack.c.h.b16 %v1577
          %v2707 = vunpack.c.l.b16 %v1578
          %v2708 = vunpack.c.h.b16 %v1578
          %v2709 = vunpack.c.l.b16 %v1579
          %v2710 = vunpack.c.h.b16 %v1579
          %v2711 = vunpack.c.l.b16 %v1580
          %v2712 = vunpack.c.l.b16 %v1581
          %v2713 = vunpack.c.h.b16 %v1581
          %v2714 = vunpack.c.l.b16 %v1582
          %v2715 = vunpack.c.h.b16 %v1582
          %v2716 = vunpack.c.l.b16 %v1583
          %v2717 = vunpack.c.h.b16 %v1583
          %v2718 = vunpack.c.l.b16 %v1584
          %v2719 = vunpack.c.l.b16 %v1585
          %v2720 = vunpack.c.h.b16 %v1585
          %v2721 = vunpack.c.l.b16 %v1586
          %v2722 = vunpack.c.h.b16 %v1586
          %v2723 = vunpack.c.l.b16 %v1587
          %v2724 = vunpack.c.h.b16 %v1587
          %v2725 = vunpack.c.l.b16 %v1588
          %v2726 = vunpack.c.l.b16 %v1589
          %v2727 = vunpack.c.h.b16 %v1589
          %v2728 = vunpack.c.l.b16 %v1590
          %v2729 = vunpack.c.h.b16 %v1590
          %v2730 = vunpack.c.l.b16 %v1591
          %v2731 = vunpack.c.h.b16 %v1591
          %v2732 = vunpack.c.l.b16 %v1592
          %v2733 = vunpack.c.l.b16 %v1593
          %v2734 = vunpack.c.h.b16 %v1593
          %v2735 = vunpack.c.l.b16 %v1594
          %v2736 = vunpack.c.h.b16 %v1594
          %v2737 = vunpack.c.l.b16 %v1595
          %v2738 = vunpack.c.h.b16 %v1595
          %v2739 = vunpack.c.l.b16 %v1596
          %v2740 = vunpack.c.l.b16 %v1597
          %v2741 = vunpack.c.h.b16 %v1597
          %v2742 = vunpack.c.l.b16 %v1598
          %v2743 = vunpack.c.h.b16 %v1598
          %v2744 = vunpack.c.l.b16 %v1599
          %v2745 = vunpack.c.h.b16 %v1599
          %v2746 = vunpack.c.l.b16 %v1600
          %v2747 = vunpack.c.l.b16 %v1601
          %v2748 = vunpack.c.h.b16 %v1601
          %v2749 = vunpack.c.l.b16 %v1602
          %v2750 = vunpack.c.h.b16 %v1602
          %v2751 = vunpack.c.l.b16 %v1603
          %v2752 = vunpack.c.h.b16 %v1603
          %v2753 = vunpack.c.l.b16 %v1604
          %v2754 = vunpack.c.l.b16 %v1605
          %v2755 = vunpack.c.h.b16 %v1605
          %v2756 = vunpack.c.l.b16 %v1606
          %v2757 = vunpack.c.h.b16 %v1606
          %v2758 = vunpack.c.l.b16 %v1607
          %v2759 = vunpack.c.h.b16 %v1607
          %v2760 = vunpack.c.l.b16 %v1608
          %v2761 = vunpack.c.l.b16 %v1609
          %v2762 = vunpack.c.h.b16 %v1609
          %v2763 = vunpack.c.l.b16 %v1610
          %v2764 = vunpack.c.h.b16 %v1610
          %v2765 = vunpack.c.l.b16 %v1611
          %v2766 = vunpack.c.h.b16 %v1611
          %v2767 = vunpack.c.l.b16 %v1612
          %v2768 = vunpack.c.l.b16 %v1613
          %v2769 = vunpack.c.h.b16 %v1613
          %v2770 = vunpack.c.l.b16 %v1614
          %v2771 = vunpack.c.h.b16 %v1614
          %v2772 = vunpack.c.l.b16 %v1615
          %v2773 = vunpack.c.h.b16 %v1615
          %v2774 = vunpack.c.l.b16 %v1616
          %v2775 = vunpack.c.l.b16 %v1617
          %v2776 = vunpack.c.h.b16 %v1617
          %v2777 = vunpack.c.l.b16 %v1618
          %v2778 = vunpack.c.h.b16 %v1618
          %v2779 = vunpack.c.l.b16 %v1619
          %v2780 = vunpack.c.h.b16 %v1619
          %v2781 = vunpack.c.l.b16 %v1620
          %v2782 = vunpack.c.l.b16 %v1621
          %v2783 = vunpack.c.h.b16 %v1621
          %v2784 = vunpack.c.l.b16 %v1622
          %v2785 = vunpack.c.h.b16 %v1622
          %v2786 = vunpack.c.l.b16 %v1623
          %v2787 = vunpack.c.h.b16 %v1623
          %v2788 = vunpack.c.l.b16 %v1624
          %v2789 = vunpack.c.l.b16 %v1625
          %v2790 = vunpack.c.h.b16 %v1625
          %v2791 = vunpack.c.l.b16 %v1626
          %v2792 = vunpack.c.h.b16 %v1626
          %v2793 = vunpack.c.l.b16 %v1627
          %v2794 = vunpack.c.h.b16 %v1627
          %v2795 = vunpack.c.l.b16 %v1628
          %v2796 = vunpack.c.l.b16 %v1629
          %v2797 = vunpack.c.h.b16 %v1629
          %v2798 = vunpack.c.l.b16 %v1630
          %v2799 = vunpack.c.h.b16 %v1630
          %v2800 = vunpack.c.l.b16 %v1631
          %v2801 = vunpack.c.h.b16 %v1631
          %v2802 = vunpack.c.l.b16 %v1632
          %v2803 = vunpack.c.l.b16 %v1633
          %v2804 = vunpack.c.h.b16 %v1633
          %v2805 = vunpack.c.l.b16 %v1634
          %v2806 = vunpack.c.h.b16 %v1634
          %v2807 = vunpack.c.l.b16 %v1635
          %v2808 = vunpack.c.h.b16 %v1635
          %v2809 = vunpack.c.l.b16 %v1636
          %v2810 = vunpack.c.l.b16 %v1637
          %v2811 = vunpack.c.h.b16 %v1637
          %v2812 = vunpack.c.l.b16 %v1638
          %v2813 = vunpack.c.h.b16 %v1638
          %v2814 = vunpack.c.l.b16 %v1639
          %v2815 = vunpack.c.h.b16 %v1639
          %v2816 = vunpack.c.l.b16 %v1640
          %v2817 = vunpack.c.l.b16 %v1641
          %v2818 = vunpack.c.h.b16 %v1641
          %v2819 = vunpack.c.l.b16 %v1642
          %v2820 = vunpack.c.h.b16 %v1642
          %v2821 = vunpack.c.l.b16 %v1643
          %v2822 = vunpack.c.h.b16 %v1643
          %v2823 = vunpack.c.l.b16 %v1644
          %v2824 = vunpack.c.l.b16 %v1645
          %v2825 = vunpack.c.h.b16 %v1645
          %v2826 = vunpack.c.l.b16 %v1646
          %v2827 = vunpack.c.h.b16 %v1646
          %v2828 = vunpack.c.l.b16 %v1647
          %v2829 = vunpack.c.h.b16 %v1647
          %v2830 = vunpack.c.l.b16 %v1648
          %v2831 = vunpack.c.l.b16 %v1649
          %v2832 = vunpack.c.h.b16 %v1649
          %v2833 = vunpack.c.l.b16 %v1650
          %v2834 = vunpack.c.h.b16 %v1650
          %v2835 = vunpack.c.l.b16 %v1651
          %v2836 = vunpack.c.h.b16 %v1651
          %v2837 = vunpack.c.l.b16 %v1652
          %v2838 = vunpack.c.l.b16 %v1653
          %v2839 = vunpack.c.h.b16 %v1653
          %v2840 = vunpack.c.l.b16 %v1654
          %v2841 = vunpack.c.h.b16 %v1654
          %v2842 = vunpack.c.l.b16 %v1655
          %v2843 = vunpack.c.h.b16 %v1655
          %v2844 = vunpack.c.l.b16 %v1656
          %v2845 = vunpack.c.l.b16 %v1657
          %v2846 = vunpack.c.h.b16 %v1657
          %v2847 = vunpack.c.l.b16 %v1658
          %v2848 = vunpack.c.h.b16 %v1658
          %v2849 = vunpack.c.l.b16 %v1659
          %v2850 = vunpack.c.h.b16 %v1659
          %v2851 = vunpack.c.l.b16 %v1660
          %v2852 = vunpack.c.l.b16 %v1661
          %v2853 = vunpack.c.h.b16 %v1661
          %v2854 = vunpack.c.l.b16 %v1662
          %v2855 = vunpack.c.h.b16 %v1662
          %v2856 = vunpack.c.l.b16 %v1663
          %v2857 = vunpack.c.h.b16 %v1663
          %v2858 = vunpack.c.l.b16 %v1664
          %v2859 = vunpack.c.l.b16 %v1665
          %v2860 = vunpack.c.h.b16 %v1665
          %v2861 = vunpack.c.l.b16 %v1666
          %v2862 = vunpack.c.h.b16 %v1666
          %v2863 = vunpack.c.l.b16 %v1667
          %v2864 = vunpack.c.h.b16 %v1667
          %v2865 = vunpack.c.l.b16 %v1668
          %v2866 = vunpack.c.l.b16 %v1669
          %v2867 = vunpack.c.h.b16 %v1669
          %v2868 = vunpack.c.l.b16 %v1670
          %v2869 = vunpack.c.h.b16 %v1670
          %v2870 = vunpack.c.l.b16 %v1671
          %v2871 = vunpack.c.h.b16 %v1671
          %v2872 = vunpack.c.l.b16 %v1672
          %v2873 = vunpack.c.l.b16 %v1673
          %v2874 = vunpack.c.h.b16 %v1673
          %v2875 = vunpack.c.l.b16 %v1674
          %v2876 = vunpack.c.h.b16 %v1674
          %v2877 = vunpack.c.l.b16 %v1675
          %v2878 = vunpack.c.h.b16 %v1675
          %v2879 = vunpack.c.l.b16 %v1676
          %v2880 = vunpack.c.l.b16 %v1677
          %v2881 = vunpack.c.h.b16 %v1677
          %v2882 = vunpack.c.l.b16 %v1678
          %v2883 = vunpack.c.h.b16 %v1678
          %v2884 = vunpack.c.l.b16 %v1679
          %v2885 = vunpack.c.h.b16 %v1679
          %v2886 = vunpack.c.l.b16 %v1680
          %v2887 = vunpack.c.l.b16 %v1681
          %v2888 = vunpack.c.h.b16 %v1681
          %v2889 = vunpack.c.l.b16 %v1682
          %v2890 = vunpack.c.h.b16 %v1682
          %v2891 = vunpack.c.l.b16 %v1683
          %v2892 = vunpack.c.h.b16 %v1683
          %v2893 = vunpack.c.l.b16 %v1684
          %v2894 = vunpack.c.l.b16 %v1685
          %v2895 = vunpack.c.h.b16 %v1685
          %v2896 = vunpack.c.l.b16 %v1686
          %v2897 = vunpack.c.h.b16 %v1686
          %v2898 = vunpack.c.l.b16 %v1687
          %v2899 = vunpack.c.h.b16 %v1687
          %v2900 = vunpack.c.l.b16 %v1688
          %v2901 = vunpack.c.l.b16 %v1689
          %v2902 = vunpack.c.h.b16 %v1689
          %v2903 = vunpack.c.l.b16 %v1690
          %v2904 = vunpack.c.h.b16 %v1690
          %v2905 = vunpack.c.l.b16 %v1691
          %v2906 = vunpack.c.h.b16 %v1691
          %v2907 = vunpack.c.l.b16 %v1692
          %v2908 = vunpack.c.l.b16 %v1693
          %v2909 = vunpack.c.h.b16 %v1693
          %v2910 = vunpack.c.l.b16 %v1694
          %v2911 = vunpack.c.h.b16 %v1694
          %v2912 = vunpack.c.l.b16 %v1695
          %v2913 = vunpack.c.h.b16 %v1695
          %v2914 = vunpack.c.l.b16 %v1696
          %v2915 = vunpack.c.l.b16 %v1697
          %v2916 = vunpack.c.h.b16 %v1697
          %v2917 = vunpack.c.l.b16 %v1698
          %v2918 = vunpack.c.h.b16 %v1698
          %v2919 = vunpack.c.l.b16 %v1699
          %v2920 = vunpack.c.h.b16 %v1699
          %v2921 = vunpack.c.l.b16 %v1700
          %v2922 = vunpack.c.l.b16 %v1701
          %v2923 = vunpack.c.h.b16 %v1701
          %v2924 = vunpack.c.l.b16 %v1702
          %v2925 = vunpack.c.h.b16 %v1702
          %v2926 = vunpack.c.l.b16 %v1703
          %v2927 = vunpack.c.h.b16 %v1703
          %v2928 = vunpack.c.l.b16 %v1704
          %v2929 = vunpack.c.l.b16 %v1705
          %v2930 = vunpack.c.h.b16 %v1705
          %v2931 = vunpack.c.l.b16 %v1706
          %v2932 = vunpack.c.h.b16 %v1706
          %v2933 = vunpack.c.l.b16 %v1707
          %v2934 = vunpack.c.h.b16 %v1707
          %v2935 = vunpack.c.l.b16 %v1708
          %v2936 = vunpack.c.l.b16 %v1709
          %v2937 = vunpack.c.h.b16 %v1709
          %v2938 = vunpack.c.l.b16 %v1710
          %v2939 = vunpack.c.h.b16 %v1710
          %v2940 = vunpack.c.l.b16 %v1711
          %v2941 = vunpack.c.h.b16 %v1711
          %v2942 = vunpack.c.l.b16 %v1712
          %v2943 = vunpack.c.l.b16 %v1713
          %v2944 = vunpack.c.h.b16 %v1713
          %v2945 = vunpack.c.l.b16 %v1714
          %v2946 = vunpack.c.h.b16 %v1714
          %v2947 = vunpack.c.l.b16 %v1715
          %v2948 = vunpack.c.h.b16 %v1715
          %v2949 = vunpack.c.l.b16 %v1716
          %v2950 = vunpack.c.l.b16 %v1717
          %v2951 = vunpack.c.h.b16 %v1717
          %v2952 = vunpack.c.l.b16 %v1718
          %v2953 = vunpack.c.h.b16 %v1718
          %v2954 = vunpack.c.l.b16 %v1719
          %v2955 = vunpack.c.h.b16 %v1719
          %v2956 = vunpack.c.l.b16 %v1720
          %v2957 = vunpack.c.l.b16 %v1721
          %v2958 = vunpack.c.h.b16 %v1721
          %v2959 = vunpack.c.l.b16 %v1722
          %v2960 = vunpack.c.h.b16 %v1722
          %v2961 = vunpack.c.l.b16 %v1723
          %v2962 = vunpack.c.h.b16 %v1723
          %v2963 = vunpack.c.l.b16 %v1724
          %v2964 = vunpack.c.l.b16 %v1725
          %v2965 = vunpack.c.h.b16 %v1725
          %v2966 = vunpack.c.l.b16 %v1726
          %v2967 = vunpack.c.h.b16 %v1726
          %v2968 = vunpack.c.l.b16 %v1727
          %v2969 = vunpack.c.h.b16 %v1727
          %v2970 = vunpack.c.l.b16 %v1728
          %v2971 = vunpack.c.l.b16 %v1729
          %v2972 = vunpack.c.h.b16 %v1729
          %v2973 = vunpack.c.l.b16 %v1730
          %v2974 = vunpack.c.h.b16 %v1730
          %v2975 = vunpack.c.l.b16 %v1731
          %v2976 = vunpack.c.h.b16 %v1731
          %v2977 = vunpack.c.l.b16 %v1732
          %v2978 = vunpack.c.l.b16 %v1733
          %v2979 = vunpack.c.h.b16 %v1733
          %v2980 = vunpack.c.l.b16 %v1734
          %v2981 = vunpack.c.h.b16 %v1734
          %v2982 = vunpack.c.l.b16 %v1735
          %v2983 = vunpack.c.h.b16 %v1735
          %v2984 = vunpack.c.l.b16 %v1736
          %v2985 = vunpack.c.l.b16 %v1737
          %v2986 = vunpack.c.h.b16 %v1737
          %v2987 = vunpack.c.l.b16 %v1738
          %v2988 = vunpack.c.h.b16 %v1738
          %v2989 = vunpack.c.l.b16 %v1739
          %v2990 = vunpack.c.h.b16 %v1739
          %v2991 = vunpack.c.l.b16 %v1740
          %v2992 = vunpack.c.l.b16 %v1741
          %v2993 = vunpack.c.h.b16 %v1741
          %v2994 = vunpack.c.l.b16 %v1742
          %v2995 = vunpack.c.h.b16 %v1742
          %v2996 = vunpack.c.l.b16 %v1743
          %v2997 = vunpack.c.h.b16 %v1743
          %v2998 = vunpack.c.l.b16 %v1744
          %v2999 = vunpack.c.l.b16 %v1745
          %v3000 = vunpack.c.h.b16 %v1745
          %v3001 = vunpack.c.l.b16 %v1746
          %v3002 = vunpack.c.h.b16 %v1746
          %v3003 = vunpack.c.l.b16 %v1747
          %v3004 = vunpack.c.h.b16 %v1747
          %v3005 = vunpack.c.l.b16 %v1748
          %v3006 = vunpack.c.l.b16 %v1749
          %v3007 = vunpack.c.h.b16 %v1749
          %v3008 = vunpack.c.l.b16 %v1750
          %v3009 = vunpack.c.h.b16 %v1750
          %v3010 = vunpack.c.l.b16 %v1751
          %v3011 = vunpack.c.h.b16 %v1751
          %v3012 = vunpack.c.l.b16 %v1752
          %v3013 = vunpack.c.l.b16 %v1753
          %v3014 = vunpack.c.h.b16 %v1753
          %v3015 = vunpack.c.l.b16 %v1754
          %v3016 = vunpack.c.h.b16 %v1754
          %v3017 = vunpack.c.l.b16 %v1755
          %v3018 = vunpack.c.h.b16 %v1755
          %v3019 = vunpack.c.l.b16 %v1756
          %v3020 = vunpack.c.l.b16 %v1757
          %v3021 = vunpack.c.h.b16 %v1757
          %v3022 = vunpack.c.l.b16 %v1758
          %v3023 = vunpack.c.h.b16 %v1758
          %v3024 = vunpack.c.l.b16 %v1759
          %v3025 = vunpack.c.h.b16 %v1759
          %v3026 = vunpack.c.l.b16 %v1760
          %v3027 = vunpack.c.l.b16 %v1761
          %v3028 = vunpack.c.h.b16 %v1761
          %v3029 = vunpack.c.l.b16 %v1762
          %v3030 = vunpack.c.h.b16 %v1762
          %v3031 = vunpack.c.l.b16 %v1763
          %v3032 = vunpack.c.h.b16 %v1763
          %v3033 = vunpack.c.l.b16 %v1764
          %v3034 = vpack.c.b16 %v2257, %v2250
          %v3035 = vpack.c.b16 %v2258, %v2251
          %v3036 = vpack.c.b16 %v2259, %v2252
          %v3037 = vpack.c.b16 %v2260, %v2253
          %v3038 = vpack.c.b16 %v2261, %v2254
          %v3039 = vpack.c.b16 %v2262, %v2255
          %v3040 = vpack.c.b16 %v2263, %v2256
          %v3041 = vpack.c.b16 %v2271, %v2264
          %v3042 = vpack.c.b16 %v2272, %v2265
          %v3043 = vpack.c.b16 %v2273, %v2266
          %v3044 = vpack.c.b16 %v2274, %v2267
          %v3045 = vpack.c.b16 %v2275, %v2268
          %v3046 = vpack.c.b16 %v2276, %v2269
          %v3047 = vpack.c.b16 %v2277, %v2270
          %v3048 = vpack.c.b16 %v2285, %v2278
          %v3049 = vpack.c.b16 %v2286, %v2279
          %v3050 = vpack.c.b16 %v2287, %v2280
          %v3051 = vpack.c.b16 %v2288, %v2281
          %v3052 = vpack.c.b16 %v2289, %v2282
          %v3053 = vpack.c.b16 %v2290, %v2283
          %v3054 = vpack.c.b16 %v2291, %v2284
          %v3055 = vpack.c.b16 %v2299, %v2292
          %v3056 = vpack.c.b16 %v2300, %v2293
          %v3057 = vpack.c.b16 %v2301, %v2294
          %v3058 = vpack.c.b16 %v2302, %v2295
          %v3059 = vpack.c.b16 %v2303, %v2296
          %v3060 = vpack.c.b16 %v2304, %v2297
          %v3061 = vpack.c.b16 %v2305, %v2298
          %v3062 = vpack.c.b16 %v2313, %v2306
          %v3063 = vpack.c.b16 %v2314, %v2307
          %v3064 = vpack.c.b16 %v2315, %v2308
          %v3065 = vpack.c.b16 %v2316, %v2309
          %v3066 = vpack.c.b16 %v2317, %v2310
          %v3067 = vpack.c.b16 %v2318, %v2311
          %v3068 = vpack.c.b16 %v2319, %v2312
          %v3069 = vpack.c.b16 %v2327, %v2320
          %v3070 = vpack.c.b16 %v2328, %v2321
          %v3071 = vpack.c.b16 %v2329, %v2322
          %v3072 = vpack.c.b16 %v2330, %v2323
          %v3073 = vpack.c.b16 %v2331, %v2324
          %v3074 = vpack.c.b16 %v2332, %v2325
          %v3075 = vpack.c.b16 %v2333, %v2326
          %v3076 = vpack.c.b16 %v2341, %v2334
          %v3077 = vpack.c.b16 %v2342, %v2335
          %v3078 = vpack.c.b16 %v2343, %v2336
          %v3079 = vpack.c.b16 %v2344, %v2337
          %v3080 = vpack.c.b16 %v2345, %v2338
          %v3081 = vpack.c.b16 %v2346, %v2339
          %v3082 = vpack.c.b16 %v2347, %v2340
          %v3083 = vpack.c.b16 %v2355, %v2348
          %v3084 = vpack.c.b16 %v2356, %v2349
          %v3085 = vpack.c.b16 %v2357, %v2350
          %v3086 = vpack.c.b16 %v2358, %v2351
          %v3087 = vpack.c.b16 %v2359, %v2352
          %v3088 = vpack.c.b16 %v2360, %v2353
          %v3089 = vpack.c.b16 %v2361, %v2354
          %v3090 = vpack.c.b16 %v2369, %v2362
          %v3091 = vpack.c.b16 %v2370, %v2363
          %v3092 = vpack.c.b16 %v2371, %v2364
          %v3093 = vpack.c.b16 %v2372, %v2365
          %v3094 = vpack.c.b16 %v2373, %v2366
          %v3095 = vpack.c.b16 %v2374, %v2367
          %v3096 = vpack.c.b16 %v2375, %v2368
          %v3097 = vpack.c.b16 %v2383, %v2376
          %v3098 = vpack.c.b16 %v2384, %v2377
          %v3099 = vpack.c.b16 %v2385, %v2378
          %v3100 = vpack.c.b16 %v2386, %v2379
          %v3101 = vpack.c.b16 %v2387, %v2380
          %v3102 = vpack.c.b16 %v2388, %v2381
          %v3103 = vpack.c.b16 %v2389, %v2382
          %v3104 = vpack.c.b16 %v2397, %v2390
          %v3105 = vpack.c.b16 %v2398, %v2391
          %v3106 = vpack.c.b16 %v2399, %v2392
          %v3107 = vpack.c.b16 %v2400, %v2393
          %v3108 = vpack.c.b16 %v2401, %v2394
          %v3109 = vpack.c.b16 %v2402, %v2395
          %v3110 = vpack.c.b16 %v2403, %v2396
          %v3111 = vpack.c.b16 %v2411, %v2404
          %v3112 = vpack.c.b16 %v2412, %v2405
          %v3113 = vpack.c.b16 %v2413, %v2406
          %v3114 = vpack.c.b16 %v2414, %v2407
          %v3115 = vpack.c.b16 %v2415, %v2408
          %v3116 = vpack.c.b16 %v2416, %v2409
          %v3117 = vpack.c.b16 %v2417, %v2410
          %v3118 = vpack.c.b16 %v2425, %v2418
          %v3119 = vpack.c.b16 %v2426, %v2419
          %v3120 = vpack.c.b16 %v2427, %v2420
          %v3121 = vpack.c.b16 %v2428, %v2421
          %v3122 = vpack.c.b16 %v2429, %v2422
          %v3123 = vpack.c.b16 %v2430, %v2423
          %v3124 = vpack.c.b16 %v2431, %v2424
          %v3125 = vpack.c.b16 %v2439, %v2432
          %v3126 = vpack.c.b16 %v2440, %v2433
          %v3127 = vpack.c.b16 %v2441, %v2434
          %v3128 = vpack.c.b16 %v2442, %v2435
          %v3129 = vpack.c.b16 %v2443, %v2436
          %v3130 = vpack.c.b16 %v2444, %v2437
          %v3131 = vpack.c.b16 %v2445, %v2438
          %v3132 = vpack.c.b16 %v2453, %v2446
          %v3133 = vpack.c.b16 %v2454, %v2447
          %v3134 = vpack.c.b16 %v2455, %v2448
          %v3135 = vpack.c.b16 %v2456, %v2449
          %v3136 = vpack.c.b16 %v2457, %v2450
          %v3137 = vpack.c.b16 %v2458, %v2451
          %v3138 = vpack.c.b16 %v2459, %v2452
          %v3139 = vpack.c.b16 %v2467, %v2460
          %v3140 = vpack.c.b16 %v2468, %v2461
          %v3141 = vpack.c.b16 %v2469, %v2462
          %v3142 = vpack.c.b16 %v2470, %v2463
          %v3143 = vpack.c.b16 %v2471, %v2464
          %v3144 = vpack.c.b16 %v2472, %v2465
          %v3145 = vpack.c.b16 %v2473, %v2466
          %v3146 = vpack.c.b16 %v2481, %v2474
          %v3147 = vpack.c.b16 %v2482, %v2475
          %v3148 = vpack.c.b16 %v2483, %v2476
          %v3149 = vpack.c.b16 %v2484, %v2477
          %v3150 = vpack.c.b16 %v2485, %v2478
          %v3151 = vpack.c.b16 %v2486, %v2479
          %v3152 = vpack.c.b16 %v2487, %v2480
          %v3153 = vpack.c.b16 %v2495, %v2488
          %v3154 = vpack.c.b16 %v2496, %v2489
          %v3155 = vpack.c.b16 %v2497, %v2490
          %v3156 = vpack.c.b16 %v2498, %v2491
          %v3157 = vpack.c.b16 %v2499, %v2492
          %v3158 = vpack.c.b16 %v2500, %v2493
          %v3159 = vpack.c.b16 %v2501, %v2494
          %v3160 = vpack.c.b16 %v2509, %v2502
          %v3161 = vpack.c.b16 %v2510, %v2503
          %v3162 = vpack.c.b16 %v2511, %v2504
          %v3163 = vpack.c.b16 %v2512, %v2505
          %v3164 = vpack.c.b16 %v2513, %v2506
          %v3165 = vpack.c.b16 %v2514, %v2507
          %v3166 = vpack.c.b16 %v2515, %v2508
          %v3167 = vpack.c.b16 %v2523, %v2516
          %v3168 = vpack.c.b16 %v2524, %v2517
          %v3169 = vpack.c.b16 %v2525, %v2518
          %v3170 = vpack.c.b16 %v2526, %v2519
          %v3171 = vpack.c.b16 %v2527, %v2520
          %v3172 = vpack.c.b16 %v2528, %v2521
          %v3173 = vpack.c.b16 %v2529, %v2522
          %v3174 = vpack.c.b16 %v2537, %v2530
          %v3175 = vpack.c.b16 %v2538, %v2531
          %v3176 = vpack.c.b16 %v2539, %v2532
          %v3177 = vpack.c.b16 %v2540, %v2533
          %v3178 = vpack.c.b16 %v2541, %v2534
          %v3179 = vpack.c.b16 %v2542, %v2535
          %v3180 = vpack.c.b16 %v2543, %v2536
          %v3181 = vpack.c.b16 %v2551, %v2544
          %v3182 = vpack.c.b16 %v2552, %v2545
          %v3183 = vpack.c.b16 %v2553, %v2546
          %v3184 = vpack.c.b16 %v2554, %v2547
          %v3185 = vpack.c.b16 %v2555, %v2548
          %v3186 = vpack.c.b16 %v2556, %v2549
          %v3187 = vpack.c.b16 %v2557, %v2550
          %v3188 = vpack.c.b16 %v2565, %v2558
          %v3189 = vpack.c.b16 %v2566, %v2559
          %v3190 = vpack.c.b16 %v2567, %v2560
          %v3191 = vpack.c.b16 %v2568, %v2561
          %v3192 = vpack.c.b16 %v2569, %v2562
          %v3193 = vpack.c.b16 %v2570, %v2563
          %v3194 = vpack.c.b16 %v2571, %v2564
          %v3195 = vpack.c.b16 %v2579, %v2572
          %v3196 = vpack.c.b16 %v2580, %v2573
          %v3197 = vpack.c.b16 %v2581, %v2574
          %v3198 = vpack.c.b16 %v2582, %v2575
          %v3199 = vpack.c.b16 %v2583, %v2576
          %v3200 = vpack.c.b16 %v2584, %v2577
          %v3201 = vpack.c.b16 %v2585, %v2578
          %v3202 = vpack.c.b16 %v2593, %v2586
          %v3203 = vpack.c.b16 %v2594, %v2587
          %v3204 = vpack.c.b16 %v2595, %v2588
          %v3205 = vpack.c.b16 %v2596, %v2589
          %v3206 = vpack.c.b16 %v2597, %v2590
          %v3207 = vpack.c.b16 %v2598, %v2591
          %v3208 = vpack.c.b16 %v2599, %v2592
          %v3209 = vpack.c.b16 %v2607, %v2600
          %v3210 = vpack.c.b16 %v2608, %v2601
          %v3211 = vpack.c.b16 %v2609, %v2602
          %v3212 = vpack.c.b16 %v2610, %v2603
          %v3213 = vpack.c.b16 %v2611, %v2604
          %v3214 = vpack.c.b16 %v2612, %v2605
          %v3215 = vpack.c.b16 %v2613, %v2606
          %v3216 = vpack.c.b16 %v2621, %v2614
          %v3217 = vpack.c.b16 %v2622, %v2615
          %v3218 = vpack.c.b16 %v2623, %v2616
          %v3219 = vpack.c.b16 %v2624, %v2617
          %v3220 = vpack.c.b16 %v2625, %v2618
          %v3221 = vpack.c.b16 %v2626, %v2619
          %v3222 = vpack.c.b16 %v2627, %v2620
          %v3223 = vpack.c.b16 %v2635, %v2628
          %v3224 = vpack.c.b16 %v2636, %v2629
          %v3225 = vpack.c.b16 %v2637, %v2630
          %v3226 = vpack.c.b16 %v2638, %v2631
          %v3227 = vpack.c.b16 %v2639, %v2632
          %v3228 = vpack.c.b16 %v2640, %v2633
          %v3229 = vpack.c.b16 %v2641, %v2634
          %v3230 = vpack.c.b16 %v2649, %v2642
          %v3231 = vpack.c.b16 %v2650, %v2643
          %v3232 = vpack.c.b16 %v2651, %v2644
          %v3233 = vpack.c.b16 %v2652, %v2645
          %v3234 = vpack.c.b16 %v2653, %v2646
          %v3235 = vpack.c.b16 %v2654, %v2647
          %v3236 = vpack.c.b16 %v2655, %v2648
          %v3237 = vpack.c.b16 %v2663, %v2656
          %v3238 = vpack.c.b16 %v2664, %v2657
          %v3239 = vpack.c.b16 %v2665, %v2658
          %v3240 = vpack.c.b16 %v2666, %v2659
          %v3241 = vpack.c.b16 %v2667, %v2660
          %v3242 = vpack.c.b16 %v2668, %v2661
          %v3243 = vpack.c.b16 %v2669, %v2662
          %v3244 = vpack.c.b16 %v2677, %v2670
          %v3245 = vpack.c.b16 %v2678, %v2671
          %v3246 = vpack.c.b16 %v2679, %v2672
          %v3247 = vpack.c.b16 %v2680, %v2673
          %v3248 = vpack.c.b16 %v2681, %v2674
          %v3249 = vpack.c.b16 %v2682, %v2675
          %v3250 = vpack.c.b16 %v2683, %v2676
          %v3251 = vpack.c.b16 %v2691, %v2684
          %v3252 = vpack.c.b16 %v2692, %v2685
          %v3253 = vpack.c.b16 %v2693, %v2686
          %v3254 = vpack.c.b16 %v2694, %v2687
          %v3255 = vpack.c.b16 %v2695, %v2688
          %v3256 = vpack.c.b16 %v2696, %v2689
          %v3257 = vpack.c.b16 %v2697, %v2690
          %v3258 = vpack.c.b16 %v2705, %v2698
          %v3259 = vpack.c.b16 %v2706, %v2699
          %v3260 = vpack.c.b16 %v2707, %v2700
          %v3261 = vpack.c.b16 %v2708, %v2701
          %v3262 = vpack.c.b16 %v2709, %v2702
          %v3263 = vpack.c.b16 %v2710, %v2703
          %v3264 = vpack.c.b16 %v2711, %v2704
          %v3265 = vpack.c.b16 %v2719, %v2712
          %v3266 = vpack.c.b16 %v2720, %v2713
          %v3267 = vpack.c.b16 %v2721, %v2714
          %v3268 = vpack.c.b16 %v2722, %v2715
          %v3269 = vpack.c.b16 %v2723, %v2716
          %v3270 = vpack.c.b16 %v2724, %v2717
          %v3271 = vpack.c.b16 %v2725, %v2718
          %v3272 = vpack.c.b16 %v2733, %v2726
          %v3273 = vpack.c.b16 %v2734, %v2727
          %v3274 = vpack.c.b16 %v2735, %v2728
          %v3275 = vpack.c.b16 %v2736, %v2729
          %v3276 = vpack.c.b16 %v2737, %v2730
          %v3277 = vpack.c.b16 %v2738, %v2731
          %v3278 = vpack.c.b16 %v2739, %v2732
          %v3279 = vpack.c.b16 %v2747, %v2740
          %v3280 = vpack.c.b16 %v2748, %v2741
          %v3281 = vpack.c.b16 %v2749, %v2742
          %v3282 = vpack.c.b16 %v2750, %v2743
          %v3283 = vpack.c.b16 %v2751, %v2744
          %v3284 = vpack.c.b16 %v2752, %v2745
          %v3285 = vpack.c.b16 %v2753, %v2746
          %v3286 = vpack.c.b16 %v2761, %v2754
          %v3287 = vpack.c.b16 %v2762, %v2755
          %v3288 = vpack.c.b16 %v2763, %v2756
          %v3289 = vpack.c.b16 %v2764, %v2757
          %v3290 = vpack.c.b16 %v2765, %v2758
          %v3291 = vpack.c.b16 %v2766, %v2759
          %v3292 = vpack.c.b16 %v2767, %v2760
          %v3293 = vpack.c.b16 %v2775, %v2768
          %v3294 = vpack.c.b16 %v2776, %v2769
          %v3295 = vpack.c.b16 %v2777, %v2770
          %v3296 = vpack.c.b16 %v2778, %v2771
          %v3297 = vpack.c.b16 %v2779, %v2772
          %v3298 = vpack.c.b16 %v2780, %v2773
          %v3299 = vpack.c.b16 %v2781, %v2774
          %v3300 = vpack.c.b16 %v2789, %v2782
          %v3301 = vpack.c.b16 %v2790, %v2783
          %v3302 = vpack.c.b16 %v2791, %v2784
          %v3303 = vpack.c.b16 %v2792, %v2785
          %v3304 = vpack.c.b16 %v2793, %v2786
          %v3305 = vpack.c.b16 %v2794, %v2787
          %v3306 = vpack.c.b16 %v2795, %v2788
          %v3307 = vpack.c.b16 %v2803, %v2796
          %v3308 = vpack.c.b16 %v2804, %v2797
          %v3309 = vpack.c.b16 %v2805, %v2798
          %v3310 = vpack.c.b16 %v2806, %v2799
          %v3311 = vpack.c.b16 %v2807, %v2800
          %v3312 = vpack.c.b16 %v2808, %v2801
          %v3313 = vpack.c.b16 %v2809, %v2802
          %v3314 = vpack.c.b16 %v2817, %v2810
          %v3315 = vpack.c.b16 %v2818, %v2811
          %v3316 = vpack.c.b16 %v2819, %v2812
          %v3317 = vpack.c.b16 %v2820, %v2813
          %v3318 = vpack.c.b16 %v2821, %v2814
          %v3319 = vpack.c.b16 %v2822, %v2815
          %v3320 = vpack.c.b16 %v2823, %v2816
          %v3321 = vpack.c.b16 %v2831, %v2824
          %v3322 = vpack.c.b16 %v2832, %v2825
          %v3323 = vpack.c.b16 %v2833, %v2826
          %v3324 = vpack.c.b16 %v2834, %v2827
          %v3325 = vpack.c.b16 %v2835, %v2828
          %v3326 = vpack.c.b16 %v2836, %v2829
          %v3327 = vpack.c.b16 %v2837, %v2830
          %v3328 = vpack.c.b16 %v2845, %v2838
          %v3329 = vpack.c.b16 %v2846, %v2839
          %v3330 = vpack.c.b16 %v2847, %v2840
          %v3331 = vpack.c.b16 %v2848, %v2841
          %v3332 = vpack.c.b16 %v2849, %v2842
          %v3333 = vpack.c.b16 %v2850, %v2843
          %v3334 = vpack.c.b16 %v2851, %v2844
          %v3335 = vpack.c.b16 %v2859, %v2852
          %v3336 = vpack.c.b16 %v2860, %v2853
          %v3337 = vpack.c.b16 %v2861, %v2854
          %v3338 = vpack.c.b16 %v2862, %v2855
          %v3339 = vpack.c.b16 %v2863, %v2856
          %v3340 = vpack.c.b16 %v2864, %v2857
          %v3341 = vpack.c.b16 %v2865, %v2858
          %v3342 = vpack.c.b16 %v2873, %v2866
          %v3343 = vpack.c.b16 %v2874, %v2867
          %v3344 = vpack.c.b16 %v2875, %v2868
          %v3345 = vpack.c.b16 %v2876, %v2869
          %v3346 = vpack.c.b16 %v2877, %v2870
          %v3347 = vpack.c.b16 %v2878, %v2871
          %v3348 = vpack.c.b16 %v2879, %v2872
          %v3349 = vpack.c.b16 %v2887, %v2880
          %v3350 = vpack.c.b16 %v2888, %v2881
          %v3351 = vpack.c.b16 %v2889, %v2882
          %v3352 = vpack.c.b16 %v2890, %v2883
          %v3353 = vpack.c.b16 %v2891, %v2884
          %v3354 = vpack.c.b16 %v2892, %v2885
          %v3355 = vpack.c.b16 %v2893, %v2886
          %v3356 = vpack.c.b16 %v2901, %v2894
          %v3357 = vpack.c.b16 %v2902, %v2895
          %v3358 = vpack.c.b16 %v2903, %v2896
          %v3359 = vpack.c.b16 %v2904, %v2897
          %v3360 = vpack.c.b16 %v2905, %v2898
          %v3361 = vpack.c.b16 %v2906, %v2899
          %v3362 = vpack.c.b16 %v2907, %v2900
          %v3363 = vpack.c.b16 %v2915, %v2908
          %v3364 = vpack.c.b16 %v2916, %v2909
          %v3365 = vpack.c.b16 %v2917, %v2910
          %v3366 = vpack.c.b16 %v2918, %v2911
          %v3367 = vpack.c.b16 %v2919, %v2912
          %v3368 = vpack.c.b16 %v2920, %v2913
          %v3369 = vpack.c.b16 %v2921, %v2914
          %v3370 = vpack.c.b16 %v2929, %v2922
          %v3371 = vpack.c.b16 %v2930, %v2923
          %v3372 = vpack.c.b16 %v2931, %v2924
          %v3373 = vpack.c.b16 %v2932, %v2925
          %v3374 = vpack.c.b16 %v2933, %v2926
          %v3375 = vpack.c.b16 %v2934, %v2927
          %v3376 = vpack.c.b16 %v2935, %v2928
          %v3377 = vpack.c.b16 %v2943, %v2936
          %v3378 = vpack.c.b16 %v2944, %v2937
          %v3379 = vpack.c.b16 %v2945, %v2938
          %v3380 = vpack.c.b16 %v2946, %v2939
          %v3381 = vpack.c.b16 %v2947, %v2940
          %v3382 = vpack.c.b16 %v2948, %v2941
          %v3383 = vpack.c.b16 %v2949, %v2942
          %v3384 = vpack.c.b16 %v2957, %v2950
          %v3385 = vpack.c.b16 %v2958, %v2951
          %v3386 = vpack.c.b16 %v2959, %v2952
          %v3387 = vpack.c.b16 %v2960, %v2953
          %v3388 = vpack.c.b16 %v2961, %v2954
          %v3389 = vpack.c.b16 %v2962, %v2955
          %v3390 = vpack.c.b16 %v2963, %v2956
          %v3391 = vpack.c.b16 %v2971, %v2964
          %v3392 = vpack.c.b16 %v2972, %v2965
          %v3393 = vpack.c.b16 %v2973, %v2966
          %v3394 = vpack.c.b16 %v2974, %v2967
          %v3395 = vpack.c.b16 %v2975, %v2968
          %v3396 = vpack.c.b16 %v2976, %v2969
          %v3397 = vpack.c.b16 %v2977, %v2970
          %v3398 = vpack.c.b16 %v2985, %v2978
          %v3399 = vpack.c.b16 %v2986, %v2979
          %v3400 = vpack.c.b16 %v2987, %v2980
          %v3401 = vpack.c.b16 %v2988, %v2981
          %v3402 = vpack.c.b16 %v2989, %v2982
          %v3403 = vpack.c.b16 %v2990, %v2983
          %v3404 = vpack.c.b16 %v2991, %v2984
          %v3405 = vpack.c.b16 %v2999, %v2992
          %v3406 = vpack.c.b16 %v3000, %v2993
          %v3407 = vpack.c.b16 %v3001, %v2994
          %v3408 = vpack.c.b16 %v3002, %v2995
          %v3409 = vpack.c.b16 %v3003, %v2996
          %v3410 = vpack.c.b16 %v3004, %v2997
          %v3411 = vpack.c.b16 %v3005, %v2998
          %v3412 = vpack.c.b16 %v3013, %v3006
          %v3413 = vpack.c.b16 %v3014, %v3007
          %v3414 = vpack.c.b16 %v3015, %v3008
          %v3415 = vpack.c.b16 %v3016, %v3009
          %v3416 = vpack.c.b16 %v3017, %v3010
          %v3417 = vpack.c.b16 %v3018, %v3011
          %v3418 = vpack.c.b16 %v3019, %v3012
          %v3419 = vpack.c.b16 %v3027, %v3020
          %v3420 = vpack.c.b16 %v3028, %v3021
          %v3421 = vpack.c.b16 %v3029, %v3022
          %v3422 = vpack.c.b16 %v3030, %v3023
          %v3423 = vpack.c.b16 %v3031, %v3024
          %v3424 = vpack.c.b16 %v3032, %v3025
          %v3425 = vpack.c.b16 %v3033, %v3026
          %3818 = vmatprep.subr.bf16.mxu0 %v3035
          %3819 = vmatpush1.bf16.msra.mxu0 %v3034
          %3820 = vmatprep.subr.bf16.mxu0 %v3042
          %3821 = vmatpush1.bf16.msra.mxu0 %v3041
          %3822 = vmatprep.subr.bf16.mxu0 %v3049
          %3823 = vmatpush1.bf16.msra.mxu0 %v3048
          %3824 = vmatprep.subr.bf16.mxu0 %v3056
          %3825 = vmatpush1.bf16.msra.mxu0 %v3055
          %3826 = vmatprep.subr.bf16.mxu0 %v3063
          %3827 = vmatpush1.bf16.msra.mxu0 %v3062
          %3828 = vmatprep.subr.bf16.mxu0 %v3070
          %3829 = vmatpush1.bf16.msra.mxu0 %v3069
          %3830 = vmatprep.subr.bf16.mxu0 %v3077
          %3831 = vmatpush1.bf16.msra.mxu0 %v3076
          %3832 = vmatprep.subr.bf16.mxu0 %v3084
          %3833 = vmatpush1.bf16.msra.mxu0 %v3083
          %3834 = vmatprep.subr.bf16.mxu0 %v3091
          %3835 = vmatpush1.bf16.msra.mxu0 %v3090
          %3836 = vmatprep.subr.bf16.mxu0 %v3098
          %3837 = vmatpush1.bf16.msra.mxu0 %v3097
          %3838 = vmatprep.subr.bf16.mxu0 %v3105
          %3839 = vmatpush1.bf16.msra.mxu0 %v3104
          %3840 = vmatprep.subr.bf16.mxu0 %v3112
          %3841 = vmatpush1.bf16.msra.mxu0 %v3111
          %3842 = vmatprep.subr.bf16.mxu0 %v3119
          %3843 = vmatpush1.bf16.msra.mxu0 %v3118
          %3844 = vmatprep.subr.bf16.mxu0 %v3126
          %3845 = vmatpush1.bf16.msra.mxu0 %v3125
          %3846 = vmatprep.subr.bf16.mxu0 %v3133
          %3847 = vmatpush1.bf16.msra.mxu0 %v3132
          %3848 = vmatprep.subr.bf16.mxu0 %v3140
          %3849 = vmatpush1.bf16.msra.mxu0 %v3139
          %3850 = vmatprep.mubr.bf16.mxu0 %v1311
          %3851 = vmatmul.mubr.bf16.gmra.mrb[0].mxu0 %v1310
          %v3852 = vpop.f32.mrb[0].mxu0
          %v3853 = vadd.f32 %v1770, %v3852
          %v3854 = vpop.f32.mrb[0].mxu0
          %v3855 = vadd.f32 %v1774, %v3854
          %v3856 = vpop.f32.mrb[0].mxu0
          %v3857 = vpop.f32.mrb[0].mxu0
          %3858 = vdwg.mxu0
          %3859 = vmatprep.subr.bf16.mxu0 %v3147
          %3860 = vmatpush1.bf16.msra.mxu0 %v3146
          %3861 = vmatprep.subr.bf16.mxu0 %v3154
          %3862 = vmatpush1.bf16.msra.mxu0 %v3153
          %3863 = vmatprep.subr.bf16.mxu0 %v3161
          %3864 = vmatpush1.bf16.msra.mxu0 %v3160
          %3865 = vmatprep.subr.bf16.mxu0 %v3168
          %3866 = vmatpush1.bf16.msra.mxu0 %v3167
          %3867 = vmatprep.subr.bf16.mxu0 %v3175
          %3868 = vmatpush1.bf16.msra.mxu0 %v3174
          %3869 = vmatprep.subr.bf16.mxu0 %v3182
          %3870 = vmatpush1.bf16.msra.mxu0 %v3181
          %3871 = vmatprep.subr.bf16.mxu0 %v3189
          %3872 = vmatpush1.bf16.msra.mxu0 %v3188
          %3873 = vmatprep.subr.bf16.mxu0 %v3196
          %3874 = vmatpush1.bf16.msra.mxu0 %v3195
          %3875 = vmatprep.subr.bf16.mxu0 %v3203
          %3876 = vmatpush1.bf16.msra.mxu0 %v3202
          %3877 = vmatprep.subr.bf16.mxu0 %v3210
          %3878 = vmatpush1.bf16.msra.mxu0 %v3209
          %3879 = vmatprep.subr.bf16.mxu0 %v3217
          %3880 = vmatpush1.bf16.msra.mxu0 %v3216
          %3881 = vmatprep.subr.bf16.mxu0 %v3224
          %3882 = vmatpush1.bf16.msra.mxu0 %v3223
          %3883 = vmatprep.subr.bf16.mxu0 %v3231
          %3884 = vmatpush1.bf16.msra.mxu0 %v3230
          %3885 = vmatprep.subr.bf16.mxu0 %v3238
          %3886 = vmatpush1.bf16.msra.mxu0 %v3237
          %3887 = vmatprep.subr.bf16.mxu0 %v3245
          %3888 = vmatpush1.bf16.msra.mxu0 %v3244
          %3889 = vmatprep.subr.bf16.mxu0 %v3252
          %3890 = vmatpush1.bf16.msra.mxu0 %v3251
          %3891 = vmatprep.mubr.bf16.mxu0 %v1313
          %3892 = vmatmul.mubr.bf16.gmra.mrb[0].mxu0 %v1312
          %v3893 = vpop.f32.mrb[0].mxu0
          %v3894 = vadd.f32 %v3853, %v3893
          %v3895 = vpop.f32.mrb[0].mxu0
          %v3896 = vadd.f32 %v3855, %v3895
          %v3897 = vpop.f32.mrb[0].mxu0
          %v3898 = vpop.f32.mrb[0].mxu0
          %3899 = vdwg.mxu0
          %3900 = vmatprep.subr.bf16.mxu0 %v3259
          %3901 = vmatpush1.bf16.msra.mxu0 %v3258
          %3902 = vmatprep.subr.bf16.mxu0 %v3266
          %3903 = vmatpush1.bf16.msra.mxu0 %v3265
          %3904 = vmatprep.subr.bf16.mxu0 %v3273
          %3905 = vmatpush1.bf16.msra.mxu0 %v3272
          %3906 = vmatprep.subr.bf16.mxu0 %v3280
          %3907 = vmatpush1.bf16.msra.mxu0 %v3279
          %3908 = vmatprep.subr.bf16.mxu0 %v3287
          %3909 = vmatpush1.bf16.msra.mxu0 %v3286
          %3910 = vmatprep.subr.bf16.mxu0 %v3294
          %3911 = vmatpush1.bf16.msra.mxu0 %v3293
          %3912 = vmatprep.subr.bf16.mxu0 %v3301
          %3913 = vmatpush1.bf16.msra.mxu0 %v3300
          %3914 = vmatprep.subr.bf16.mxu0 %v3308
          %3915 = vmatpush1.bf16.msra.mxu0 %v3307
          %3916 = vmatprep.subr.bf16.mxu0 %v3315
          %3917 = vmatpush1.bf16.msra.mxu0 %v3314
          %3918 = vmatprep.subr.bf16.mxu0 %v3322
          %3919 = vmatpush1.bf16.msra.mxu0 %v3321
          %3920 = vmatprep.subr.bf16.mxu0 %v3329
          %3921 = vmatpush1.bf16.msra.mxu0 %v3328
          %3922 = vmatprep.subr.bf16.mxu0 %v3336
          %3923 = vmatpush1.bf16.msra.mxu0 %v3335
          %3924 = vmatprep.subr.bf16.mxu0 %v3343
          %3925 = vmatpush1.bf16.msra.mxu0 %v3342
          %3926 = vmatprep.subr.bf16.mxu0 %v3350
          %3927 = vmatpush1.bf16.msra.mxu0 %v3349
          %3928 = vmatprep.subr.bf16.mxu0 %v3357
          %3929 = vmatpush1.bf16.msra.mxu0 %v3356
          %3930 = vmatprep.subr.bf16.mxu0 %v3364
          %3931 = vmatpush1.bf16.msra.mxu0 %v3363
          %3932 = vmatprep.mubr.bf16.mxu0 %v1315
          %3933 = vmatmul.mubr.bf16.gmra.mrb[0].mxu0 %v1314
          %v3934 = vpop.f32.mrb[0].mxu0
          %v3935 = vadd.f32 %v3894, %v3934
          %v3936 = vpop.f32.mrb[0].mxu0
          %v3937 = vadd.f32 %v3896, %v3936
          %v3938 = vpop.f32.mrb[0].mxu0
          %v3939 = vpop.f32.mrb[0].mxu0
          %3940 = vdwg.mxu0
          %3941 = vmatprep.subr.bf16.mxu0 %v3371
          %3942 = vmatpush1.bf16.msra.mxu0 %v3370
          %3943 = vmatprep.subr.bf16.mxu0 %v3378
          %3944 = vmatpush1.bf16.msra.mxu0 %v3377
          %3945 = vmatprep.subr.bf16.mxu0 %v3385
          %3946 = vmatpush1.bf16.msra.mxu0 %v3384
          %3947 = vmatprep.subr.bf16.mxu0 %v3392
          %3948 = vmatpush1.bf16.msra.mxu0 %v3391
          %3949 = vmatprep.subr.bf16.mxu0 %v3399
          %3950 = vmatpush1.bf16.msra.mxu0 %v3398
          %3951 = vmatprep.subr.bf16.mxu0 %v3406
          %3952 = vmatpush1.bf16.msra.mxu0 %v3405
          %3953 = vmatprep.subr.bf16.mxu0 %v3413
          %3954 = vmatpush1.bf16.msra.mxu0 %v3412
          %3955 = vmatprep.subr.bf16.mxu0 %v3420
          %3956 = vmatpush1.bf16.msra.mxu0 %v3419
          %3957 = vmatprep.subr.bf16.mxu0 0
          %3958 = vmatpush1.bf16.msra.mxu0 0
          %3959 = vmatprep.subr.bf16.mxu0 0
          %3960 = vmatpush1.bf16.msra.mxu0 0
          %3961 = vmatprep.subr.bf16.mxu0 0
          %3962 = vmatpush1.bf16.msra.mxu0 0
          %3963 = vmatprep.subr.bf16.mxu0 0
          %3964 = vmatpush1.bf16.msra.mxu0 0
          %3965 = vmatprep.subr.bf16.mxu0 0
          %3966 = vmatpush1.bf16.msra.mxu0 0
          %3967 = vmatprep.subr.bf16.mxu0 0
          %3968 = vmatpush1.bf16.msra.mxu0 0
          %3969 = vmatprep.subr.bf16.mxu0 0
          %3970 = vmatpush1.bf16.msra.mxu0 0
          %3971 = vmatprep.subr.bf16.mxu0 0
          %3972 = vmatpush1.bf16.msra.mxu0 0
          %3973 = vmatprep.mubr.bf16.mxu0 0
          %3974 = vmatmul.mubr.bf16.gmra.mrb[0].mxu0 %v1316
          %v3975 = vpop.f32.mrb[0].mxu0
          %v3976 = vadd.f32 %v3935, %v3975
          %v3977 = vpop.f32.mrb[0].mxu0
          %v3978 = vadd.f32 %v3937, %v3977
          %v3979 = vpop.f32.mrb[0].mxu0
          %v3980 = vpop.f32.mrb[0].mxu0
          %3981 = vdwg.mxu0
          %3982 = vmatprep.subr.bf16.mxu0 %v3037
          %3983 = vmatpush1.bf16.msra.mxu0 %v3036
          %3984 = vmatprep.subr.bf16.mxu0 %v3044
          %3985 = vmatpush1.bf16.msra.mxu0 %v3043
          %3986 = vmatprep.subr.bf16.mxu0 %v3051
          %3987 = vmatpush1.bf16.msra.mxu0 %v3050
          %3988 = vmatprep.subr.bf16.mxu0 %v3058
          %3989 = vmatpush1.bf16.msra.mxu0 %v3057
          %3990 = vmatprep.subr.bf16.mxu0 %v3065
          %3991 = vmatpush1.bf16.msra.mxu0 %v3064
          %3992 = vmatprep.subr.bf16.mxu0 %v3072
          %3993 = vmatpush1.bf16.msra.mxu0 %v3071
          %3994 = vmatprep.subr.bf16.mxu0 %v3079
          %3995 = vmatpush1.bf16.msra.mxu0 %v3078
          %3996 = vmatprep.subr.bf16.mxu0 %v3086
          %3997 = vmatpush1.bf16.msra.mxu0 %v3085
          %3998 = vmatprep.subr.bf16.mxu0 %v3093
          %3999 = vmatpush1.bf16.msra.mxu0 %v3092
          %4000 = vmatprep.subr.bf16.mxu0 %v3100
          %4001 = vmatpush1.bf16.msra.mxu0 %v3099
          %4002 = vmatprep.subr.bf16.mxu0 %v3107
          %4003 = vmatpush1.bf16.msra.mxu0 %v3106
          %4004 = vmatprep.subr.bf16.mxu0 %v3114
          %4005 = vmatpush1.bf16.msra.mxu0 %v3113
          %4006 = vmatprep.subr.bf16.mxu0 %v3121
          %4007 = vmatpush1.bf16.msra.mxu0 %v3120
          %4008 = vmatprep.subr.bf16.mxu0 %v3128
          %4009 = vmatpush1.bf16.msra.mxu0 %v3127
          %4010 = vmatprep.subr.bf16.mxu0 %v3135
          %4011 = vmatpush1.bf16.msra.mxu0 %v3134
          %4012 = vmatprep.subr.bf16.mxu0 %v3142
          %4013 = vmatpush1.bf16.msra.mxu0 %v3141
          %4014 = vmatprep.mubr.bf16.mxu0 %v1311
          %4015 = vmatmul.mubr.bf16.gmra.mrb[0].mxu0 %v1310
          %v4016 = vpop.f32.mrb[0].mxu0
          %v4017 = vadd.f32 %v1778, %v4016
          %v4018 = vpop.f32.mrb[0].mxu0
          %v4019 = vadd.f32 %v1782, %v4018
          %v4020 = vpop.f32.mrb[0].mxu0
          %v4021 = vpop.f32.mrb[0].mxu0
          %4022 = vdwg.mxu0
          %4023 = vmatprep.subr.bf16.mxu0 %v3149
          %4024 = vmatpush1.bf16.msra.mxu0 %v3148
          %4025 = vmatprep.subr.bf16.mxu0 %v3156
          %4026 = vmatpush1.bf16.msra.mxu0 %v3155
          %4027 = vmatprep.subr.bf16.mxu0 %v3163
          %4028 = vmatpush1.bf16.msra.mxu0 %v3162
          %4029 = vmatprep.subr.bf16.mxu0 %v3170
          %4030 = vmatpush1.bf16.msra.mxu0 %v3169
          %4031 = vmatprep.subr.bf16.mxu0 %v3177
          %4032 = vmatpush1.bf16.msra.mxu0 %v3176
          %4033 = vmatprep.subr.bf16.mxu0 %v3184
          %4034 = vmatpush1.bf16.msra.mxu0 %v3183
          %4035 = vmatprep.subr.bf16.mxu0 %v3191
          %4036 = vmatpush1.bf16.msra.mxu0 %v3190
          %4037 = vmatprep.subr.bf16.mxu0 %v3198
          %4038 = vmatpush1.bf16.msra.mxu0 %v3197
          %4039 = vmatprep.subr.bf16.mxu0 %v3205
          %4040 = vmatpush1.bf16.msra.mxu0 %v3204
          %4041 = vmatprep.subr.bf16.mxu0 %v3212
          %4042 = vmatpush1.bf16.msra.mxu0 %v3211
          %4043 = vmatprep.subr.bf16.mxu0 %v3219
          %4044 = vmatpush1.bf16.msra.mxu0 %v3218
          %4045 = vmatprep.subr.bf16.mxu0 %v3226
          %4046 = vmatpush1.bf16.msra.mxu0 %v3225
          %4047 = vmatprep.subr.bf16.mxu0 %v3233
          %4048 = vmatpush1.bf16.msra.mxu0 %v3232
          %4049 = vmatprep.subr.bf16.mxu0 %v3240
          %4050 = vmatpush1.bf16.msra.mxu0 %v3239
          %4051 = vmatprep.subr.bf16.mxu0 %v3247
          %4052 = vmatpush1.bf16.msra.mxu0 %v3246
          %4053 = vmatprep.subr.bf16.mxu0 %v3254
          %4054 = vmatpush1.bf16.msra.mxu0 %v3253
          %4055 = vmatprep.mubr.bf16.mxu0 %v1313
          %4056 = vmatmul.mubr.bf16.gmra.mrb[0].mxu0 %v1312
          %v4057 = vpop.f32.mrb[0].mxu0
          %v4058 = vadd.f32 %v4017, %v4057
          %v4059 = vpop.f32.mrb[0].mxu0
          %v4060 = vadd.f32 %v4019, %v4059
          %v4061 = vpop.f32.mrb[0].mxu0
          %v4062 = vpop.f32.mrb[0].mxu0
          %4063 = vdwg.mxu0
          %4064 = vmatprep.subr.bf16.mxu0 %v3261
          %4065 = vmatpush1.bf16.msra.mxu0 %v3260
          %4066 = vmatprep.subr.bf16.mxu0 %v3268
          %4067 = vmatpush1.bf16.msra.mxu0 %v3267
          %4068 = vmatprep.subr.bf16.mxu0 %v3275
          %4069 = vmatpush1.bf16.msra.mxu0 %v3274
          %4070 = vmatprep.subr.bf16.mxu0 %v3282
          %4071 = vmatpush1.bf16.msra.mxu0 %v3281
          %4072 = vmatprep.subr.bf16.mxu0 %v3289
          %4073 = vmatpush1.bf16.msra.mxu0 %v3288
          %4074 = vmatprep.subr.bf16.mxu0 %v3296
          %4075 = vmatpush1.bf16.msra.mxu0 %v3295
          %4076 = vmatprep.subr.bf16.mxu0 %v3303
          %4077 = vmatpush1.bf16.msra.mxu0 %v3302
          %4078 = vmatprep.subr.bf16.mxu0 %v3310
          %4079 = vmatpush1.bf16.msra.mxu0 %v3309
          %4080 = vmatprep.subr.bf16.mxu0 %v3317
          %4081 = vmatpush1.bf16.msra.mxu0 %v3316
          %4082 = vmatprep.subr.bf16.mxu0 %v3324
          %4083 = vmatpush1.bf16.msra.mxu0 %v3323
          %4084 = vmatprep.subr.bf16.mxu0 %v3331
          %4085 = vmatpush1.bf16.msra.mxu0 %v3330
          %4086 = vmatprep.subr.bf16.mxu0 %v3338
          %4087 = vmatpush1.bf16.msra.mxu0 %v3337
          %4088 = vmatprep.subr.bf16.mxu0 %v3345
          %4089 = vmatpush1.bf16.msra.mxu0 %v3344
          %4090 = vmatprep.subr.bf16.mxu0 %v3352
          %4091 = vmatpush1.bf16.msra.mxu0 %v3351
          %4092 = vmatprep.subr.bf16.mxu0 %v3359
          %4093 = vmatpush1.bf16.msra.mxu0 %v3358
          %4094 = vmatprep.subr.bf16.mxu0 %v3366
          %4095 = vmatpush1.bf16.msra.mxu0 %v3365
          %4096 = vmatprep.mubr.bf16.mxu0 %v1315
          %4097 = vmatmul.mubr.bf16.gmra.mrb[0].mxu0 %v1314
          %v4098 = vpop.f32.mrb[0].mxu0
          %v4099 = vadd.f32 %v4058, %v4098
          %v4100 = vpop.f32.mrb[0].mxu0
          %v4101 = vadd.f32 %v4060, %v4100
          %v4102 = vpop.f32.mrb[0].mxu0
          %v4103 = vpop.f32.mrb[0].mxu0
          %4104 = vdwg.mxu0
          %4105 = vmatprep.subr.bf16.mxu0 %v3373
          %4106 = vmatpush1.bf16.msra.mxu0 %v3372
          %4107 = vmatprep.subr.bf16.mxu0 %v3380
          %4108 = vmatpush1.bf16.msra.mxu0 %v3379
          %4109 = vmatprep.subr.bf16.mxu0 %v3387
          %4110 = vmatpush1.bf16.msra.mxu0 %v3386
          %4111 = vmatprep.subr.bf16.mxu0 %v3394
          %4112 = vmatpush1.bf16.msra.mxu0 %v3393
          %4113 = vmatprep.subr.bf16.mxu0 %v3401
          %4114 = vmatpush1.bf16.msra.mxu0 %v3400
          %4115 = vmatprep.subr.bf16.mxu0 %v3408
          %4116 = vmatpush1.bf16.msra.mxu0 %v3407
          %4117 = vmatprep.subr.bf16.mxu0 %v3415
          %4118 = vmatpush1.bf16.msra.mxu0 %v3414
          %4119 = vmatprep.subr.bf16.mxu0 %v3422
          %4120 = vmatpush1.bf16.msra.mxu0 %v3421
          %4121 = vmatprep.subr.bf16.mxu0 0
          %4122 = vmatpush1.bf16.msra.mxu0 0
          %4123 = vmatprep.subr.bf16.mxu0 0
          %4124 = vmatpush1.bf16.msra.mxu0 0
          %4125 = vmatprep.subr.bf16.mxu0 0
          %4126 = vmatpush1.bf16.msra.mxu0 0
          %4127 = vmatprep.subr.bf16.mxu0 0
          %4128 = vmatpush1.bf16.msra.mxu0 0
          %4129 = vmatprep.subr.bf16.mxu0 0
          %4130 = vmatpush1.bf16.msra.mxu0 0
          %4131 = vmatprep.subr.bf16.mxu0 0
          %4132 = vmatpush1.bf16.msra.mxu0 0
          %4133 = vmatprep.subr.bf16.mxu0 0
          %4134 = vmatpush1.bf16.msra.mxu0 0
          %4135 = vmatprep.subr.bf16.mxu0 0
          %4136 = vmatpush1.bf16.msra.mxu0 0
          %4137 = vmatprep.mubr.bf16.mxu0 0
          %4138 = vmatmul.mubr.bf16.gmra.mrb[0].mxu0 %v1316
          %v4139 = vpop.f32.mrb[0].mxu0
          %v4140 = vadd.f32 %v4099, %v4139
          %v4141 = vpop.f32.mrb[0].mxu0
          %v4142 = vadd.f32 %v4101, %v4141
          %v4143 = vpop.f32.mrb[0].mxu0
          %v4144 = vpop.f32.mrb[0].mxu0
          %4145 = vdwg.mxu0
          %4146 = vmatprep.subr.bf16.mxu0 %v3039
          %4147 = vmatpush1.bf16.msra.mxu0 %v3038
          %4148 = vmatprep.subr.bf16.mxu0 %v3046
          %4149 = vmatpush1.bf16.msra.mxu0 %v3045
          %4150 = vmatprep.subr.bf16.mxu0 %v3053
          %4151 = vmatpush1.bf16.msra.mxu0 %v3052
          %4152 = vmatprep.subr.bf16.mxu0 %v3060
          %4153 = vmatpush1.bf16.msra.mxu0 %v3059
          %4154 = vmatprep.subr.bf16.mxu0 %v3067
          %4155 = vmatpush1.bf16.msra.mxu0 %v3066
          %4156 = vmatprep.subr.bf16.mxu0 %v3074
          %4157 = vmatpush1.bf16.msra.mxu0 %v3073
          %4158 = vmatprep.subr.bf16.mxu0 %v3081
          %4159 = vmatpush1.bf16.msra.mxu0 %v3080
          %4160 = vmatprep.subr.bf16.mxu0 %v3088
          %4161 = vmatpush1.bf16.msra.mxu0 %v3087
          %4162 = vmatprep.subr.bf16.mxu0 %v3095
          %4163 = vmatpush1.bf16.msra.mxu0 %v3094
          %4164 = vmatprep.subr.bf16.mxu0 %v3102
          %4165 = vmatpush1.bf16.msra.mxu0 %v3101
          %4166 = vmatprep.subr.bf16.mxu0 %v3109
          %4167 = vmatpush1.bf16.msra.mxu0 %v3108
          %4168 = vmatprep.subr.bf16.mxu0 %v3116
          %4169 = vmatpush1.bf16.msra.mxu0 %v3115
          %4170 = vmatprep.subr.bf16.mxu0 %v3123
          %4171 = vmatpush1.bf16.msra.mxu0 %v3122
          %4172 = vmatprep.subr.bf16.mxu0 %v3130
          %4173 = vmatpush1.bf16.msra.mxu0 %v3129
          %4174 = vmatprep.subr.bf16.mxu0 %v3137
          %4175 = vmatpush1.bf16.msra.mxu0 %v3136
          %4176 = vmatprep.subr.bf16.mxu0 %v3144
          %4177 = vmatpush1.bf16.msra.mxu0 %v3143
          %4178 = vmatprep.mubr.bf16.mxu0 %v1311
          %4179 = vmatmul.mubr.bf16.gmra.mrb[0].mxu0 %v1310
          %v4180 = vpop.f32.mrb[0].mxu0
          %v4181 = vadd.f32 %v1786, %v4180
          %v4182 = vpop.f32.mrb[0].mxu0
          %v4183 = vadd.f32 %v1790, %v4182
          %v4184 = vpop.f32.mrb[0].mxu0
          %v4185 = vpop.f32.mrb[0].mxu0
          %4186 = vdwg.mxu0
          %4187 = vmatprep.subr.bf16.mxu0 %v3151
          %4188 = vmatpush1.bf16.msra.mxu0 %v3150
          %4189 = vmatprep.subr.bf16.mxu0 %v3158
          %4190 = vmatpush1.bf16.msra.mxu0 %v3157
          %4191 = vmatprep.subr.bf16.mxu0 %v3165
          %4192 = vmatpush1.bf16.msra.mxu0 %v3164
          %4193 = vmatprep.subr.bf16.mxu0 %v3172
          %4194 = vmatpush1.bf16.msra.mxu0 %v3171
          %4195 = vmatprep.subr.bf16.mxu0 %v3179
          %4196 = vmatpush1.bf16.msra.mxu0 %v3178
          %4197 = vmatprep.subr.bf16.mxu0 %v3186
          %4198 = vmatpush1.bf16.msra.mxu0 %v3185
          %4199 = vmatprep.subr.bf16.mxu0 %v3193
          %4200 = vmatpush1.bf16.msra.mxu0 %v3192
          %4201 = vmatprep.subr.bf16.mxu0 %v3200
          %4202 = vmatpush1.bf16.msra.mxu0 %v3199
          %4203 = vmatprep.subr.bf16.mxu0 %v3207
          %4204 = vmatpush1.bf16.msra.mxu0 %v3206
          %4205 = vmatprep.subr.bf16.mxu0 %v3214
          %4206 = vmatpush1.bf16.msra.mxu0 %v3213
          %4207 = vmatprep.subr.bf16.mxu0 %v3221
          %4208 = vmatpush1.bf16.msra.mxu0 %v3220
          %4209 = vmatprep.subr.bf16.mxu0 %v3228
          %4210 = vmatpush1.bf16.msra.mxu0 %v3227
          %4211 = vmatprep.subr.bf16.mxu0 %v3235
          %4212 = vmatpush1.bf16.msra.mxu0 %v3234
          %4213 = vmatprep.subr.bf16.mxu0 %v3242
          %4214 = vmatpush1.bf16.msra.mxu0 %v3241
          %4215 = vmatprep.subr.bf16.mxu0 %v3249
          %4216 = vmatpush1.bf16.msra.mxu0 %v3248
          %4217 = vmatprep.subr.bf16.mxu0 %v3256
          %4218 = vmatpush1.bf16.msra.mxu0 %v3255
          %4219 = vmatprep.mubr.bf16.mxu0 %v1313
          %4220 = vmatmul.mubr.bf16.gmra.mrb[0].mxu0 %v1312
          %v4221 = vpop.f32.mrb[0].mxu0
          %v4222 = vadd.f32 %v4181, %v4221
          %v4223 = vpop.f32.mrb[0].mxu0
          %v4224 = vadd.f32 %v4183, %v4223
          %v4225 = vpop.f32.mrb[0].mxu0
          %v4226 = vpop.f32.mrb[0].mxu0
          %4227 = vdwg.mxu0
          %4228 = vmatprep.subr.bf16.mxu0 %v3263
          %4229 = vmatpush1.bf16.msra.mxu0 %v3262
          %4230 = vmatprep.subr.bf16.mxu0 %v3270
          %4231 = vmatpush1.bf16.msra.mxu0 %v3269
          %4232 = vmatprep.subr.bf16.mxu0 %v3277
          %4233 = vmatpush1.bf16.msra.mxu0 %v3276
          %4234 = vmatprep.subr.bf16.mxu0 %v3284
          %4235 = vmatpush1.bf16.msra.mxu0 %v3283
          %4236 = vmatprep.subr.bf16.mxu0 %v3291
          %4237 = vmatpush1.bf16.msra.mxu0 %v3290
          %4238 = vmatprep.subr.bf16.mxu0 %v3298
          %4239 = vmatpush1.bf16.msra.mxu0 %v3297
          %4240 = vmatprep.subr.bf16.mxu0 %v3305
          %4241 = vmatpush1.bf16.msra.mxu0 %v3304
          %4242 = vmatprep.subr.bf16.mxu0 %v3312
          %4243 = vmatpush1.bf16.msra.mxu0 %v3311
          %4244 = vmatprep.subr.bf16.mxu0 %v3319
          %4245 = vmatpush1.bf16.msra.mxu0 %v3318
          %4246 = vmatprep.subr.bf16.mxu0 %v3326
          %4247 = vmatpush1.bf16.msra.mxu0 %v3325
          %4248 = vmatprep.subr.bf16.mxu0 %v3333
          %4249 = vmatpush1.bf16.msra.mxu0 %v3332
          %4250 = vmatprep.subr.bf16.mxu0 %v3340
          %4251 = vmatpush1.bf16.msra.mxu0 %v3339
          %4252 = vmatprep.subr.bf16.mxu0 %v3347
          %4253 = vmatpush1.bf16.msra.mxu0 %v3346
          %4254 = vmatprep.subr.bf16.mxu0 %v3354
          %4255 = vmatpush1.bf16.msra.mxu0 %v3353
          %4256 = vmatprep.subr.bf16.mxu0 %v3361
          %4257 = vmatpush1.bf16.msra.mxu0 %v3360
          %4258 = vmatprep.subr.bf16.mxu0 %v3368
          %4259 = vmatpush1.bf16.msra.mxu0 %v3367
          %4260 = vmatprep.mubr.bf16.mxu0 %v1315
          %4261 = vmatmul.mubr.bf16.gmra.mrb[0].mxu0 %v1314
          %v4262 = vpop.f32.mrb[0].mxu0
          %v4263 = vadd.f32 %v4222, %v4262
          %v4264 = vpop.f32.mrb[0].mxu0
          %v4265 = vadd.f32 %v4224, %v4264
          %v4266 = vpop.f32.mrb[0].mxu0
          %v4267 = vpop.f32.mrb[0].mxu0
          %4268 = vdwg.mxu0
          %4269 = vmatprep.subr.bf16.mxu0 %v3375
          %4270 = vmatpush1.bf16.msra.mxu0 %v3374
          %4271 = vmatprep.subr.bf16.mxu0 %v3382
          %4272 = vmatpush1.bf16.msra.mxu0 %v3381
          %4273 = vmatprep.subr.bf16.mxu0 %v3389
          %4274 = vmatpush1.bf16.msra.mxu0 %v3388
          %4275 = vmatprep.subr.bf16.mxu0 %v3396
          %4276 = vmatpush1.bf16.msra.mxu0 %v3395
          %4277 = vmatprep.subr.bf16.mxu0 %v3403
          %4278 = vmatpush1.bf16.msra.mxu0 %v3402
          %4279 = vmatprep.subr.bf16.mxu0 %v3410
          %4280 = vmatpush1.bf16.msra.mxu0 %v3409
          %4281 = vmatprep.subr.bf16.mxu0 %v3417
          %4282 = vmatpush1.bf16.msra.mxu0 %v3416
          %4283 = vmatprep.subr.bf16.mxu0 %v3424
          %4284 = vmatpush1.bf16.msra.mxu0 %v3423
          %4285 = vmatprep.subr.bf16.mxu0 0
          %4286 = vmatpush1.bf16.msra.mxu0 0
          %4287 = vmatprep.subr.bf16.mxu0 0
          %4288 = vmatpush1.bf16.msra.mxu0 0
          %4289 = vmatprep.subr.bf16.mxu0 0
          %4290 = vmatpush1.bf16.msra.mxu0 0
          %4291 = vmatprep.subr.bf16.mxu0 0
          %4292 = vmatpush1.bf16.msra.mxu0 0
          %4293 = vmatprep.subr.bf16.mxu0 0
          %4294 = vmatpush1.bf16.msra.mxu0 0
          %4295 = vmatprep.subr.bf16.mxu0 0
          %4296 = vmatpush1.bf16.msra.mxu0 0
          %4297 = vmatprep.subr.bf16.mxu0 0
          %4298 = vmatpush1.bf16.msra.mxu0 0
          %4299 = vmatprep.subr.bf16.mxu0 0
          %4300 = vmatpush1.bf16.msra.mxu0 0
          %4301 = vmatprep.mubr.bf16.mxu0 0
          %4302 = vmatmul.mubr.bf16.gmra.mrb[0].mxu0 %v1316
          %v4303 = vpop.f32.mrb[0].mxu0
          %v4304 = vadd.f32 %v4263, %v4303
          %v4305 = vpop.f32.mrb[0].mxu0
          %v4306 = vadd.f32 %v4265, %v4305
          %v4307 = vpop.f32.mrb[0].mxu0
          %v4308 = vpop.f32.mrb[0].mxu0
          %4309 = vdwg.mxu0
          %4310 = vmatprep.subr.bf16.mxu0 0
          %4311 = vmatpush1.bf16.msra.mxu0 %v3040
          %4312 = vmatprep.subr.bf16.mxu0 0
          %4313 = vmatpush1.bf16.msra.mxu0 %v3047
          %4314 = vmatprep.subr.bf16.mxu0 0
          %4315 = vmatpush1.bf16.msra.mxu0 %v3054
          %4316 = vmatprep.subr.bf16.mxu0 0
          %4317 = vmatpush1.bf16.msra.mxu0 %v3061
          %4318 = vmatprep.subr.bf16.mxu0 0
          %4319 = vmatpush1.bf16.msra.mxu0 %v3068
          %4320 = vmatprep.subr.bf16.mxu0 0
          %4321 = vmatpush1.bf16.msra.mxu0 %v3075
          %4322 = vmatprep.subr.bf16.mxu0 0
          %4323 = vmatpush1.bf16.msra.mxu0 %v3082
          %4324 = vmatprep.subr.bf16.mxu0 0
          %4325 = vmatpush1.bf16.msra.mxu0 %v3089
          %4326 = vmatprep.subr.bf16.mxu0 0
          %4327 = vmatpush1.bf16.msra.mxu0 %v3096
          %4328 = vmatprep.subr.bf16.mxu0 0
          %4329 = vmatpush1.bf16.msra.mxu0 %v3103
          %4330 = vmatprep.subr.bf16.mxu0 0
          %4331 = vmatpush1.bf16.msra.mxu0 %v3110
          %4332 = vmatprep.subr.bf16.mxu0 0
          %4333 = vmatpush1.bf16.msra.mxu0 %v3117
          %4334 = vmatprep.subr.bf16.mxu0 0
          %4335 = vmatpush1.bf16.msra.mxu0 %v3124
          %4336 = vmatprep.subr.bf16.mxu0 0
          %4337 = vmatpush1.bf16.msra.mxu0 %v3131
          %4338 = vmatprep.subr.bf16.mxu0 0
          %4339 = vmatpush1.bf16.msra.mxu0 %v3138
          %4340 = vmatprep.subr.bf16.mxu0 0
          %4341 = vmatpush1.bf16.msra.mxu0 %v3145
          %4342 = vmatprep.mubr.bf16.mxu0 %v1311
          %4343 = vmatmul.mubr.bf16.gmra.mrb[0].mxu0 %v1310
          %v4344 = vpop.f32.mrb[0].mxu0
          %v4345 = vadd.f32 %v1794, %v4344
          %v4346 = vpop.f32.mrb[0].mxu0
          %v4347 = vpop.f32.mrb[0].mxu0
          %v4348 = vpop.f32.mrb[0].mxu0
          %4349 = vdwg.mxu0
          %4350 = vmatprep.subr.bf16.mxu0 0
          %4351 = vmatpush1.bf16.msra.mxu0 %v3152
          %4352 = vmatprep.subr.bf16.mxu0 0
          %4353 = vmatpush1.bf16.msra.mxu0 %v3159
          %4354 = vmatprep.subr.bf16.mxu0 0
          %4355 = vmatpush1.bf16.msra.mxu0 %v3166
          %4356 = vmatprep.subr.bf16.mxu0 0
          %4357 = vmatpush1.bf16.msra.mxu0 %v3173
          %4358 = vmatprep.subr.bf16.mxu0 0
          %4359 = vmatpush1.bf16.msra.mxu0 %v3180
          %4360 = vmatprep.subr.bf16.mxu0 0
          %4361 = vmatpush1.bf16.msra.mxu0 %v3187
          %4362 = vmatprep.subr.bf16.mxu0 0
          %4363 = vmatpush1.bf16.msra.mxu0 %v3194
          %4364 = vmatprep.subr.bf16.mxu0 0
          %4365 = vmatpush1.bf16.msra.mxu0 %v3201
          %4366 = vmatprep.subr.bf16.mxu0 0
          %4367 = vmatpush1.bf16.msra.mxu0 %v3208
          %4368 = vmatprep.subr.bf16.mxu0 0
          %4369 = vmatpush1.bf16.msra.mxu0 %v3215
          %4370 = vmatprep.subr.bf16.mxu0 0
          %4371 = vmatpush1.bf16.msra.mxu0 %v3222
          %4372 = vmatprep.subr.bf16.mxu0 0
          %4373 = vmatpush1.bf16.msra.mxu0 %v3229
          %4374 = vmatprep.subr.bf16.mxu0 0
          %4375 = vmatpush1.bf16.msra.mxu0 %v3236
          %4376 = vmatprep.subr.bf16.mxu0 0
          %4377 = vmatpush1.bf16.msra.mxu0 %v3243
          %4378 = vmatprep.subr.bf16.mxu0 0
          %4379 = vmatpush1.bf16.msra.mxu0 %v3250
          %4380 = vmatprep.subr.bf16.mxu0 0
          %4381 = vmatpush1.bf16.msra.mxu0 %v3257
          %4382 = vmatprep.mubr.bf16.mxu0 %v1313
          %4383 = vmatmul.mubr.bf16.gmra.mrb[0].mxu0 %v1312
          %v4384 = vpop.f32.mrb[0].mxu0
          %v4385 = vadd.f32 %v4345, %v4384
          %v4386 = vpop.f32.mrb[0].mxu0
          %v4387 = vpop.f32.mrb[0].mxu0
          %v4388 = vpop.f32.mrb[0].mxu0
          %4389 = vdwg.mxu0
          %4390 = vmatprep.subr.bf16.mxu0 0
          %4391 = vmatpush1.bf16.msra.mxu0 %v3264
          %4392 = vmatprep.subr.bf16.mxu0 0
          %4393 = vmatpush1.bf16.msra.mxu0 %v3271
          %4394 = vmatprep.subr.bf16.mxu0 0
          %4395 = vmatpush1.bf16.msra.mxu0 %v3278
          %4396 = vmatprep.subr.bf16.mxu0 0
          %4397 = vmatpush1.bf16.msra.mxu0 %v3285
          %4398 = vmatprep.subr.bf16.mxu0 0
          %4399 = vmatpush1.bf16.msra.mxu0 %v3292
          %4400 = vmatprep.subr.bf16.mxu0 0
          %4401 = vmatpush1.bf16.msra.mxu0 %v3299
          %4402 = vmatprep.subr.bf16.mxu0 0
          %4403 = vmatpush1.bf16.msra.mxu0 %v3306
          %4404 = vmatprep.subr.bf16.mxu0 0
          %4405 = vmatpush1.bf16.msra.mxu0 %v3313
          %4406 = vmatprep.subr.bf16.mxu0 0
          %4407 = vmatpush1.bf16.msra.mxu0 %v3320
          %4408 = vmatprep.subr.bf16.mxu0 0
          %4409 = vmatpush1.bf16.msra.mxu0 %v3327
          %4410 = vmatprep.subr.bf16.mxu0 0
          %4411 = vmatpush1.bf16.msra.mxu0 %v3334
          %4412 = vmatprep.subr.bf16.mxu0 0
          %4413 = vmatpush1.bf16.msra.mxu0 %v3341
          %4414 = vmatprep.subr.bf16.mxu0 0
          %4415 = vmatpush1.bf16.msra.mxu0 %v3348
          %4416 = vmatprep.subr.bf16.mxu0 0
          %4417 = vmatpush1.bf16.msra.mxu0 %v3355
          %4418 = vmatprep.subr.bf16.mxu0 0
          %4419 = vmatpush1.bf16.msra.mxu0 %v3362
          %4420 = vmatprep.subr.bf16.mxu0 0
          %4421 = vmatpush1.bf16.msra.mxu0 %v3369
          %4422 = vmatprep.mubr.bf16.mxu0 %v1315
          %4423 = vmatmul.mubr.bf16.gmra.mrb[0].mxu0 %v1314
          %v4424 = vpop.f32.mrb[0].mxu0
          %v4425 = vadd.f32 %v4385, %v4424
          %v4426 = vpop.f32.mrb[0].mxu0
          %v4427 = vpop.f32.mrb[0].mxu0
          %v4428 = vpop.f32.mrb[0].mxu0
          %4429 = vdwg.mxu0
          %4430 = vmatprep.subr.bf16.mxu0 0
          %4431 = vmatpush1.bf16.msra.mxu0 %v3376
          %4432 = vmatprep.subr.bf16.mxu0 0
          %4433 = vmatpush1.bf16.msra.mxu0 %v3383
          %4434 = vmatprep.subr.bf16.mxu0 0
          %4435 = vmatpush1.bf16.msra.mxu0 %v3390
          %4436 = vmatprep.subr.bf16.mxu0 0
          %4437 = vmatpush1.bf16.msra.mxu0 %v3397
          %4438 = vmatprep.subr.bf16.mxu0 0
          %4439 = vmatpush1.bf16.msra.mxu0 %v3404
          %4440 = vmatprep.subr.bf16.mxu0 0
          %4441 = vmatpush1.bf16.msra.mxu0 %v3411
          %4442 = vmatprep.subr.bf16.mxu0 0
          %4443 = vmatpush1.bf16.msra.mxu0 %v3418
          %4444 = vmatprep.subr.bf16.mxu0 0
          %4445 = vmatpush1.bf16.msra.mxu0 %v3425
          %4446 = vmatprep.subr.bf16.mxu0 0
          %4447 = vmatpush1.bf16.msra.mxu0 0
          %4448 = vmatprep.subr.bf16.mxu0 0
          %4449 = vmatpush1.bf16.msra.mxu0 0
          %4450 = vmatprep.subr.bf16.mxu0 0
          %4451 = vmatpush1.bf16.msra.mxu0 0
          %4452 = vmatprep.subr.bf16.mxu0 0
          %4453 = vmatpush1.bf16.msra.mxu0 0
          %4454 = vmatprep.subr.bf16.mxu0 0
          %4455 = vmatpush1.bf16.msra.mxu0 0
          %4456 = vmatprep.subr.bf16.mxu0 0
          %4457 = vmatpush1.bf16.msra.mxu0 0
          %4458 = vmatprep.subr.bf16.mxu0 0
          %4459 = vmatpush1.bf16.msra.mxu0 0
          %4460 = vmatprep.subr.bf16.mxu0 0
          %4461 = vmatpush1.bf16.msra.mxu0 0
          %4462 = vmatprep.mubr.bf16.mxu0 0
          %4463 = vmatmul.mubr.bf16.gmra.mrb[0].mxu0 %v1316
          %v4464 = vpop.f32.mrb[0].mxu0
          %v4465 = vadd.f32 %v4425, %v4464
          %v4466 = vpop.f32.mrb[0].mxu0
          %v4467 = vpop.f32.mrb[0].mxu0
          %v4468 = vpop.f32.mrb[0].mxu0
          %4469 = vdwg.mxu0
          %v4470 = vmax.f32 %v3976, 0.0
          %v4471 = vmax.f32 %v3978, 0.0
          %v4472 = vmax.f32 %v4140, 0.0
          %v4473 = vmax.f32 %v4142, 0.0
          %v4474 = vmax.f32 %v4304, 0.0
          %v4475 = vmax.f32 %v4306, 0.0
          %v4476 = vmax.f32 %v4465, 0.0
          %v4477 = vpack.c.bf16 %v4470, %v4470
          %v4478 = vpack.c.bf16 %v4471, %v4471
          %v4479 = vpack.c.bf16 %v4472, %v4472
          %v4480 = vpack.c.bf16 %v4473, %v4473
          %v4481 = vpack.c.bf16 %v4474, %v4474
          %v4482 = vpack.c.bf16 %v4475, %v4475
          %v4483 = vpack.c.bf16 %v4476, %v4476
          %v4484 = vld [vmem:[#allocation14] sm:$0xff]
          %v4485 = vld [vmem:[#allocation14 + $0x8] sm:$0xff]
          %v4486 = vld [vmem:[#allocation14 + $0x10] sm:$0xff]
          %v4487 = vld [vmem:[#allocation14 + $0x18] sm:$0xff]
          %v4488 = vld [vmem:[#allocation14 + $0x20] sm:$0xff]
          %v4489 = vld [vmem:[#allocation14 + $0x28] sm:$0xff]
          %v4490 = vld [vmem:[#allocation14 + $0x30] sm:$0xff]
          %v4491 = vld [vmem:[#allocation14 + $0x38] sm:$0xff]
          %v4492 = vld [vmem:[#allocation14 + $0x40] sm:$0xff]
          %v4493 = vld [vmem:[#allocation14 + $0x48] sm:$0xff]
          %v4494 = vld [vmem:[#allocation14 + $0x50] sm:$0xff]
          %v4495 = vld [vmem:[#allocation14 + $0x58] sm:$0xff]
          %v4496 = vld [vmem:[#allocation14 + $0x60] sm:$0xff]
          %v4497 = vld [vmem:[#allocation14 + $0x68] sm:$0xff]
          %v4498 = vld [vmem:[#allocation14 + $0x70] sm:$0xff]
          %v4499 = vld [vmem:[#allocation14 + $0x78] sm:$0xff]
          %v4500 = vld [vmem:[#allocation14 + $0x80] sm:$0xff]
          %v4501 = vld [vmem:[#allocation14 + $0x88] sm:$0xff]
          %v4502 = vld [vmem:[#allocation14 + $0x90] sm:$0xff]
          %v4503 = vld [vmem:[#allocation14 + $0x98] sm:$0xff]
          %v4504 = vld [vmem:[#allocation14 + $0xa0] sm:$0xff]
          %v4505 = vld [vmem:[#allocation14 + $0xa8] sm:$0xff]
          %v4506 = vld [vmem:[#allocation14 + $0xb0] sm:$0xff]
          %v4507 = vld [vmem:[#allocation14 + $0xb8] sm:$0xff]
          %v4508 = vld [vmem:[#allocation14 + $0xc0] sm:$0xff]
          %v4509 = vld [vmem:[#allocation14 + $0xc8] sm:$0xff]
          %v4510 = vld [vmem:[#allocation14 + $0xd0] sm:$0xff]
          %v4511 = vld [vmem:[#allocation14 + $0xd8] sm:$0xff]
          %v4512 = vld [vmem:[#allocation14 + $0xe0] sm:$0xff]
          %v4513 = vld [vmem:[#allocation14 + $0xe8] sm:$0xff]
          %v4514 = vld [vmem:[#allocation14 + $0xf0] sm:$0xff]
          %v4515 = vld [vmem:[#allocation14 + $0xf8] sm:$0xff]
          %v4516 = vld [vmem:[#allocation14 + $0x100] sm:$0xff]
          %v4517 = vld [vmem:[#allocation14 + $0x108] sm:$0xff]
          %v4518 = vld [vmem:[#allocation14 + $0x110] sm:$0xff]
          %v4519 = vld [vmem:[#allocation14 + $0x118] sm:$0xff]
          %v4520 = vld [vmem:[#allocation14 + $0x120] sm:$0xff]
          %v4521 = vld [vmem:[#allocation14 + $0x128] sm:$0xff]
          %v4522 = vld [vmem:[#allocation14 + $0x130] sm:$0xff]
          %v4523 = vld [vmem:[#allocation14 + $0x138] sm:$0xff]
          %v4524 = vld [vmem:[#allocation14 + $0x140] sm:$0xff]
          %v4525 = vld [vmem:[#allocation14 + $0x148] sm:$0xff]
          %v4526 = vld [vmem:[#allocation14 + $0x150] sm:$0xff]
          %v4527 = vld [vmem:[#allocation14 + $0x158] sm:$0xff]
          %v4528 = vld [vmem:[#allocation14 + $0x160] sm:$0xff]
          %v4529 = vld [vmem:[#allocation14 + $0x168] sm:$0xff]
          %v4530 = vld [vmem:[#allocation14 + $0x170] sm:$0xff]
          %v4531 = vld [vmem:[#allocation14 + $0x178] sm:$0xff]
          %v4532 = vld [vmem:[#allocation14 + $0x180] sm:$0xff]
          %v4533 = vld [vmem:[#allocation14 + $0x188] sm:$0xff]
          %v4534 = vld [vmem:[#allocation14 + $0x190] sm:$0xff]
          %v4535 = vld [vmem:[#allocation14 + $0x198] sm:$0xff]
          %v4536 = vld [vmem:[#allocation14 + $0x1a0] sm:$0xff]
          %v4537 = vld [vmem:[#allocation14 + $0x1a8] sm:$0xff]
          %v4538 = vld [vmem:[#allocation14 + $0x1b0] sm:$0xff]
          %v4539 = vld [vmem:[#allocation14 + $0x1b8] sm:$0xff]
          %v4540 = vld [vmem:[#allocation14 + $0x1c0] sm:$0xff]
          %v4541 = vld [vmem:[#allocation14 + $0x1c8] sm:$0xff]
          %v4542 = vld [vmem:[#allocation14 + $0x1d0] sm:$0xff]
          %v4543 = vld [vmem:[#allocation14 + $0x1d8] sm:$0xff]
          %v4544 = vld [vmem:[#allocation14 + $0x1e0] sm:$0xff]
          %v4545 = vld [vmem:[#allocation14 + $0x1e8] sm:$0xff]
          %v4546 = vld [vmem:[#allocation14 + $0x1f0] sm:$0xff]
          %v4547 = vld [vmem:[#allocation14 + $0x1f8] sm:$0xff]
          %v4548 = vld [vmem:[#allocation14 + $0x200] sm:$0xff]
          %v4549 = vld [vmem:[#allocation14 + $0x208] sm:$0xff]
          %v4550 = vld [vmem:[#allocation14 + $0x210] sm:$0xff]
          %v4551 = vld [vmem:[#allocation14 + $0x218] sm:$0xff]
          %v4552 = vld [vmem:[#allocation14 + $0x220] sm:$0xff]
          %v4553 = vld [vmem:[#allocation14 + $0x228] sm:$0xff]
          %v4554 = vld [vmem:[#allocation14 + $0x230] sm:$0xff]
          %v4555 = vld [vmem:[#allocation14 + $0x238] sm:$0xff]
          %v4556 = vld [vmem:[#allocation14 + $0x240] sm:$0xff]
          %v4557 = vld [vmem:[#allocation14 + $0x248] sm:$0xff]
          %v4558 = vld [vmem:[#allocation14 + $0x250] sm:$0xff]
          %v4559 = vld [vmem:[#allocation14 + $0x258] sm:$0xff]
          %v4560 = vld [vmem:[#allocation14 + $0x260] sm:$0xff]
          %v4561 = vld [vmem:[#allocation14 + $0x268] sm:$0xff]
          %v4562 = vld [vmem:[#allocation14 + $0x270] sm:$0xff]
          %v4563 = vld [vmem:[#allocation14 + $0x278] sm:$0xff]
          %v4564 = vld [vmem:[#allocation14 + $0x280] sm:$0xff]
          %v4565 = vld [vmem:[#allocation14 + $0x288] sm:$0xff]
          %v4566 = vld [vmem:[#allocation14 + $0x290] sm:$0xff]
          %v4567 = vld [vmem:[#allocation14 + $0x298] sm:$0xff]
          %v4568 = vld [vmem:[#allocation14 + $0x2a0] sm:$0xff]
          %v4569 = vld [vmem:[#allocation14 + $0x2a8] sm:$0xff]
          %v4570 = vld [vmem:[#allocation14 + $0x2b0] sm:$0xff]
          %v4571 = vld [vmem:[#allocation14 + $0x2b8] sm:$0xff]
          %v4572 = vld [vmem:[#allocation14 + $0x2c0] sm:$0xff]
          %v4573 = vld [vmem:[#allocation14 + $0x2c8] sm:$0xff]
          %v4574 = vld [vmem:[#allocation14 + $0x2d0] sm:$0xff]
          %v4575 = vld [vmem:[#allocation14 + $0x2d8] sm:$0xff]
          %v4576 = vld [vmem:[#allocation14 + $0x2e0] sm:$0xff]
          %v4577 = vld [vmem:[#allocation14 + $0x2e8] sm:$0xff]
          %v4578 = vld [vmem:[#allocation14 + $0x2f0] sm:$0xff]
          %v4579 = vld [vmem:[#allocation14 + $0x2f8] sm:$0xff]
          %v4580 = vld [vmem:[#allocation14 + $0x300] sm:$0xff]
          %v4581 = vld [vmem:[#allocation14 + $0x308] sm:$0xff]
          %v4582 = vld [vmem:[#allocation14 + $0x310] sm:$0xff]
          %v4583 = vld [vmem:[#allocation14 + $0x318] sm:$0xff]
          %v4584 = vld [vmem:[#allocation14 + $0x320] sm:$0xff]
          %v4585 = vld [vmem:[#allocation14 + $0x328] sm:$0xff]
          %v4586 = vld [vmem:[#allocation14 + $0x330] sm:$0xff]
          %v4587 = vld [vmem:[#allocation14 + $0x338] sm:$0xff]
          %v4588 = vld [vmem:[#allocation14 + $0x340] sm:$0xff]
          %v4589 = vld [vmem:[#allocation14 + $0x348] sm:$0xff]
          %v4590 = vld [vmem:[#allocation14 + $0x350] sm:$0xff]
          %v4591 = vld [vmem:[#allocation14 + $0x358] sm:$0xff]
          %v4592 = vld [vmem:[#allocation14 + $0x360] sm:$0xff]
          %v4593 = vld [vmem:[#allocation14 + $0x368] sm:$0xff]
          %v4594 = vld [vmem:[#allocation14 + $0x370] sm:$0xff]
          %v4595 = vld [vmem:[#allocation14 + $0x378] sm:$0xff]
          %v4596 = vld [vmem:[#allocation16] sm:$0x3]
          %v4598 = vlaneseq
          %v4599 = vshrl.u32 %v4598, 7
          %v4600 = vsub.s32 0, %v4599
          %v4601 = vrot.slane %v4596, %v4600
          %v4602 = vlaneseq
          %v4603 = vshrl.u32 %v4602, 7
          %v4604 = vsub.s32 1, %v4603
          %v4605 = vrot.slane %v4596, %v4604
          %v4720 = vunpack.c.l.b16 %v4484
          %v4721 = vunpack.c.h.b16 %v4484
          %v4722 = vunpack.c.l.b16 %v4485
          %v4723 = vunpack.c.h.b16 %v4485
          %v4724 = vunpack.c.l.b16 %v4486
          %v4725 = vunpack.c.h.b16 %v4486
          %v4726 = vunpack.c.l.b16 %v4487
          %v4727 = vunpack.c.h.b16 %v4487
          %v4728 = vunpack.c.l.b16 %v4488
          %v4729 = vunpack.c.h.b16 %v4488
          %v4730 = vunpack.c.l.b16 %v4489
          %v4731 = vunpack.c.h.b16 %v4489
          %v4732 = vunpack.c.l.b16 %v4490
          %v4733 = vunpack.c.h.b16 %v4490
          %v4734 = vunpack.c.l.b16 %v4491
          %v4735 = vunpack.c.h.b16 %v4491
          %v4736 = vunpack.c.l.b16 %v4492
          %v4737 = vunpack.c.h.b16 %v4492
          %v4738 = vunpack.c.l.b16 %v4493
          %v4739 = vunpack.c.h.b16 %v4493
          %v4740 = vunpack.c.l.b16 %v4494
          %v4741 = vunpack.c.h.b16 %v4494
          %v4742 = vunpack.c.l.b16 %v4495
          %v4743 = vunpack.c.h.b16 %v4495
          %v4744 = vunpack.c.l.b16 %v4496
          %v4745 = vunpack.c.h.b16 %v4496
          %v4746 = vunpack.c.l.b16 %v4497
          %v4747 = vunpack.c.h.b16 %v4497
          %v4748 = vunpack.c.l.b16 %v4498
          %v4749 = vunpack.c.h.b16 %v4498
          %v4750 = vunpack.c.l.b16 %v4499
          %v4751 = vunpack.c.h.b16 %v4499
          %v4752 = vunpack.c.l.b16 %v4500
          %v4753 = vunpack.c.h.b16 %v4500
          %v4754 = vunpack.c.l.b16 %v4501
          %v4755 = vunpack.c.h.b16 %v4501
          %v4756 = vunpack.c.l.b16 %v4502
          %v4757 = vunpack.c.h.b16 %v4502
          %v4758 = vunpack.c.l.b16 %v4503
          %v4759 = vunpack.c.h.b16 %v4503
          %v4760 = vunpack.c.l.b16 %v4504
          %v4761 = vunpack.c.h.b16 %v4504
          %v4762 = vunpack.c.l.b16 %v4505
          %v4763 = vunpack.c.h.b16 %v4505
          %v4764 = vunpack.c.l.b16 %v4506
          %v4765 = vunpack.c.h.b16 %v4506
          %v4766 = vunpack.c.l.b16 %v4507
          %v4767 = vunpack.c.h.b16 %v4507
          %v4768 = vunpack.c.l.b16 %v4508
          %v4769 = vunpack.c.h.b16 %v4508
          %v4770 = vunpack.c.l.b16 %v4509
          %v4771 = vunpack.c.h.b16 %v4509
          %v4772 = vunpack.c.l.b16 %v4510
          %v4773 = vunpack.c.h.b16 %v4510
          %v4774 = vunpack.c.l.b16 %v4511
          %v4775 = vunpack.c.h.b16 %v4511
          %v4776 = vunpack.c.l.b16 %v4512
          %v4777 = vunpack.c.h.b16 %v4512
          %v4778 = vunpack.c.l.b16 %v4513
          %v4779 = vunpack.c.h.b16 %v4513
          %v4780 = vunpack.c.l.b16 %v4514
          %v4781 = vunpack.c.h.b16 %v4514
          %v4782 = vunpack.c.l.b16 %v4515
          %v4783 = vunpack.c.h.b16 %v4515
          %v4784 = vunpack.c.l.b16 %v4516
          %v4785 = vunpack.c.h.b16 %v4516
          %v4786 = vunpack.c.l.b16 %v4517
          %v4787 = vunpack.c.h.b16 %v4517
          %v4788 = vunpack.c.l.b16 %v4518
          %v4789 = vunpack.c.h.b16 %v4518
          %v4790 = vunpack.c.l.b16 %v4519
          %v4791 = vunpack.c.h.b16 %v4519
          %v4792 = vunpack.c.l.b16 %v4520
          %v4793 = vunpack.c.h.b16 %v4520
          %v4794 = vunpack.c.l.b16 %v4521
          %v4795 = vunpack.c.h.b16 %v4521
          %v4796 = vunpack.c.l.b16 %v4522
          %v4797 = vunpack.c.h.b16 %v4522
          %v4798 = vunpack.c.l.b16 %v4523
          %v4799 = vunpack.c.h.b16 %v4523
          %v4800 = vunpack.c.l.b16 %v4524
          %v4801 = vunpack.c.h.b16 %v4524
          %v4802 = vunpack.c.l.b16 %v4525
          %v4803 = vunpack.c.h.b16 %v4525
          %v4804 = vunpack.c.l.b16 %v4526
          %v4805 = vunpack.c.h.b16 %v4526
          %v4806 = vunpack.c.l.b16 %v4527
          %v4807 = vunpack.c.h.b16 %v4527
          %v4808 = vunpack.c.l.b16 %v4528
          %v4809 = vunpack.c.h.b16 %v4528
          %v4810 = vunpack.c.l.b16 %v4529
          %v4811 = vunpack.c.h.b16 %v4529
          %v4812 = vunpack.c.l.b16 %v4530
          %v4813 = vunpack.c.h.b16 %v4530
          %v4814 = vunpack.c.l.b16 %v4531
          %v4815 = vunpack.c.h.b16 %v4531
          %v4816 = vunpack.c.l.b16 %v4532
          %v4817 = vunpack.c.h.b16 %v4532
          %v4818 = vunpack.c.l.b16 %v4533
          %v4819 = vunpack.c.h.b16 %v4533
          %v4820 = vunpack.c.l.b16 %v4534
          %v4821 = vunpack.c.h.b16 %v4534
          %v4822 = vunpack.c.l.b16 %v4535
          %v4823 = vunpack.c.h.b16 %v4535
          %v4824 = vunpack.c.l.b16 %v4536
          %v4825 = vunpack.c.h.b16 %v4536
          %v4826 = vunpack.c.l.b16 %v4537
          %v4827 = vunpack.c.h.b16 %v4537
          %v4828 = vunpack.c.l.b16 %v4538
          %v4829 = vunpack.c.h.b16 %v4538
          %v4830 = vunpack.c.l.b16 %v4539
          %v4831 = vunpack.c.h.b16 %v4539
          %v4832 = vunpack.c.l.b16 %v4540
          %v4833 = vunpack.c.h.b16 %v4540
          %v4834 = vunpack.c.l.b16 %v4541
          %v4835 = vunpack.c.h.b16 %v4541
          %v4836 = vunpack.c.l.b16 %v4542
          %v4837 = vunpack.c.h.b16 %v4542
          %v4838 = vunpack.c.l.b16 %v4543
          %v4839 = vunpack.c.h.b16 %v4543
          %v4840 = vunpack.c.l.b16 %v4544
          %v4841 = vunpack.c.h.b16 %v4544
          %v4842 = vunpack.c.l.b16 %v4545
          %v4843 = vunpack.c.h.b16 %v4545
          %v4844 = vunpack.c.l.b16 %v4546
          %v4845 = vunpack.c.h.b16 %v4546
          %v4846 = vunpack.c.l.b16 %v4547
          %v4847 = vunpack.c.h.b16 %v4547
          %v4848 = vunpack.c.l.b16 %v4548
          %v4849 = vunpack.c.h.b16 %v4548
          %v4850 = vunpack.c.l.b16 %v4549
          %v4851 = vunpack.c.h.b16 %v4549
          %v4852 = vunpack.c.l.b16 %v4550
          %v4853 = vunpack.c.h.b16 %v4550
          %v4854 = vunpack.c.l.b16 %v4551
          %v4855 = vunpack.c.h.b16 %v4551
          %v4856 = vunpack.c.l.b16 %v4552
          %v4857 = vunpack.c.h.b16 %v4552
          %v4858 = vunpack.c.l.b16 %v4553
          %v4859 = vunpack.c.h.b16 %v4553
          %v4860 = vunpack.c.l.b16 %v4554
          %v4861 = vunpack.c.h.b16 %v4554
          %v4862 = vunpack.c.l.b16 %v4555
          %v4863 = vunpack.c.h.b16 %v4555
          %v4864 = vunpack.c.l.b16 %v4556
          %v4865 = vunpack.c.h.b16 %v4556
          %v4866 = vunpack.c.l.b16 %v4557
          %v4867 = vunpack.c.h.b16 %v4557
          %v4868 = vunpack.c.l.b16 %v4558
          %v4869 = vunpack.c.h.b16 %v4558
          %v4870 = vunpack.c.l.b16 %v4559
          %v4871 = vunpack.c.h.b16 %v4559
          %v4872 = vunpack.c.l.b16 %v4560
          %v4873 = vunpack.c.h.b16 %v4560
          %v4874 = vunpack.c.l.b16 %v4561
          %v4875 = vunpack.c.h.b16 %v4561
          %v4876 = vunpack.c.l.b16 %v4562
          %v4877 = vunpack.c.h.b16 %v4562
          %v4878 = vunpack.c.l.b16 %v4563
          %v4879 = vunpack.c.h.b16 %v4563
          %v4880 = vunpack.c.l.b16 %v4564
          %v4881 = vunpack.c.h.b16 %v4564
          %v4882 = vunpack.c.l.b16 %v4565
          %v4883 = vunpack.c.h.b16 %v4565
          %v4884 = vunpack.c.l.b16 %v4566
          %v4885 = vunpack.c.h.b16 %v4566
          %v4886 = vunpack.c.l.b16 %v4567
          %v4887 = vunpack.c.h.b16 %v4567
          %v4888 = vunpack.c.l.b16 %v4568
          %v4889 = vunpack.c.h.b16 %v4568
          %v4890 = vunpack.c.l.b16 %v4569
          %v4891 = vunpack.c.h.b16 %v4569
          %v4892 = vunpack.c.l.b16 %v4570
          %v4893 = vunpack.c.h.b16 %v4570
          %v4894 = vunpack.c.l.b16 %v4571
          %v4895 = vunpack.c.h.b16 %v4571
          %v4896 = vunpack.c.l.b16 %v4572
          %v4897 = vunpack.c.h.b16 %v4572
          %v4898 = vunpack.c.l.b16 %v4573
          %v4899 = vunpack.c.h.b16 %v4573
          %v4900 = vunpack.c.l.b16 %v4574
          %v4901 = vunpack.c.h.b16 %v4574
          %v4902 = vunpack.c.l.b16 %v4575
          %v4903 = vunpack.c.h.b16 %v4575
          %v4904 = vunpack.c.l.b16 %v4576
          %v4905 = vunpack.c.h.b16 %v4576
          %v4906 = vunpack.c.l.b16 %v4577
          %v4907 = vunpack.c.h.b16 %v4577
          %v4908 = vunpack.c.l.b16 %v4578
          %v4909 = vunpack.c.h.b16 %v4578
          %v4910 = vunpack.c.l.b16 %v4579
          %v4911 = vunpack.c.h.b16 %v4579
          %v4912 = vunpack.c.l.b16 %v4580
          %v4913 = vunpack.c.h.b16 %v4580
          %v4914 = vunpack.c.l.b16 %v4581
          %v4915 = vunpack.c.h.b16 %v4581
          %v4916 = vunpack.c.l.b16 %v4582
          %v4917 = vunpack.c.h.b16 %v4582
          %v4918 = vunpack.c.l.b16 %v4583
          %v4919 = vunpack.c.h.b16 %v4583
          %v4920 = vunpack.c.l.b16 %v4584
          %v4921 = vunpack.c.h.b16 %v4584
          %v4922 = vunpack.c.l.b16 %v4585
          %v4923 = vunpack.c.h.b16 %v4585
          %v4924 = vunpack.c.l.b16 %v4586
          %v4925 = vunpack.c.h.b16 %v4586
          %v4926 = vunpack.c.l.b16 %v4587
          %v4927 = vunpack.c.h.b16 %v4587
          %v4928 = vunpack.c.l.b16 %v4588
          %v4929 = vunpack.c.h.b16 %v4588
          %v4930 = vunpack.c.l.b16 %v4589
          %v4931 = vunpack.c.h.b16 %v4589
          %v4932 = vunpack.c.l.b16 %v4590
          %v4933 = vunpack.c.h.b16 %v4590
          %v4934 = vunpack.c.l.b16 %v4591
          %v4935 = vunpack.c.h.b16 %v4591
          %v4936 = vunpack.c.l.b16 %v4592
          %v4937 = vunpack.c.h.b16 %v4592
          %v4938 = vunpack.c.l.b16 %v4593
          %v4939 = vunpack.c.h.b16 %v4593
          %v4940 = vunpack.c.l.b16 %v4594
          %v4941 = vunpack.c.h.b16 %v4594
          %v4942 = vunpack.c.l.b16 %v4595
          %v4943 = vunpack.c.h.b16 %v4595
          %v4944 = vpack.c.b16 %v4722, %v4720
          %v4945 = vpack.c.b16 %v4723, %v4721
          %v4946 = vpack.c.b16 %v4726, %v4724
          %v4947 = vpack.c.b16 %v4727, %v4725
          %v4948 = vpack.c.b16 %v4730, %v4728
          %v4949 = vpack.c.b16 %v4731, %v4729
          %v4950 = vpack.c.b16 %v4734, %v4732
          %v4951 = vpack.c.b16 %v4735, %v4733
          %v4952 = vpack.c.b16 %v4738, %v4736
          %v4953 = vpack.c.b16 %v4739, %v4737
          %v4954 = vpack.c.b16 %v4742, %v4740
          %v4955 = vpack.c.b16 %v4743, %v4741
          %v4956 = vpack.c.b16 %v4746, %v4744
          %v4957 = vpack.c.b16 %v4747, %v4745
          %v4958 = vpack.c.b16 %v4750, %v4748
          %v4959 = vpack.c.b16 %v4751, %v4749
          %v4960 = vpack.c.b16 %v4754, %v4752
          %v4961 = vpack.c.b16 %v4755, %v4753
          %v4962 = vpack.c.b16 %v4758, %v4756
          %v4963 = vpack.c.b16 %v4759, %v4757
          %v4964 = vpack.c.b16 %v4762, %v4760
          %v4965 = vpack.c.b16 %v4763, %v4761
          %v4966 = vpack.c.b16 %v4766, %v4764
          %v4967 = vpack.c.b16 %v4767, %v4765
          %v4968 = vpack.c.b16 %v4770, %v4768
          %v4969 = vpack.c.b16 %v4771, %v4769
          %v4970 = vpack.c.b16 %v4774, %v4772
          %v4971 = vpack.c.b16 %v4775, %v4773
          %v4972 = vpack.c.b16 %v4778, %v4776
          %v4973 = vpack.c.b16 %v4779, %v4777
          %v4974 = vpack.c.b16 %v4782, %v4780
          %v4975 = vpack.c.b16 %v4783, %v4781
          %v4976 = vpack.c.b16 %v4786, %v4784
          %v4977 = vpack.c.b16 %v4787, %v4785
          %v4978 = vpack.c.b16 %v4790, %v4788
          %v4979 = vpack.c.b16 %v4791, %v4789
          %v4980 = vpack.c.b16 %v4794, %v4792
          %v4981 = vpack.c.b16 %v4795, %v4793
          %v4982 = vpack.c.b16 %v4798, %v4796
          %v4983 = vpack.c.b16 %v4799, %v4797
          %v4984 = vpack.c.b16 %v4802, %v4800
          %v4985 = vpack.c.b16 %v4803, %v4801
          %v4986 = vpack.c.b16 %v4806, %v4804
          %v4987 = vpack.c.b16 %v4807, %v4805
          %v4988 = vpack.c.b16 %v4810, %v4808
          %v4989 = vpack.c.b16 %v4811, %v4809
          %v4990 = vpack.c.b16 %v4814, %v4812
          %v4991 = vpack.c.b16 %v4815, %v4813
          %v4992 = vpack.c.b16 %v4818, %v4816
          %v4993 = vpack.c.b16 %v4819, %v4817
          %v4994 = vpack.c.b16 %v4822, %v4820
          %v4995 = vpack.c.b16 %v4823, %v4821
          %v4996 = vpack.c.b16 %v4826, %v4824
          %v4997 = vpack.c.b16 %v4827, %v4825
          %v4998 = vpack.c.b16 %v4830, %v4828
          %v4999 = vpack.c.b16 %v4831, %v4829
          %v5000 = vpack.c.b16 %v4834, %v4832
          %v5001 = vpack.c.b16 %v4835, %v4833
          %v5002 = vpack.c.b16 %v4838, %v4836
          %v5003 = vpack.c.b16 %v4839, %v4837
          %v5004 = vpack.c.b16 %v4842, %v4840
          %v5005 = vpack.c.b16 %v4843, %v4841
          %v5006 = vpack.c.b16 %v4846, %v4844
          %v5007 = vpack.c.b16 %v4847, %v4845
          %v5008 = vpack.c.b16 %v4850, %v4848
          %v5009 = vpack.c.b16 %v4851, %v4849
          %v5010 = vpack.c.b16 %v4854, %v4852
          %v5011 = vpack.c.b16 %v4855, %v4853
          %v5012 = vpack.c.b16 %v4858, %v4856
          %v5013 = vpack.c.b16 %v4859, %v4857
          %v5014 = vpack.c.b16 %v4862, %v4860
          %v5015 = vpack.c.b16 %v4863, %v4861
          %v5016 = vpack.c.b16 %v4866, %v4864
          %v5017 = vpack.c.b16 %v4867, %v4865
          %v5018 = vpack.c.b16 %v4870, %v4868
          %v5019 = vpack.c.b16 %v4871, %v4869
          %v5020 = vpack.c.b16 %v4874, %v4872
          %v5021 = vpack.c.b16 %v4875, %v4873
          %v5022 = vpack.c.b16 %v4878, %v4876
          %v5023 = vpack.c.b16 %v4879, %v4877
          %v5024 = vpack.c.b16 %v4882, %v4880
          %v5025 = vpack.c.b16 %v4883, %v4881
          %v5026 = vpack.c.b16 %v4886, %v4884
          %v5027 = vpack.c.b16 %v4887, %v4885
          %v5028 = vpack.c.b16 %v4890, %v4888
          %v5029 = vpack.c.b16 %v4891, %v4889
          %v5030 = vpack.c.b16 %v4894, %v4892
          %v5031 = vpack.c.b16 %v4895, %v4893
          %v5032 = vpack.c.b16 %v4898, %v4896
          %v5033 = vpack.c.b16 %v4899, %v4897
          %v5034 = vpack.c.b16 %v4902, %v4900
          %v5035 = vpack.c.b16 %v4903, %v4901
          %v5036 = vpack.c.b16 %v4906, %v4904
          %v5037 = vpack.c.b16 %v4907, %v4905
          %v5038 = vpack.c.b16 %v4910, %v4908
          %v5039 = vpack.c.b16 %v4911, %v4909
          %v5040 = vpack.c.b16 %v4914, %v4912
          %v5041 = vpack.c.b16 %v4915, %v4913
          %v5042 = vpack.c.b16 %v4918, %v4916
          %v5043 = vpack.c.b16 %v4919, %v4917
          %v5044 = vpack.c.b16 %v4922, %v4920
          %v5045 = vpack.c.b16 %v4923, %v4921
          %v5046 = vpack.c.b16 %v4926, %v4924
          %v5047 = vpack.c.b16 %v4927, %v4925
          %v5048 = vpack.c.b16 %v4930, %v4928
          %v5049 = vpack.c.b16 %v4931, %v4929
          %v5050 = vpack.c.b16 %v4934, %v4932
          %v5051 = vpack.c.b16 %v4935, %v4933
          %v5052 = vpack.c.b16 %v4938, %v4936
          %v5053 = vpack.c.b16 %v4939, %v4937
          %v5054 = vpack.c.b16 %v4942, %v4940
          %v5055 = vpack.c.b16 %v4943, %v4941
          %5168 = vmatprep.subr.bf16.mxu0 %v4945
          %5169 = vmatpush1.bf16.msra.mxu0 %v4944
          %5170 = vmatprep.subr.bf16.mxu0 %v4947
          %5171 = vmatpush1.bf16.msra.mxu0 %v4946
          %5172 = vmatprep.subr.bf16.mxu0 %v4949
          %5173 = vmatpush1.bf16.msra.mxu0 %v4948
          %5174 = vmatprep.subr.bf16.mxu0 %v4951
          %5175 = vmatpush1.bf16.msra.mxu0 %v4950
          %5176 = vmatprep.subr.bf16.mxu0 %v4953
          %5177 = vmatpush1.bf16.msra.mxu0 %v4952
          %5178 = vmatprep.subr.bf16.mxu0 %v4955
          %5179 = vmatpush1.bf16.msra.mxu0 %v4954
          %5180 = vmatprep.subr.bf16.mxu0 %v4957
          %5181 = vmatpush1.bf16.msra.mxu0 %v4956
          %5182 = vmatprep.subr.bf16.mxu0 %v4959
          %5183 = vmatpush1.bf16.msra.mxu0 %v4958
          %5184 = vmatprep.subr.bf16.mxu0 %v4961
          %5185 = vmatpush1.bf16.msra.mxu0 %v4960
          %5186 = vmatprep.subr.bf16.mxu0 %v4963
          %5187 = vmatpush1.bf16.msra.mxu0 %v4962
          %5188 = vmatprep.subr.bf16.mxu0 %v4965
          %5189 = vmatpush1.bf16.msra.mxu0 %v4964
          %5190 = vmatprep.subr.bf16.mxu0 %v4967
          %5191 = vmatpush1.bf16.msra.mxu0 %v4966
          %5192 = vmatprep.subr.bf16.mxu0 %v4969
          %5193 = vmatpush1.bf16.msra.mxu0 %v4968
          %5194 = vmatprep.subr.bf16.mxu0 %v4971
          %5195 = vmatpush1.bf16.msra.mxu0 %v4970
          %5196 = vmatprep.subr.bf16.mxu0 %v4973
          %5197 = vmatpush1.bf16.msra.mxu0 %v4972
          %5198 = vmatprep.subr.bf16.mxu0 %v4975
          %5199 = vmatpush1.bf16.msra.mxu0 %v4974
          %5200 = vmatprep.mubr.bf16.mxu0 %v4478
          %5201 = vmatmul.mubr.bf16.gmra.mrb[0].mxu0 %v4477
          %v5202 = vpop.f32.mrb[0].mxu0
          %v5203 = vadd.f32 %v4601, %v5202
          %v5204 = vpop.f32.mrb[0].mxu0
          %v5205 = vadd.f32 %v4605, %v5204
          %v5206 = vpop.f32.mrb[0].mxu0
          %v5207 = vpop.f32.mrb[0].mxu0
          %5208 = vdwg.mxu0
          %5209 = vmatprep.subr.bf16.mxu0 %v4977
          %5210 = vmatpush1.bf16.msra.mxu0 %v4976
          %5211 = vmatprep.subr.bf16.mxu0 %v4979
          %5212 = vmatpush1.bf16.msra.mxu0 %v4978
          %5213 = vmatprep.subr.bf16.mxu0 %v4981
          %5214 = vmatpush1.bf16.msra.mxu0 %v4980
          %5215 = vmatprep.subr.bf16.mxu0 %v4983
          %5216 = vmatpush1.bf16.msra.mxu0 %v4982
          %5217 = vmatprep.subr.bf16.mxu0 %v4985
          %5218 = vmatpush1.bf16.msra.mxu0 %v4984
          %5219 = vmatprep.subr.bf16.mxu0 %v4987
          %5220 = vmatpush1.bf16.msra.mxu0 %v4986
          %5221 = vmatprep.subr.bf16.mxu0 %v4989
          %5222 = vmatpush1.bf16.msra.mxu0 %v4988
          %5223 = vmatprep.subr.bf16.mxu0 %v4991
          %5224 = vmatpush1.bf16.msra.mxu0 %v4990
          %5225 = vmatprep.subr.bf16.mxu0 %v4993
          %5226 = vmatpush1.bf16.msra.mxu0 %v4992
          %5227 = vmatprep.subr.bf16.mxu0 %v4995
          %5228 = vmatpush1.bf16.msra.mxu0 %v4994
          %5229 = vmatprep.subr.bf16.mxu0 %v4997
          %5230 = vmatpush1.bf16.msra.mxu0 %v4996
          %5231 = vmatprep.subr.bf16.mxu0 %v4999
          %5232 = vmatpush1.bf16.msra.mxu0 %v4998
          %5233 = vmatprep.subr.bf16.mxu0 %v5001
          %5234 = vmatpush1.bf16.msra.mxu0 %v5000
          %5235 = vmatprep.subr.bf16.mxu0 %v5003
          %5236 = vmatpush1.bf16.msra.mxu0 %v5002
          %5237 = vmatprep.subr.bf16.mxu0 %v5005
          %5238 = vmatpush1.bf16.msra.mxu0 %v5004
          %5239 = vmatprep.subr.bf16.mxu0 %v5007
          %5240 = vmatpush1.bf16.msra.mxu0 %v5006
          %5241 = vmatprep.mubr.bf16.mxu0 %v4480
          %5242 = vmatmul.mubr.bf16.gmra.mrb[0].mxu0 %v4479
          %v5243 = vpop.f32.mrb[0].mxu0
          %v5244 = vadd.f32 %v5203, %v5243
          %v5245 = vpop.f32.mrb[0].mxu0
          %v5246 = vadd.f32 %v5205, %v5245
          %v5247 = vpop.f32.mrb[0].mxu0
          %v5248 = vpop.f32.mrb[0].mxu0
          %5249 = vdwg.mxu0
          %5250 = vmatprep.subr.bf16.mxu0 %v5009
          %5251 = vmatpush1.bf16.msra.mxu0 %v5008
          %5252 = vmatprep.subr.bf16.mxu0 %v5011
          %5253 = vmatpush1.bf16.msra.mxu0 %v5010
          %5254 = vmatprep.subr.bf16.mxu0 %v5013
          %5255 = vmatpush1.bf16.msra.mxu0 %v5012
          %5256 = vmatprep.subr.bf16.mxu0 %v5015
          %5257 = vmatpush1.bf16.msra.mxu0 %v5014
          %5258 = vmatprep.subr.bf16.mxu0 %v5017
          %5259 = vmatpush1.bf16.msra.mxu0 %v5016
          %5260 = vmatprep.subr.bf16.mxu0 %v5019
          %5261 = vmatpush1.bf16.msra.mxu0 %v5018
          %5262 = vmatprep.subr.bf16.mxu0 %v5021
          %5263 = vmatpush1.bf16.msra.mxu0 %v5020
          %5264 = vmatprep.subr.bf16.mxu0 %v5023
          %5265 = vmatpush1.bf16.msra.mxu0 %v5022
          %5266 = vmatprep.subr.bf16.mxu0 %v5025
          %5267 = vmatpush1.bf16.msra.mxu0 %v5024
          %5268 = vmatprep.subr.bf16.mxu0 %v5027
          %5269 = vmatpush1.bf16.msra.mxu0 %v5026
          %5270 = vmatprep.subr.bf16.mxu0 %v5029
          %5271 = vmatpush1.bf16.msra.mxu0 %v5028
          %5272 = vmatprep.subr.bf16.mxu0 %v5031
          %5273 = vmatpush1.bf16.msra.mxu0 %v5030
          %5274 = vmatprep.subr.bf16.mxu0 %v5033
          %5275 = vmatpush1.bf16.msra.mxu0 %v5032
          %5276 = vmatprep.subr.bf16.mxu0 %v5035
          %5277 = vmatpush1.bf16.msra.mxu0 %v5034
          %5278 = vmatprep.subr.bf16.mxu0 %v5037
          %5279 = vmatpush1.bf16.msra.mxu0 %v5036
          %5280 = vmatprep.subr.bf16.mxu0 %v5039
          %5281 = vmatpush1.bf16.msra.mxu0 %v5038
          %5282 = vmatprep.mubr.bf16.mxu0 %v4482
          %5283 = vmatmul.mubr.bf16.gmra.mrb[0].mxu0 %v4481
          %v5284 = vpop.f32.mrb[0].mxu0
          %v5285 = vadd.f32 %v5244, %v5284
          %v5286 = vpop.f32.mrb[0].mxu0
          %v5287 = vadd.f32 %v5246, %v5286
          %v5288 = vpop.f32.mrb[0].mxu0
          %v5289 = vpop.f32.mrb[0].mxu0
          %5290 = vdwg.mxu0
          %5291 = vmatprep.subr.bf16.mxu0 %v5041
          %5292 = vmatpush1.bf16.msra.mxu0 %v5040
          %5293 = vmatprep.subr.bf16.mxu0 %v5043
          %5294 = vmatpush1.bf16.msra.mxu0 %v5042
          %5295 = vmatprep.subr.bf16.mxu0 %v5045
          %5296 = vmatpush1.bf16.msra.mxu0 %v5044
          %5297 = vmatprep.subr.bf16.mxu0 %v5047
          %5298 = vmatpush1.bf16.msra.mxu0 %v5046
          %5299 = vmatprep.subr.bf16.mxu0 %v5049
          %5300 = vmatpush1.bf16.msra.mxu0 %v5048
          %5301 = vmatprep.subr.bf16.mxu0 %v5051
          %5302 = vmatpush1.bf16.msra.mxu0 %v5050
          %5303 = vmatprep.subr.bf16.mxu0 %v5053
          %5304 = vmatpush1.bf16.msra.mxu0 %v5052
          %5305 = vmatprep.subr.bf16.mxu0 %v5055
          %5306 = vmatpush1.bf16.msra.mxu0 %v5054
          %5307 = vmatprep.subr.bf16.mxu0 0
          %5308 = vmatpush1.bf16.msra.mxu0 0
          %5309 = vmatprep.subr.bf16.mxu0 0
          %5310 = vmatpush1.bf16.msra.mxu0 0
          %5311 = vmatprep.subr.bf16.mxu0 0
          %5312 = vmatpush1.bf16.msra.mxu0 0
          %5313 = vmatprep.subr.bf16.mxu0 0
          %5314 = vmatpush1.bf16.msra.mxu0 0
          %5315 = vmatprep.subr.bf16.mxu0 0
          %5316 = vmatpush1.bf16.msra.mxu0 0
          %5317 = vmatprep.subr.bf16.mxu0 0
          %5318 = vmatpush1.bf16.msra.mxu0 0
          %5319 = vmatprep.subr.bf16.mxu0 0
          %5320 = vmatpush1.bf16.msra.mxu0 0
          %5321 = vmatprep.subr.bf16.mxu0 0
          %5322 = vmatpush1.bf16.msra.mxu0 0
          %5323 = vmatprep.mubr.bf16.mxu0 0
          %5324 = vmatmul.mubr.bf16.gmra.mrb[0].mxu0 %v4483
          %v5325 = vpop.f32.mrb[0].mxu0
          %v5326 = vadd.f32 %v5285, %v5325
          %v5327 = vpop.f32.mrb[0].mxu0
          %v5328 = vadd.f32 %v5287, %v5327
          %v5329 = vpop.f32.mrb[0].mxu0
          %v5330 = vpop.f32.mrb[0].mxu0
          %5331 = vdwg.mxu0
          %v5332 = vld [vmem:[#allocation7] sm:$0xff]
          %v5333 = vmul.f32 %v5328, 0.5
          %v5334 = vmul.f32 %v5333, 1.442695
          %v5335 = vpow.pop %v5334
          %v5336 = vmul.f32 %v5332, %v5335
          %v5337 = vadd.f32 %v5326, %v5336
          %5338 = vst [vmem:[#allocation21] sm:$0xff] %v5326
          %5339 = vst [vmem:[#allocation23] sm:$0xff] %v5328
          %v5340 = vpack.c.bf16 %v5337, %v5337
          %5341 = vst [vmem:[#allocation3] sm:$0xf] %v5340
        $region112: #{tpu_custom_call.1} parent=59 // pred_fallthru
          _
        %p5342 = scmp.ge.s32.totalorder %s42, 1
        // Predicated region
        $region113: #{tpu_custom_call.1} parent=59 // pred_check
          %p5343 = pneg %p5342
        $region114: #{tpu_custom_call.1} parent=59 // pred_check_branch
          %5345 = sbr.rel (%p5343) target = $region116
        $region115: #{tpu_custom_call.1} parent=59 // pred_region
          %v5346 = vld [vmem:[#allocation3] sm:$0xf]
          %v5347 = vld [vmem:[%s619] sm:$0xf]
          %v5348 = vld [vmem:[%s619 + $0x4] sm:$0xf]
          %v5349 = vld [vmem:[%s619 + $0x8] sm:$0xf]
          %v5350 = vld [vmem:[%s619 + $0xc] sm:$0xf]
          %v5351 = vld [vmem:[%s619 + $0x10] sm:$0xf]
          %v5352 = vld [vmem:[%s619 + $0x14] sm:$0xf]
          %v5353 = vld [vmem:[%s619 + $0x18] sm:$0xf]
          %v5354 = vld [vmem:[%s619 + $0x1c] sm:$0xf]
          %v5355 = vld [vmem:[%s619 + $0x20] sm:$0xf]
          %v5356 = vld [vmem:[%s619 + $0x24] sm:$0xf]
          %v5357 = vld [vmem:[%s619 + $0x28] sm:$0xf]
          %v5358 = vld [vmem:[%s619 + $0x2c] sm:$0xf]
          %v5359 = vld [vmem:[%s619 + $0x30] sm:$0xf]
          %v5360 = vld [vmem:[%s619 + $0x34] sm:$0xf]
          %v5361 = vld [vmem:[%s619 + $0x38] sm:$0xf]
          %v5362 = vld [vmem:[%s619 + $0x3c] sm:$0xf]
          %v5363 = vld [vmem:[%s627] sm:$0x1]
          %v5365 = vlaneseq
          %v5366 = vshrl.u32 %v5365, 7
          %v5367 = vsub.s32 0, %v5366
          %v5368 = vrot.slane %v5363, %v5367
          %v5386 = vunpack.c.l.b16 %v5347
          %v5387 = vunpack.c.l.b16 %v5348
          %v5388 = vunpack.c.l.b16 %v5349
          %v5389 = vunpack.c.l.b16 %v5350
          %v5390 = vunpack.c.l.b16 %v5351
          %v5391 = vunpack.c.l.b16 %v5352
          %v5392 = vunpack.c.l.b16 %v5353
          %v5393 = vunpack.c.l.b16 %v5354
          %v5394 = vunpack.c.l.b16 %v5355
          %v5395 = vunpack.c.l.b16 %v5356
          %v5396 = vunpack.c.l.b16 %v5357
          %v5397 = vunpack.c.l.b16 %v5358
          %v5398 = vunpack.c.l.b16 %v5359
          %v5399 = vunpack.c.l.b16 %v5360
          %v5400 = vunpack.c.l.b16 %v5361
          %v5401 = vunpack.c.l.b16 %v5362
          %v5402 = vpack.c.b16 %v5387, %v5386
          %v5403 = vpack.c.b16 %v5389, %v5388
          %v5404 = vpack.c.b16 %v5391, %v5390
          %v5405 = vpack.c.b16 %v5393, %v5392
          %v5406 = vpack.c.b16 %v5395, %v5394
          %v5407 = vpack.c.b16 %v5397, %v5396
          %v5408 = vpack.c.b16 %v5399, %v5398
          %v5409 = vpack.c.b16 %v5401, %v5400
          %5418 = vmatprep.subr.bf16.mxu0 0
          %5419 = vmatpush1.bf16.msra.mxu0 %v5402
          %5420 = vmatprep.subr.bf16.mxu0 0
          %5421 = vmatpush1.bf16.msra.mxu0 %v5403
          %5422 = vmatprep.subr.bf16.mxu0 0
          %5423 = vmatpush1.bf16.msra.mxu0 %v5404
          %5424 = vmatprep.subr.bf16.mxu0 0
          %5425 = vmatpush1.bf16.msra.mxu0 %v5405
          %5426 = vmatprep.subr.bf16.mxu0 0
          %5427 = vmatpush1.bf16.msra.mxu0 %v5406
          %5428 = vmatprep.subr.bf16.mxu0 0
          %5429 = vmatpush1.bf16.msra.mxu0 %v5407
          %5430 = vmatprep.subr.bf16.mxu0 0
          %5431 = vmatpush1.bf16.msra.mxu0 %v5408
          %5432 = vmatprep.subr.bf16.mxu0 0
          %5433 = vmatpush1.bf16.msra.mxu0 %v5409
          %5434 = vmatprep.subr.bf16.mxu0 0
          %5435 = vmatpush1.bf16.msra.mxu0 0
          %5436 = vmatprep.subr.bf16.mxu0 0
          %5437 = vmatpush1.bf16.msra.mxu0 0
          %5438 = vmatprep.subr.bf16.mxu0 0
          %5439 = vmatpush1.bf16.msra.mxu0 0
          %5440 = vmatprep.subr.bf16.mxu0 0
          %5441 = vmatpush1.bf16.msra.mxu0 0
          %5442 = vmatprep.subr.bf16.mxu0 0
          %5443 = vmatpush1.bf16.msra.mxu0 0
          %5444 = vmatprep.subr.bf16.mxu0 0
          %5445 = vmatpush1.bf16.msra.mxu0 0
          %5446 = vmatprep.subr.bf16.mxu0 0
          %5447 = vmatpush1.bf16.msra.mxu0 0
          %5448 = vmatprep.subr.bf16.mxu0 0
          %5449 = vmatpush1.bf16.msra.mxu0 0
          %5450 = vmatprep.mubr.bf16.mxu0 0
          %5451 = vmatmul.mubr.bf16.gmra.mrb[0].mxu0 %v5346
          %v5452 = vpop.f32.mrb[0].mxu0
          %v5453 = vadd.f32 %v5368, %v5452
          %v5454 = vpop.f32.mrb[0].mxu0
          %v5455 = vpop.f32.mrb[0].mxu0
          %v5456 = vpop.f32.mrb[0].mxu0
          %5457 = vdwg.mxu0
          %5458 = vst [vmem:[%s677] sm:$0xff] %v5453
        $region116: #{tpu_custom_call.1} parent=59 // pred_fallthru
          _
        %s5459 = sand.u32 %s322, 1
        %s5460 = scalar_lea.sflag [#allocation6], %s5459
        %s5461 = sand.u32 %s322, 1
        %s5462 = smul.addr %s5461, 8
        %s5463 = scalar_lea.vmem [#allocation20], %s5462
        // Predicated region
        $region117: #{tpu_custom_call.1} parent=59 // pred_check
          %p5464 = pneg %p332
        $region118: #{tpu_custom_call.1} parent=59 // pred_check_branch
          %5466 = sbr.rel (%p5464) target = $region120
        $region119: #{tpu_custom_call.1} parent=59 // pred_region
          %s5467 = ssub.s32 %s42, 1
          %p5468 = scmp.gt.s32.totalorder %s5467, 0
          %s5469 = scalar_select %p5468, %s5467, 0
          %s5471 = ssub.s32 128, 128
          %5472 = vsyncadd %s5460, %s5471
          %s5473 = sadd.s32 %s5469, %s41
          %s5474 = smul.addr %s5473, 128
          %s5475 = scalar_lea.hbm %s10, %s5474
          %s5477 = sshll.u32 %s5463, 4
          %s5478 = int_to_ptr.vmem [resolvable:$true] %s5477
          %5480 = dma.vmem_to_hbm [thread:$0]  %s5478, 128, %s5475, %s5460
        $region120: #{tpu_custom_call.1} parent=59 // pred_fallthru
          _
        // Predicated region
        $region121: #{tpu_custom_call.1} parent=59 // pred_check
          %p5481 = pneg %p358
        $region122: #{tpu_custom_call.1} parent=59 // pred_check_branch
          %5483 = sbr.rel (%p5481) target = $region124
        $region123: #{tpu_custom_call.1} parent=59 // pred_region
          %s5485 = ssub.s32 128, 128
          %5486 = vsyncadd [#allocation22], %s5485
          %s5487 = smul.addr %s41, 128
          %s5488 = scalar_lea.hbm %s11, %s5487
          %s5490 = sshll.u32 [#allocation21], 4
          %s5491 = int_to_ptr.vmem [resolvable:$true] %s5490
          %5493 = dma.vmem_to_hbm [thread:$0]  %s5491, 128, %s5488, [#allocation22]
        $region124: #{tpu_custom_call.1} parent=59 // pred_fallthru
          _
        // Predicated region
        $region125: #{tpu_custom_call.1} parent=59 // pred_check
          %p5494 = pneg %p384
        $region126: #{tpu_custom_call.1} parent=59 // pred_check_branch
          %5496 = sbr.rel (%p5494) target = $region128
        $region127: #{tpu_custom_call.1} parent=59 // pred_region
          %s5498 = ssub.s32 128, 128
          %5499 = vsyncadd [#allocation22], %s5498
          %s5500 = smul.addr %s41, 128
          %s5501 = scalar_lea.hbm %s12, %s5500
          %s5503 = sshll.u32 [#allocation23], 4
          %s5504 = int_to_ptr.vmem [resolvable:$true] %s5503
          %5506 = dma.vmem_to_hbm [thread:$0]  %s5504, 128, %s5501, [#allocation22]
        $region128: #{tpu_custom_call.1} parent=59 // pred_fallthru
          _
        // Predicated region
        $region129: #{tpu_custom_call.1} parent=59 // pred_check
          %p5507 = pneg %p358
        $region130: #{tpu_custom_call.1} parent=59 // pred_check_branch
          %5509 = sbr.rel (%p5507) target = $region132
        $region131: #{tpu_custom_call.1} parent=59 // pred_region
          %5510 = dma.done [#allocation22], 128
        $region132: #{tpu_custom_call.1} parent=59 // pred_fallthru
          _
        // Predicated region
        $region133: #{tpu_custom_call.1} parent=59 // pred_check
          %p5511 = pneg %p384
        $region134: #{tpu_custom_call.1} parent=59 // pred_check_branch
          %5513 = sbr.rel (%p5511) target = $region136
        $region135: #{tpu_custom_call.1} parent=59 // pred_region
          %5514 = dma.done [#allocation22], 128
        $region136: #{tpu_custom_call.1} parent=59 // pred_fallthru
          _
      $region60: #{tpu_custom_call.1} parent=5 // pred_fallthru
        _
      %p5515 = scmp.le.s32.totalorder 2, %s32
      // Predicated region
      $region137: #{tpu_custom_call.1} parent=5 // pred_check
        %p5516 = pneg %p5515
      $region138: #{tpu_custom_call.1} parent=5 // pred_check_branch
        %5518 = sbr.rel (%p5516) target = $region140
      $region139: #{tpu_custom_call.1} parent=5 // pred_region
        %s5519 = ssub.s32 %s32, 2
        // Predicated region
        $region141: #{tpu_custom_call.1} parent=139 // pred_check
          %p5520 = pneg %p338
        $region142: #{tpu_custom_call.1} parent=139 // pred_check_branch
          %5522 = sbr.rel (%p5520) target = $region144
        $region143: #{tpu_custom_call.1} parent=139 // pred_region
          %s5523 = sand.u32 %s323, 1
          %s5524 = scalar_lea.sflag [#allocation6], %s5523
          %s5525 = sand.u32 %s323, 1
          %s5526 = smul.addr %s5525, 8
          %s5527 = scalar_lea.vmem [#allocation20], %s5526
          %5528 = dma.done %s5524, 128
        $region144: #{tpu_custom_call.1} parent=139 // pred_fallthru
          _
      $region140: #{tpu_custom_call.1} parent=5 // pred_fallthru
        _
    $region6: #{tpu_custom_call.1} parent=1 // loop_footer
      %s36 = sadd.s32 1, %s32
    $region7: #{tpu_custom_call.1} parent=1 // loop_footer_branch
      %31 = sbr.rel target = $region3
    $region8: #{tpu_custom_call.1} parent=1 // loop_exit
      _
    %5529 = vsyncpa [#allocation5], 1
    %s5530 = scalar_lea.sflag [#allocation5], 1
    %5531 = vsyncpa %s5530, 1
    %5532 = vsyncpa [#allocation8], 1
    %5533 = vsyncpa [#allocation12], 1
    %5534 = vsyncpa [#allocation15], 1
    %5535 = vsyncpa [#allocation18], 1
    %s5536 = scalar_lea.sflag [#allocation18], 1
    %5537 = vsyncpa %s5536, 1
    %5538 = vsyncpa [#allocation6], 1
    %s5539 = scalar_lea.sflag [#allocation6], 1
    %5540 = vsyncpa %s5539, 1
    %5541 = vsyncpa [#allocation22], 1

</llo_original>
